<compile_context>
chip_gen: v6e
topology: v6e:2x2x1
jax: 0.10.0
libtpu: 0.0.40
codegen_flags: <defaults>
</compile_context>

<pallas_src>
import functools

import jax
import jax.numpy as jnp
from jax.experimental import pallas as pl
from jax.experimental.pallas import tpu as pltpu


def bc_actor_kernel(x_ref,        # (T*Bp, D)                time-major, batch-padded obs, bf16
                    wih_ref,      # (D, 4H)                  LSTM input weights (i,f,g,o), bf16
                    whh_ref,      # (H, 4H)                  LSTM hidden weights, bf16
                    bias_ref,     # (1, 4H+256+256+Ap)       f32: b_lstm | b1 | b2 | b3
                    wmlp_hbm,     # (H, 256+256+Ap)          bf16 MLP weight slab, stays in HBM
                    out_ref,      # (Bp, Ap)                 f32
                    wmlp_vmem,    # VMEM landing buffer for the MLP weight slab
                    xg_ref,       # (T*Bp, 4H)               f32 scratch: hoisted input projection
                    dma_sem,      # DMA semaphore, shape (1,)
                    *, T, A_pad):
    # Kick off the single MLP-weight DMA now; it completes while the recurrence runs.
    cp = pltpu.make_async_copy(wmlp_hbm, wmlp_vmem, dma_sem.at[0])
    cp.start()

    Bp = x_ref.shape[0] // T
    H = whh_ref.shape[0]

    whh = whh_ref[...]                       # (H, 4H) bf16, loaded once
    b_lstm = bias_ref[:, 0:4 * H]            # (1, 4H) f32

    # Hoist the input projection out of the recurrence: one (T*Bp, D) x (D, 4H) matmul with the
    # bias folded in. Stored to VMEM scratch; each step reads its 8-sublane-aligned slice.
    # NOTE: for much larger T this scratch scales as T*Bp*4H*4 bytes — chunk the projection
    # (or store it bf16) before it approaches the VMEM limit; trivial at T=8.
    xg_ref[...] = (jnp.dot(x_ref[...], wih_ref[...],
                           preferred_element_type=jnp.float32) + b_lstm)

    h = jnp.zeros((Bp, H), jnp.float32)
    c = jnp.zeros((Bp, H), jnp.float32)

    def sig(z):
        # sigmoid(z) == 0.5*tanh(0.5*z) + 0.5 : one EUP transcendental per vreg,
        # the surrounding mul/add are cheap VPU filler.
        return 0.5 * jnp.tanh(0.5 * z) + 0.5

    # Static unroll: T is a small compile-time constant, giving the LLO scheduler full
    # cross-iteration visibility (next step's MXU push overlaps this step's EUP/VPU work).
    # Gate slices are 128-lane aligned (H=256). For T >~ 64 switch to
    # lax.fori_loop(..., unroll=4..8) with pl.ds(pl.multiple_of(t*Bp, 8), Bp) slices.
    for t in range(T):
        gates = (xg_ref[t * Bp:(t + 1) * Bp, :]
                 + jnp.dot(h.astype(whh.dtype), whh,
                           preferred_element_type=jnp.float32))      # (Bp, 4H) f32
        i = sig(gates[:, 0 * H:1 * H])
        f = sig(gates[:, 1 * H:2 * H])
        g = jnp.tanh(gates[:, 2 * H:3 * H])
        o = sig(gates[:, 3 * H:4 * H])
        c = f * c + i * g                    # cell / hidden state stay f32 (portable, stable)
        h = o * jnp.tanh(c)

    # MLP weights are needed only now — the single DMA was hidden behind the recurrence.
    cp.wait()

    w1 = wmlp_vmem[:, 0:256]                              # (H, 256)   bf16
    w2 = wmlp_vmem[:, 256:512]                            # (256, 256) bf16
    w3 = wmlp_vmem[:, 512:512 + A_pad]                    # (256, Ap)  bf16
    b1 = bias_ref[:, 4 * H:4 * H + 256]
    b2 = bias_ref[:, 4 * H + 256:4 * H + 512]
    b3 = bias_ref[:, 4 * H + 512:4 * H + 512 + A_pad]

    h1 = jnp.maximum(
        jnp.dot(h.astype(w1.dtype), w1, preferred_element_type=jnp.float32) + b1, 0.0)
    h2 = jnp.maximum(
        jnp.dot(h1.astype(w2.dtype), w2, preferred_element_type=jnp.float32) + b2, 0.0)
    out = jnp.dot(h2.astype(w3.dtype), w3, preferred_element_type=jnp.float32) + b3
    out_ref[...] = out.astype(out_ref.dtype)              # (Bp, Ap) lane-dense, unmasked store


def bc_actor_forward(obs, params, *, matmul_dtype=jnp.bfloat16):
    """obs: (B, T, state_dim) or (T, state_dim) float32. Returns (B, action_dim) f32."""
    if obs.ndim == 2:
        obs = obs[None, :, :]
    B, T, D = obs.shape
    H = params["whh"].shape[0]
    A = params["b3"].shape[-1]
    assert params["w1"].shape[0] == H == 256, "module fixes LSTM hidden = MLP width = 256"

    SUBLANE, LANE = 8, 128
    Bp = max(SUBLANE, ((B + SUBLANE - 1) // SUBLANE) * SUBLANE)   # full-sublane batch
    Ap = max(LANE, ((A + LANE - 1) // LANE) * LANE)               # lane-dense output

    # Time-major, batch-padded, flattened obs: (T*Bp, D) in the matmul dtype.
    x_tm = jnp.transpose(obs, (1, 0, 2)).astype(jnp.float32)      # (T, B, D)
    x_tm = jnp.pad(x_tm, ((0, 0), (0, Bp - B), (0, 0)))
    x_flat = x_tm.reshape(T * Bp, D).astype(matmul_dtype)

    wih = params["wih"].astype(matmul_dtype)
    whh = params["whh"].astype(matmul_dtype)

    # One (H, 256+256+Ap) MLP weight slab -> single manual DMA in-kernel.
    w3p = jnp.pad(params["w3"], ((0, 0), (0, Ap - A)))
    wmlp = jnp.concatenate([params["w1"], params["w2"], w3p], axis=1).astype(matmul_dtype)

    # One (1, 4H+256+256+Ap) bias slab -> single prologue DMA, sliced in-kernel.
    b3p = jnp.pad(params["b3"], ((0, 0), (0, Ap - A)))
    bias_all = jnp.concatenate(
        [params["b_lstm"], params["b1"], params["b2"], b3p], axis=1).astype(jnp.float32)

    vmem = pl.BlockSpec(memory_space=pltpu.MemorySpace.VMEM)
    hbm = pl.BlockSpec(memory_space=pl.ANY)

    kernel = functools.partial(bc_actor_kernel, T=T, A_pad=Ap)

    out_padded = pl.pallas_call(
        kernel,
        out_shape=jax.ShapeDtypeStruct((Bp, Ap), jnp.float32),
        in_specs=[vmem,                 # x
                  vmem, vmem, vmem,     # wih, whh, bias slab
                  hbm],                 # MLP weight slab (manual DMA)
        out_specs=vmem,
        scratch_shapes=[
            pltpu.VMEM(wmlp.shape, matmul_dtype),          # MLP weight landing buffer
            pltpu.VMEM((T * Bp, 4 * H), jnp.float32),      # hoisted input projection
            pltpu.SemaphoreType.DMA((1,)),
        ],
        # Explicit VMEM budget: comfortably fits on every generation (v7x physical = 64 MiB),
        # with room for the xg scratch to grow with T before chunking is needed.
        compiler_params=pltpu.CompilerParams(vmem_limit_bytes=32 << 20),
    )(x_flat, wih, whh, bias_all, wmlp)

    return out_padded[:B, :A]


def init_params(key, state_dim, action_dim, hidden=256):
    """Deterministic synthetic init (uniform, PyTorch-style 1/sqrt(fan) scale), f32."""
    ks = jax.random.split(key, 10)

    def unif(k, shape, fan):
        bound = 1.0 / jnp.sqrt(fan)
        return jax.random.uniform(k, shape, jnp.float32, -bound, bound)

    H = hidden
    return {
        # LSTM: gate order (i, f, g, o), pre-transposed to (in, 4H)
        "wih": unif(ks[0], (state_dim, 4 * H), H),
        "whh": unif(ks[1], (H, 4 * H), H),
        "b_lstm": unif(ks[2], (1, 4 * H), H) + unif(ks[3], (1, 4 * H), H),  # b_ih + b_hh
        # MLP 256 -> 256 -> 256 -> action_dim
        "w1": unif(ks[4], (H, 256), H),
        "b1": unif(ks[5], (1, 256), H),
        "w2": unif(ks[6], (256, 256), 256),
        "b2": unif(ks[7], (1, 256), 256),
        "w3": unif(ks[8], (256, action_dim), 256),
        "b3": unif(ks[9], (1, action_dim), 256),
    }


def bc_actor_reference(obs, params):
    """Pure-JAX f32 reference with the same PyTorch semantics (hn[-1] -> MLP)."""
    if obs.ndim == 2:
        obs = obs[None, :, :]
    B, T, D = obs.shape
    H = params["whh"].shape[0]
    h = jnp.zeros((B, H), jnp.float32)
    c = jnp.zeros((B, H), jnp.float32)
    for t in range(T):
        g = obs[:, t, :] @ params["wih"] + h @ params["whh"] + params["b_lstm"]
        i = jax.nn.sigmoid(g[:, 0 * H:1 * H])
        f = jax.nn.sigmoid(g[:, 1 * H:2 * H])
        gg = jnp.tanh(g[:, 2 * H:3 * H])
        o = jax.nn.sigmoid(g[:, 3 * H:4 * H])
        c = f * c + i * gg
        h = o * jnp.tanh(c)
    h1 = jax.nn.relu(h @ params["w1"] + params["b1"])
    h2 = jax.nn.relu(h1 @ params["w2"] + params["b2"])
    return h2 @ params["w3"] + params["b3"]


if __name__ == "__main__":
    B, T, STATE_DIM, ACTION_DIM = 2, 8, 16, 8

    key = jax.random.PRNGKey(0)
    k_obs, k_par = jax.random.split(key)
    obs = jax.random.normal(k_obs, (B, T, STATE_DIM), dtype=jnp.float32)
    params = init_params(k_par, STATE_DIM, ACTION_DIM)

    out = bc_actor_forward(obs, params)
    out = jax.block_until_ready(out)

    ref = bc_actor_reference(obs, params)
    assert out.shape == (B, ACTION_DIM)
    # bf16 matmul inputs with f32 accumulation; c/h state and nonlinearities stay f32
    # (sigmoid expressed exactly as 0.5*tanh(0.5x)+0.5), so drift vs the f32 reference
    # is ~1e-3 — well inside the tolerance.
    assert jnp.allclose(out, ref, rtol=1e-2, atol=1e-2), "mismatch vs JAX reference"

    print("KERNEL_OK")
</pallas_src>

<mosaic_0001>
module attributes {stable_mosaic.version = 11 : i64} {
  func.func @bc_actor_kernel(%arg0: memref<64x16xbf16, #tpu.memory_space<vmem>>, %arg1: memref<16x1024xbf16, #tpu.memory_space<vmem>>, %arg2: memref<256x1024xbf16, #tpu.memory_space<vmem>>, %arg3: memref<1x1664xf32, #tpu.memory_space<vmem>>, %arg4: memref<256x640xbf16, #tpu.memory_space<any>>, %arg5: memref<8x128xf32, #tpu.memory_space<vmem>>, %arg6: memref<256x640xbf16, #tpu.memory_space<vmem>>, %arg7: memref<64x1024xf32, #tpu.memory_space<vmem>>, %arg8: memref<1x!tpu.dma_semaphore, #tpu.memory_space<semaphore_mem>>) attributes {dimension_semantics = [], scalar_prefetch = 0 : i64, scratch_operands = 3 : i64, tpu.core_type = #tpu.core_type<tc>} {
    %c0_i32 = arith.constant 0 : i32
    %0 = tpu.memref_slice %arg8[%c0_i32] : memref<1x!tpu.dma_semaphore, #tpu.memory_space<semaphore_mem>> -> memref<1x!tpu.dma_semaphore, #tpu.memory_space<semaphore_mem>>
    %1 = tpu.memref_squeeze %0 : memref<1x!tpu.dma_semaphore, #tpu.memory_space<semaphore_mem>> -> memref<!tpu.dma_semaphore, #tpu.memory_space<semaphore_mem>>
    tpu.enqueue_dma source(%arg4 : memref<256x640xbf16, #tpu.memory_space<any>>) target(%arg6 : memref<256x640xbf16, #tpu.memory_space<vmem>>) target_semaphore(%1 : memref<!tpu.dma_semaphore, #tpu.memory_space<semaphore_mem>>)
    %c0 = arith.constant 0 : index
    %c0_0 = arith.constant 0 : index
    %2 = vector.load %arg2[%c0, %c0_0] : memref<256x1024xbf16, #tpu.memory_space<vmem>>, vector<256x1024xbf16>
    %c0_1 = arith.constant 0 : index
    %c0_2 = arith.constant 0 : index
    %3 = vector.load %arg3[%c0_1, %c0_2] : memref<1x1664xf32, #tpu.memory_space<vmem>>, vector<1x1024xf32>
    %c0_3 = arith.constant 0 : index
    %c0_4 = arith.constant 0 : index
    %4 = vector.load %arg0[%c0_3, %c0_4] : memref<64x16xbf16, #tpu.memory_space<vmem>>, vector<64x16xbf16>
    %c0_5 = arith.constant 0 : index
    %c0_6 = arith.constant 0 : index
    %5 = vector.load %arg1[%c0_5, %c0_6] : memref<16x1024xbf16, #tpu.memory_space<vmem>>, vector<16x1024xbf16>
    %cst = arith.constant dense<0.000000e+00> : vector<64x1024xf32>
    %6 = tpu.matmul %4, %5, %cst {dimension_numbers = #tpu.dot_dimension_numbers<[1], [0], [0], [1], [0, 0, 1, 1], [], []>} : vector<64x16xbf16>, vector<16x1024xbf16>, vector<64x1024xf32> -> vector<64x1024xf32>
    %7 = vector.broadcast %3 : vector<1x1024xf32> to vector<64x1024xf32>
    %8 = arith.addf %6, %7 : vector<64x1024xf32>
    %c0_7 = arith.constant 0 : index
    %c0_8 = arith.constant 0 : index
    %9 = vector.load %arg7[%c0_7, %c0_8] : memref<64x1024xf32, #tpu.memory_space<vmem>>, vector<64x1024xf32>
    tpu.vector_store %arg7[%c0_7, %c0_8], %8 {strides = array<i32>} : memref<64x1024xf32, #tpu.memory_space<vmem>>, vector<64x1024xf32>,
    %cst_9 = arith.constant 0.000000e+00 : f32
    %10 = vector.broadcast %cst_9 : f32 to vector<8x256xf32>
    %cst_10 = arith.constant 0.000000e+00 : f32
    %11 = vector.broadcast %cst_10 : f32 to vector<8x256xf32>
    %c0_11 = arith.constant 0 : index
    %c0_12 = arith.constant 0 : index
    %12 = vector.load %arg7[%c0_11, %c0_12] : memref<64x1024xf32, #tpu.memory_space<vmem>>, vector<8x1024xf32>
    %13 = arith.truncf %10 : vector<8x256xf32> to vector<8x256xbf16>
    %cst_13 = arith.constant dense<0.000000e+00> : vector<8x1024xf32>
    %14 = tpu.matmul %13, %2, %cst_13 {dimension_numbers = #tpu.dot_dimension_numbers<[1], [0], [0], [1], [0, 0, 1, 1], [], []>} : vector<8x256xbf16>, vector<256x1024xbf16>, vector<8x1024xf32> -> vector<8x1024xf32>
    %15 = arith.addf %12, %14 : vector<8x1024xf32>
    %16 = vector.extract_strided_slice %15 {offsets = [0, 0], sizes = [8, 256], strides = [1, 1]} : vector<8x1024xf32> to vector<8x256xf32>
    %cst_14 = arith.constant 5.000000e-01 : f32
    %17 = vector.broadcast %cst_14 : f32 to vector<8x256xf32>
    %18 = arith.mulf %17, %16 : vector<8x256xf32>
    %19 = math.tanh %18 : vector<8x256xf32>
    %cst_15 = arith.constant 5.000000e-01 : f32
    %20 = vector.broadcast %cst_15 : f32 to vector<8x256xf32>
    %21 = arith.mulf %20, %19 : vector<8x256xf32>
    %cst_16 = arith.constant 5.000000e-01 : f32
    %22 = vector.broadcast %cst_16 : f32 to vector<8x256xf32>
    %23 = arith.addf %21, %22 : vector<8x256xf32>
    %24 = vector.extract_strided_slice %15 {offsets = [0, 256], sizes = [8, 256], strides = [1, 1]} : vector<8x1024xf32> to vector<8x256xf32>
    %cst_17 = arith.constant 5.000000e-01 : f32
    %25 = vector.broadcast %cst_17 : f32 to vector<8x256xf32>
    %26 = arith.mulf %25, %24 : vector<8x256xf32>
    %27 = math.tanh %26 : vector<8x256xf32>
    %cst_18 = arith.constant 5.000000e-01 : f32
    %28 = vector.broadcast %cst_18 : f32 to vector<8x256xf32>
    %29 = arith.mulf %28, %27 : vector<8x256xf32>
    %cst_19 = arith.constant 5.000000e-01 : f32
    %30 = vector.broadcast %cst_19 : f32 to vector<8x256xf32>
    %31 = arith.addf %29, %30 : vector<8x256xf32>
    %32 = vector.extract_strided_slice %15 {offsets = [0, 512], sizes = [8, 256], strides = [1, 1]} : vector<8x1024xf32> to vector<8x256xf32>
    %33 = math.tanh %32 : vector<8x256xf32>
    %34 = vector.extract_strided_slice %15 {offsets = [0, 768], sizes = [8, 256], strides = [1, 1]} : vector<8x1024xf32> to vector<8x256xf32>
    %cst_20 = arith.constant 5.000000e-01 : f32
    %35 = vector.broadcast %cst_20 : f32 to vector<8x256xf32>
    %36 = arith.mulf %35, %34 : vector<8x256xf32>
    %37 = math.tanh %36 : vector<8x256xf32>
    %cst_21 = arith.constant 5.000000e-01 : f32
    %38 = vector.broadcast %cst_21 : f32 to vector<8x256xf32>
    %39 = arith.mulf %38, %37 : vector<8x256xf32>
    %cst_22 = arith.constant 5.000000e-01 : f32
    %40 = vector.broadcast %cst_22 : f32 to vector<8x256xf32>
    %41 = arith.addf %39, %40 : vector<8x256xf32>
    %42 = arith.mulf %31, %11 : vector<8x256xf32>
    %43 = arith.mulf %23, %33 : vector<8x256xf32>
    %44 = arith.addf %42, %43 : vector<8x256xf32>
    %45 = math.tanh %44 : vector<8x256xf32>
    %46 = arith.mulf %41, %45 : vector<8x256xf32>
    %c8 = arith.constant 8 : index
    %c0_23 = arith.constant 0 : index
    %47 = vector.load %arg7[%c8, %c0_23] : memref<64x1024xf32, #tpu.memory_space<vmem>>, vector<8x1024xf32>
    %48 = arith.truncf %46 : vector<8x256xf32> to vector<8x256xbf16>
    %cst_24 = arith.constant dense<0.000000e+00> : vector<8x1024xf32>
    %49 = tpu.matmul %48, %2, %cst_24 {dimension_numbers = #tpu.dot_dimension_numbers<[1], [0], [0], [1], [0, 0, 1, 1], [], []>} : vector<8x256xbf16>, vector<256x1024xbf16>, vector<8x1024xf32> -> vector<8x1024xf32>
    %50 = arith.addf %47, %49 : vector<8x1024xf32>
    %51 = vector.extract_strided_slice %50 {offsets = [0, 0], sizes = [8, 256], strides = [1, 1]} : vector<8x1024xf32> to vector<8x256xf32>
    %cst_25 = arith.constant 5.000000e-01 : f32
    %52 = vector.broadcast %cst_25 : f32 to vector<8x256xf32>
    %53 = arith.mulf %52, %51 : vector<8x256xf32>
    %54 = math.tanh %53 : vector<8x256xf32>
    %cst_26 = arith.constant 5.000000e-01 : f32
    %55 = vector.broadcast %cst_26 : f32 to vector<8x256xf32>
    %56 = arith.mulf %55, %54 : vector<8x256xf32>
    %cst_27 = arith.constant 5.000000e-01 : f32
    %57 = vector.broadcast %cst_27 : f32 to vector<8x256xf32>
    %58 = arith.addf %56, %57 : vector<8x256xf32>
    %59 = vector.extract_strided_slice %50 {offsets = [0, 256], sizes = [8, 256], strides = [1, 1]} : vector<8x1024xf32> to vector<8x256xf32>
    %cst_28 = arith.constant 5.000000e-01 : f32
    %60 = vector.broadcast %cst_28 : f32 to vector<8x256xf32>
    %61 = arith.mulf %60, %59 : vector<8x256xf32>
    %62 = math.tanh %61 : vector<8x256xf32>
    %cst_29 = arith.constant 5.000000e-01 : f32
    %63 = vector.broadcast %cst_29 : f32 to vector<8x256xf32>
    %64 = arith.mulf %63, %62 : vector<8x256xf32>
    %cst_30 = arith.constant 5.000000e-01 : f32
    %65 = vector.broadcast %cst_30 : f32 to vector<8x256xf32>
    %66 = arith.addf %64, %65 : vector<8x256xf32>
    %67 = vector.extract_strided_slice %50 {offsets = [0, 512], sizes = [8, 256], strides = [1, 1]} : vector<8x1024xf32> to vector<8x256xf32>
    %68 = math.tanh %67 : vector<8x256xf32>
    %69 = vector.extract_strided_slice %50 {offsets = [0, 768], sizes = [8, 256], strides = [1, 1]} : vector<8x1024xf32> to vector<8x256xf32>
    %cst_31 = arith.constant 5.000000e-01 : f32
    %70 = vector.broadcast %cst_31 : f32 to vector<8x256xf32>
    %71 = arith.mulf %70, %69 : vector<8x256xf32>
    %72 = math.tanh %71 : vector<8x256xf32>
    %cst_32 = arith.constant 5.000000e-01 : f32
    %73 = vector.broadcast %cst_32 : f32 to vector<8x256xf32>
    %74 = arith.mulf %73, %72 : vector<8x256xf32>
    %cst_33 = arith.constant 5.000000e-01 : f32
    %75 = vector.broadcast %cst_33 : f32 to vector<8x256xf32>
    %76 = arith.addf %74, %75 : vector<8x256xf32>
    %77 = arith.mulf %66, %44 : vector<8x256xf32>
    %78 = arith.mulf %58, %68 : vector<8x256xf32>
    %79 = arith.addf %77, %78 : vector<8x256xf32>
    %80 = math.tanh %79 : vector<8x256xf32>
    %81 = arith.mulf %76, %80 : vector<8x256xf32>
    %c16 = arith.constant 16 : index
    %c0_34 = arith.constant 0 : index
    %82 = vector.load %arg7[%c16, %c0_34] : memref<64x1024xf32, #tpu.memory_space<vmem>>, vector<8x1024xf32>
    %83 = arith.truncf %81 : vector<8x256xf32> to vector<8x256xbf16>
    %cst_35 = arith.constant dense<0.000000e+00> : vector<8x1024xf32>
    %84 = tpu.matmul %83, %2, %cst_35 {dimension_numbers = #tpu.dot_dimension_numbers<[1], [0], [0], [1], [0, 0, 1, 1], [], []>} : vector<8x256xbf16>, vector<256x1024xbf16>, vector<8x1024xf32> -> vector<8x1024xf32>
    %85 = arith.addf %82, %84 : vector<8x1024xf32>
    %86 = vector.extract_strided_slice %85 {offsets = [0, 0], sizes = [8, 256], strides = [1, 1]} : vector<8x1024xf32> to vector<8x256xf32>
    %cst_36 = arith.constant 5.000000e-01 : f32
    %87 = vector.broadcast %cst_36 : f32 to vector<8x256xf32>
    %88 = arith.mulf %87, %86 : vector<8x256xf32>
    %89 = math.tanh %88 : vector<8x256xf32>
    %cst_37 = arith.constant 5.000000e-01 : f32
    %90 = vector.broadcast %cst_37 : f32 to vector<8x256xf32>
    %91 = arith.mulf %90, %89 : vector<8x256xf32>
    %cst_38 = arith.constant 5.000000e-01 : f32
    %92 = vector.broadcast %cst_38 : f32 to vector<8x256xf32>
    %93 = arith.addf %91, %92 : vector<8x256xf32>
    %94 = vector.extract_strided_slice %85 {offsets = [0, 256], sizes = [8, 256], strides = [1, 1]} : vector<8x1024xf32> to vector<8x256xf32>
    %cst_39 = arith.constant 5.000000e-01 : f32
    %95 = vector.broadcast %cst_39 : f32 to vector<8x256xf32>
    %96 = arith.mulf %95, %94 : vector<8x256xf32>
    %97 = math.tanh %96 : vector<8x256xf32>
    %cst_40 = arith.constant 5.000000e-01 : f32
    %98 = vector.broadcast %cst_40 : f32 to vector<8x256xf32>
    %99 = arith.mulf %98, %97 : vector<8x256xf32>
    %cst_41 = arith.constant 5.000000e-01 : f32
    %100 = vector.broadcast %cst_41 : f32 to vector<8x256xf32>
    %101 = arith.addf %99, %100 : vector<8x256xf32>
    %102 = vector.extract_strided_slice %85 {offsets = [0, 512], sizes = [8, 256], strides = [1, 1]} : vector<8x1024xf32> to vector<8x256xf32>
    %103 = math.tanh %102 : vector<8x256xf32>
    %104 = vector.extract_strided_slice %85 {offsets = [0, 768], sizes = [8, 256], strides = [1, 1]} : vector<8x1024xf32> to vector<8x256xf32>
    %cst_42 = arith.constant 5.000000e-01 : f32
    %105 = vector.broadcast %cst_42 : f32 to vector<8x256xf32>
    %106 = arith.mulf %105, %104 : vector<8x256xf32>
    %107 = math.tanh %106 : vector<8x256xf32>
    %cst_43 = arith.constant 5.000000e-01 : f32
    %108 = vector.broadcast %cst_43 : f32 to vector<8x256xf32>
    %109 = arith.mulf %108, %107 : vector<8x256xf32>
    %cst_44 = arith.constant 5.000000e-01 : f32
    %110 = vector.broadcast %cst_44 : f32 to vector<8x256xf32>
    %111 = arith.addf %109, %110 : vector<8x256xf32>
    %112 = arith.mulf %101, %79 : vector<8x256xf32>
    %113 = arith.mulf %93, %103 : vector<8x256xf32>
    %114 = arith.addf %112, %113 : vector<8x256xf32>
    %115 = math.tanh %114 : vector<8x256xf32>
    %116 = arith.mulf %111, %115 : vector<8x256xf32>
    %c24 = arith.constant 24 : index
    %c0_45 = arith.constant 0 : index
    %117 = vector.load %arg7[%c24, %c0_45] : memref<64x1024xf32, #tpu.memory_space<vmem>>, vector<8x1024xf32>
    %118 = arith.truncf %116 : vector<8x256xf32> to vector<8x256xbf16>
    %cst_46 = arith.constant dense<0.000000e+00> : vector<8x1024xf32>
    %119 = tpu.matmul %118, %2, %cst_46 {dimension_numbers = #tpu.dot_dimension_numbers<[1], [0], [0], [1], [0, 0, 1, 1], [], []>} : vector<8x256xbf16>, vector<256x1024xbf16>, vector<8x1024xf32> -> vector<8x1024xf32>
    %120 = arith.addf %117, %119 : vector<8x1024xf32>
    %121 = vector.extract_strided_slice %120 {offsets = [0, 0], sizes = [8, 256], strides = [1, 1]} : vector<8x1024xf32> to vector<8x256xf32>
    %cst_47 = arith.constant 5.000000e-01 : f32
    %122 = vector.broadcast %cst_47 : f32 to vector<8x256xf32>
    %123 = arith.mulf %122, %121 : vector<8x256xf32>
    %124 = math.tanh %123 : vector<8x256xf32>
    %cst_48 = arith.constant 5.000000e-01 : f32
    %125 = vector.broadcast %cst_48 : f32 to vector<8x256xf32>
    %126 = arith.mulf %125, %124 : vector<8x256xf32>
    %cst_49 = arith.constant 5.000000e-01 : f32
    %127 = vector.broadcast %cst_49 : f32 to vector<8x256xf32>
    %128 = arith.addf %126, %127 : vector<8x256xf32>
    %129 = vector.extract_strided_slice %120 {offsets = [0, 256], sizes = [8, 256], strides = [1, 1]} : vector<8x1024xf32> to vector<8x256xf32>
    %cst_50 = arith.constant 5.000000e-01 : f32
    %130 = vector.broadcast %cst_50 : f32 to vector<8x256xf32>
    %131 = arith.mulf %130, %129 : vector<8x256xf32>
    %132 = math.tanh %131 : vector<8x256xf32>
    %cst_51 = arith.constant 5.000000e-01 : f32
    %133 = vector.broadcast %cst_51 : f32 to vector<8x256xf32>
    %134 = arith.mulf %133, %132 : vector<8x256xf32>
    %cst_52 = arith.constant 5.000000e-01 : f32
    %135 = vector.broadcast %cst_52 : f32 to vector<8x256xf32>
    %136 = arith.addf %134, %135 : vector<8x256xf32>
    %137 = vector.extract_strided_slice %120 {offsets = [0, 512], sizes = [8, 256], strides = [1, 1]} : vector<8x1024xf32> to vector<8x256xf32>
    %138 = math.tanh %137 : vector<8x256xf32>
    %139 = vector.extract_strided_slice %120 {offsets = [0, 768], sizes = [8, 256], strides = [1, 1]} : vector<8x1024xf32> to vector<8x256xf32>
    %cst_53 = arith.constant 5.000000e-01 : f32
    %140 = vector.broadcast %cst_53 : f32 to vector<8x256xf32>
    %141 = arith.mulf %140, %139 : vector<8x256xf32>
    %142 = math.tanh %141 : vector<8x256xf32>
    %cst_54 = arith.constant 5.000000e-01 : f32
    %143 = vector.broadcast %cst_54 : f32 to vector<8x256xf32>
    %144 = arith.mulf %143, %142 : vector<8x256xf32>
    %cst_55 = arith.constant 5.000000e-01 : f32
    %145 = vector.broadcast %cst_55 : f32 to vector<8x256xf32>
    %146 = arith.addf %144, %145 : vector<8x256xf32>
    %147 = arith.mulf %136, %114 : vector<8x256xf32>
    %148 = arith.mulf %128, %138 : vector<8x256xf32>
    %149 = arith.addf %147, %148 : vector<8x256xf32>
    %150 = math.tanh %149 : vector<8x256xf32>
    %151 = arith.mulf %146, %150 : vector<8x256xf32>
    %c32 = arith.constant 32 : index
    %c0_56 = arith.constant 0 : index
    %152 = vector.load %arg7[%c32, %c0_56] : memref<64x1024xf32, #tpu.memory_space<vmem>>, vector<8x1024xf32>
    %153 = arith.truncf %151 : vector<8x256xf32> to vector<8x256xbf16>
    %cst_57 = arith.constant dense<0.000000e+00> : vector<8x1024xf32>
    %154 = tpu.matmul %153, %2, %cst_57 {dimension_numbers = #tpu.dot_dimension_numbers<[1], [0], [0], [1], [0, 0, 1, 1], [], []>} : vector<8x256xbf16>, vector<256x1024xbf16>, vector<8x1024xf32> -> vector<8x1024xf32>
    %155 = arith.addf %152, %154 : vector<8x1024xf32>
    %156 = vector.extract_strided_slice %155 {offsets = [0, 0], sizes = [8, 256], strides = [1, 1]} : vector<8x1024xf32> to vector<8x256xf32>
    %cst_58 = arith.constant 5.000000e-01 : f32
    %157 = vector.broadcast %cst_58 : f32 to vector<8x256xf32>
    %158 = arith.mulf %157, %156 : vector<8x256xf32>
    %159 = math.tanh %158 : vector<8x256xf32>
    %cst_59 = arith.constant 5.000000e-01 : f32
    %160 = vector.broadcast %cst_59 : f32 to vector<8x256xf32>
    %161 = arith.mulf %160, %159 : vector<8x256xf32>
    %cst_60 = arith.constant 5.000000e-01 : f32
    %162 = vector.broadcast %cst_60 : f32 to vector<8x256xf32>
    %163 = arith.addf %161, %162 : vector<8x256xf32>
    %164 = vector.extract_strided_slice %155 {offsets = [0, 256], sizes = [8, 256], strides = [1, 1]} : vector<8x1024xf32> to vector<8x256xf32>
    %cst_61 = arith.constant 5.000000e-01 : f32
    %165 = vector.broadcast %cst_61 : f32 to vector<8x256xf32>
    %166 = arith.mulf %165, %164 : vector<8x256xf32>
    %167 = math.tanh %166 : vector<8x256xf32>
    %cst_62 = arith.constant 5.000000e-01 : f32
    %168 = vector.broadcast %cst_62 : f32 to vector<8x256xf32>
    %169 = arith.mulf %168, %167 : vector<8x256xf32>
    %cst_63 = arith.constant 5.000000e-01 : f32
    %170 = vector.broadcast %cst_63 : f32 to vector<8x256xf32>
    %171 = arith.addf %169, %170 : vector<8x256xf32>
    %172 = vector.extract_strided_slice %155 {offsets = [0, 512], sizes = [8, 256], strides = [1, 1]} : vector<8x1024xf32> to vector<8x256xf32>
    %173 = math.tanh %172 : vector<8x256xf32>
    %174 = vector.extract_strided_slice %155 {offsets = [0, 768], sizes = [8, 256], strides = [1, 1]} : vector<8x1024xf32> to vector<8x256xf32>
    %cst_64 = arith.constant 5.000000e-01 : f32
    %175 = vector.broadcast %cst_64 : f32 to vector<8x256xf32>
    %176 = arith.mulf %175, %174 : vector<8x256xf32>
    %177 = math.tanh %176 : vector<8x256xf32>
    %cst_65 = arith.constant 5.000000e-01 : f32
    %178 = vector.broadcast %cst_65 : f32 to vector<8x256xf32>
    %179 = arith.mulf %178, %177 : vector<8x256xf32>
    %cst_66 = arith.constant 5.000000e-01 : f32
    %180 = vector.broadcast %cst_66 : f32 to vector<8x256xf32>
    %181 = arith.addf %179, %180 : vector<8x256xf32>
    %182 = arith.mulf %171, %149 : vector<8x256xf32>
    %183 = arith.mulf %163, %173 : vector<8x256xf32>
    %184 = arith.addf %182, %183 : vector<8x256xf32>
    %185 = math.tanh %184 : vector<8x256xf32>
    %186 = arith.mulf %181, %185 : vector<8x256xf32>
    %c40 = arith.constant 40 : index
    %c0_67 = arith.constant 0 : index
    %187 = vector.load %arg7[%c40, %c0_67] : memref<64x1024xf32, #tpu.memory_space<vmem>>, vector<8x1024xf32>
    %188 = arith.truncf %186 : vector<8x256xf32> to vector<8x256xbf16>
    %cst_68 = arith.constant dense<0.000000e+00> : vector<8x1024xf32>
    %189 = tpu.matmul %188, %2, %cst_68 {dimension_numbers = #tpu.dot_dimension_numbers<[1], [0], [0], [1], [0, 0, 1, 1], [], []>} : vector<8x256xbf16>, vector<256x1024xbf16>, vector<8x1024xf32> -> vector<8x1024xf32>
    %190 = arith.addf %187, %189 : vector<8x1024xf32>
    %191 = vector.extract_strided_slice %190 {offsets = [0, 0], sizes = [8, 256], strides = [1, 1]} : vector<8x1024xf32> to vector<8x256xf32>
    %cst_69 = arith.constant 5.000000e-01 : f32
    %192 = vector.broadcast %cst_69 : f32 to vector<8x256xf32>
    %193 = arith.mulf %192, %191 : vector<8x256xf32>
    %194 = math.tanh %193 : vector<8x256xf32>
    %cst_70 = arith.constant 5.000000e-01 : f32
    %195 = vector.broadcast %cst_70 : f32 to vector<8x256xf32>
    %196 = arith.mulf %195, %194 : vector<8x256xf32>
    %cst_71 = arith.constant 5.000000e-01 : f32
    %197 = vector.broadcast %cst_71 : f32 to vector<8x256xf32>
    %198 = arith.addf %196, %197 : vector<8x256xf32>
    %199 = vector.extract_strided_slice %190 {offsets = [0, 256], sizes = [8, 256], strides = [1, 1]} : vector<8x1024xf32> to vector<8x256xf32>
    %cst_72 = arith.constant 5.000000e-01 : f32
    %200 = vector.broadcast %cst_72 : f32 to vector<8x256xf32>
    %201 = arith.mulf %200, %199 : vector<8x256xf32>
    %202 = math.tanh %201 : vector<8x256xf32>
    %cst_73 = arith.constant 5.000000e-01 : f32
    %203 = vector.broadcast %cst_73 : f32 to vector<8x256xf32>
    %204 = arith.mulf %203, %202 : vector<8x256xf32>
    %cst_74 = arith.constant 5.000000e-01 : f32
    %205 = vector.broadcast %cst_74 : f32 to vector<8x256xf32>
    %206 = arith.addf %204, %205 : vector<8x256xf32>
    %207 = vector.extract_strided_slice %190 {offsets = [0, 512], sizes = [8, 256], strides = [1, 1]} : vector<8x1024xf32> to vector<8x256xf32>
    %208 = math.tanh %207 : vector<8x256xf32>
    %209 = vector.extract_strided_slice %190 {offsets = [0, 768], sizes = [8, 256], strides = [1, 1]} : vector<8x1024xf32> to vector<8x256xf32>
    %cst_75 = arith.constant 5.000000e-01 : f32
    %210 = vector.broadcast %cst_75 : f32 to vector<8x256xf32>
    %211 = arith.mulf %210, %209 : vector<8x256xf32>
    %212 = math.tanh %211 : vector<8x256xf32>
    %cst_76 = arith.constant 5.000000e-01 : f32
    %213 = vector.broadcast %cst_76 : f32 to vector<8x256xf32>
    %214 = arith.mulf %213, %212 : vector<8x256xf32>
    %cst_77 = arith.constant 5.000000e-01 : f32
    %215 = vector.broadcast %cst_77 : f32 to vector<8x256xf32>
    %216 = arith.addf %214, %215 : vector<8x256xf32>
    %217 = arith.mulf %206, %184 : vector<8x256xf32>
    %218 = arith.mulf %198, %208 : vector<8x256xf32>
    %219 = arith.addf %217, %218 : vector<8x256xf32>
    %220 = math.tanh %219 : vector<8x256xf32>
    %221 = arith.mulf %216, %220 : vector<8x256xf32>
    %c48 = arith.constant 48 : index
    %c0_78 = arith.constant 0 : index
    %222 = vector.load %arg7[%c48, %c0_78] : memref<64x1024xf32, #tpu.memory_space<vmem>>, vector<8x1024xf32>
    %223 = arith.truncf %221 : vector<8x256xf32> to vector<8x256xbf16>
    %cst_79 = arith.constant dense<0.000000e+00> : vector<8x1024xf32>
    %224 = tpu.matmul %223, %2, %cst_79 {dimension_numbers = #tpu.dot_dimension_numbers<[1], [0], [0], [1], [0, 0, 1, 1], [], []>} : vector<8x256xbf16>, vector<256x1024xbf16>, vector<8x1024xf32> -> vector<8x1024xf32>
    %225 = arith.addf %222, %224 : vector<8x1024xf32>
    %226 = vector.extract_strided_slice %225 {offsets = [0, 0], sizes = [8, 256], strides = [1, 1]} : vector<8x1024xf32> to vector<8x256xf32>
    %cst_80 = arith.constant 5.000000e-01 : f32
    %227 = vector.broadcast %cst_80 : f32 to vector<8x256xf32>
    %228 = arith.mulf %227, %226 : vector<8x256xf32>
    %229 = math.tanh %228 : vector<8x256xf32>
    %cst_81 = arith.constant 5.000000e-01 : f32
    %230 = vector.broadcast %cst_81 : f32 to vector<8x256xf32>
    %231 = arith.mulf %230, %229 : vector<8x256xf32>
    %cst_82 = arith.constant 5.000000e-01 : f32
    %232 = vector.broadcast %cst_82 : f32 to vector<8x256xf32>
    %233 = arith.addf %231, %232 : vector<8x256xf32>
    %234 = vector.extract_strided_slice %225 {offsets = [0, 256], sizes = [8, 256], strides = [1, 1]} : vector<8x1024xf32> to vector<8x256xf32>
    %cst_83 = arith.constant 5.000000e-01 : f32
    %235 = vector.broadcast %cst_83 : f32 to vector<8x256xf32>
    %236 = arith.mulf %235, %234 : vector<8x256xf32>
    %237 = math.tanh %236 : vector<8x256xf32>
    %cst_84 = arith.constant 5.000000e-01 : f32
    %238 = vector.broadcast %cst_84 : f32 to vector<8x256xf32>
    %239 = arith.mulf %238, %237 : vector<8x256xf32>
    %cst_85 = arith.constant 5.000000e-01 : f32
    %240 = vector.broadcast %cst_85 : f32 to vector<8x256xf32>
    %241 = arith.addf %239, %240 : vector<8x256xf32>
    %242 = vector.extract_strided_slice %225 {offsets = [0, 512], sizes = [8, 256], strides = [1, 1]} : vector<8x1024xf32> to vector<8x256xf32>
    %243 = math.tanh %242 : vector<8x256xf32>
    %244 = vector.extract_strided_slice %225 {offsets = [0, 768], sizes = [8, 256], strides = [1, 1]} : vector<8x1024xf32> to vector<8x256xf32>
    %cst_86 = arith.constant 5.000000e-01 : f32
    %245 = vector.broadcast %cst_86 : f32 to vector<8x256xf32>
    %246 = arith.mulf %245, %244 : vector<8x256xf32>
    %247 = math.tanh %246 : vector<8x256xf32>
    %cst_87 = arith.constant 5.000000e-01 : f32
    %248 = vector.broadcast %cst_87 : f32 to vector<8x256xf32>
    %249 = arith.mulf %248, %247 : vector<8x256xf32>
    %cst_88 = arith.constant 5.000000e-01 : f32
    %250 = vector.broadcast %cst_88 : f32 to vector<8x256xf32>
    %251 = arith.addf %249, %250 : vector<8x256xf32>
    %252 = arith.mulf %241, %219 : vector<8x256xf32>
    %253 = arith.mulf %233, %243 : vector<8x256xf32>
    %254 = arith.addf %252, %253 : vector<8x256xf32>
    %255 = math.tanh %254 : vector<8x256xf32>
    %256 = arith.mulf %251, %255 : vector<8x256xf32>
    %c56 = arith.constant 56 : index
    %c0_89 = arith.constant 0 : index
    %257 = vector.load %arg7[%c56, %c0_89] : memref<64x1024xf32, #tpu.memory_space<vmem>>, vector<8x1024xf32>
    %258 = arith.truncf %256 : vector<8x256xf32> to vector<8x256xbf16>
    %cst_90 = arith.constant dense<0.000000e+00> : vector<8x1024xf32>
    %259 = tpu.matmul %258, %2, %cst_90 {dimension_numbers = #tpu.dot_dimension_numbers<[1], [0], [0], [1], [0, 0, 1, 1], [], []>} : vector<8x256xbf16>, vector<256x1024xbf16>, vector<8x1024xf32> -> vector<8x1024xf32>
    %260 = arith.addf %257, %259 : vector<8x1024xf32>
    %261 = vector.extract_strided_slice %260 {offsets = [0, 0], sizes = [8, 256], strides = [1, 1]} : vector<8x1024xf32> to vector<8x256xf32>
    %cst_91 = arith.constant 5.000000e-01 : f32
    %262 = vector.broadcast %cst_91 : f32 to vector<8x256xf32>
    %263 = arith.mulf %262, %261 : vector<8x256xf32>
    %264 = math.tanh %263 : vector<8x256xf32>
    %cst_92 = arith.constant 5.000000e-01 : f32
    %265 = vector.broadcast %cst_92 : f32 to vector<8x256xf32>
    %266 = arith.mulf %265, %264 : vector<8x256xf32>
    %cst_93 = arith.constant 5.000000e-01 : f32
    %267 = vector.broadcast %cst_93 : f32 to vector<8x256xf32>
    %268 = arith.addf %266, %267 : vector<8x256xf32>
    %269 = vector.extract_strided_slice %260 {offsets = [0, 256], sizes = [8, 256], strides = [1, 1]} : vector<8x1024xf32> to vector<8x256xf32>
    %cst_94 = arith.constant 5.000000e-01 : f32
    %270 = vector.broadcast %cst_94 : f32 to vector<8x256xf32>
    %271 = arith.mulf %270, %269 : vector<8x256xf32>
    %272 = math.tanh %271 : vector<8x256xf32>
    %cst_95 = arith.constant 5.000000e-01 : f32
    %273 = vector.broadcast %cst_95 : f32 to vector<8x256xf32>
    %274 = arith.mulf %273, %272 : vector<8x256xf32>
    %cst_96 = arith.constant 5.000000e-01 : f32
    %275 = vector.broadcast %cst_96 : f32 to vector<8x256xf32>
    %276 = arith.addf %274, %275 : vector<8x256xf32>
    %277 = vector.extract_strided_slice %260 {offsets = [0, 512], sizes = [8, 256], strides = [1, 1]} : vector<8x1024xf32> to vector<8x256xf32>
    %278 = math.tanh %277 : vector<8x256xf32>
    %279 = vector.extract_strided_slice %260 {offsets = [0, 768], sizes = [8, 256], strides = [1, 1]} : vector<8x1024xf32> to vector<8x256xf32>
    %cst_97 = arith.constant 5.000000e-01 : f32
    %280 = vector.broadcast %cst_97 : f32 to vector<8x256xf32>
    %281 = arith.mulf %280, %279 : vector<8x256xf32>
    %282 = math.tanh %281 : vector<8x256xf32>
    %cst_98 = arith.constant 5.000000e-01 : f32
    %283 = vector.broadcast %cst_98 : f32 to vector<8x256xf32>
    %284 = arith.mulf %283, %282 : vector<8x256xf32>
    %cst_99 = arith.constant 5.000000e-01 : f32
    %285 = vector.broadcast %cst_99 : f32 to vector<8x256xf32>
    %286 = arith.addf %284, %285 : vector<8x256xf32>
    %287 = arith.mulf %276, %254 : vector<8x256xf32>
    %288 = arith.mulf %268, %278 : vector<8x256xf32>
    %289 = arith.addf %287, %288 : vector<8x256xf32>
    %290 = math.tanh %289 : vector<8x256xf32>
    %291 = arith.mulf %286, %290 : vector<8x256xf32>
    %c0_i32_100 = arith.constant 0 : i32
    %292 = tpu.memref_slice %arg8[%c0_i32_100] : memref<1x!tpu.dma_semaphore, #tpu.memory_space<semaphore_mem>> -> memref<1x!tpu.dma_semaphore, #tpu.memory_space<semaphore_mem>>
    %293 = tpu.memref_squeeze %292 : memref<1x!tpu.dma_semaphore, #tpu.memory_space<semaphore_mem>> -> memref<!tpu.dma_semaphore, #tpu.memory_space<semaphore_mem>>
    tpu.wait_dma2 semaphore(%293 : memref<!tpu.dma_semaphore, #tpu.memory_space<semaphore_mem>>) src(%arg4 : memref<256x640xbf16, #tpu.memory_space<any>>) dst(%arg6 : memref<256x640xbf16, #tpu.memory_space<vmem>>)
    %c0_101 = arith.constant 0 : index
    %c0_102 = arith.constant 0 : index
    %294 = vector.load %arg6[%c0_101, %c0_102] : memref<256x640xbf16, #tpu.memory_space<vmem>>, vector<256x256xbf16>
    %c0_103 = arith.constant 0 : index
    %c256 = arith.constant 256 : index
    %295 = vector.load %arg6[%c0_103, %c256] : memref<256x640xbf16, #tpu.memory_space<vmem>>, vector<256x256xbf16>
    %c0_104 = arith.constant 0 : index
    %c512 = arith.constant 512 : index
    %296 = vector.load %arg6[%c0_104, %c512] : memref<256x640xbf16, #tpu.memory_space<vmem>>, vector<256x128xbf16>
    %c0_105 = arith.constant 0 : index
    %c1024 = arith.constant 1024 : index
    %297 = vector.load %arg3[%c0_105, %c1024] : memref<1x1664xf32, #tpu.memory_space<vmem>>, vector<1x256xf32>
    %c0_106 = arith.constant 0 : index
    %c1280 = arith.constant 1280 : index
    %298 = vector.load %arg3[%c0_106, %c1280] : memref<1x1664xf32, #tpu.memory_space<vmem>>, vector<1x256xf32>
    %c0_107 = arith.constant 0 : index
    %c1536 = arith.constant 1536 : index
    %299 = vector.load %arg3[%c0_107, %c1536] : memref<1x1664xf32, #tpu.memory_space<vmem>>, vector<1x128xf32>
    %300 = arith.truncf %291 : vector<8x256xf32> to vector<8x256xbf16>
    %cst_108 = arith.constant dense<0.000000e+00> : vector<8x256xf32>
    %301 = tpu.matmul %300, %294, %cst_108 {dimension_numbers = #tpu.dot_dimension_numbers<[1], [0], [0], [1], [0, 0, 1, 1], [], []>} : vector<8x256xbf16>, vector<256x256xbf16>, vector<8x256xf32> -> vector<8x256xf32>
    %302 = vector.broadcast %297 : vector<1x256xf32> to vector<8x256xf32>
    %303 = arith.addf %301, %302 : vector<8x256xf32>
    %cst_109 = arith.constant 0.000000e+00 : f32
    %304 = vector.broadcast %cst_109 : f32 to vector<8x256xf32>
    %305 = arith.maximumf %303, %304 : vector<8x256xf32>
    %306 = arith.truncf %305 : vector<8x256xf32> to vector<8x256xbf16>
    %cst_110 = arith.constant dense<0.000000e+00> : vector<8x256xf32>
    %307 = tpu.matmul %306, %295, %cst_110 {dimension_numbers = #tpu.dot_dimension_numbers<[1], [0], [0], [1], [0, 0, 1, 1], [], []>} : vector<8x256xbf16>, vector<256x256xbf16>, vector<8x256xf32> -> vector<8x256xf32>
    %308 = vector.broadcast %298 : vector<1x256xf32> to vector<8x256xf32>
    %309 = arith.addf %307, %308 : vector<8x256xf32>
    %cst_111 = arith.constant 0.000000e+00 : f32
    %310 = vector.broadcast %cst_111 : f32 to vector<8x256xf32>
    %311 = arith.maximumf %309, %310 : vector<8x256xf32>
    %312 = arith.truncf %311 : vector<8x256xf32> to vector<8x256xbf16>
    %cst_112 = arith.constant dense<0.000000e+00> : vector<8x128xf32>
    %313 = tpu.matmul %312, %296, %cst_112 {dimension_numbers = #tpu.dot_dimension_numbers<[1], [0], [0], [1], [0, 0, 1, 1], [], []>} : vector<8x256xbf16>, vector<256x128xbf16>, vector<8x128xf32> -> vector<8x128xf32>
    %314 = vector.broadcast %299 : vector<1x128xf32> to vector<8x128xf32>
    %315 = arith.addf %313, %314 : vector<8x128xf32>
    %c0_113 = arith.constant 0 : index
    %c0_114 = arith.constant 0 : index
    %316 = vector.load %arg5[%c0_113, %c0_114] : memref<8x128xf32, #tpu.memory_space<vmem>>, vector<8x128xf32>
    tpu.vector_store %arg5[%c0_113, %c0_114], %315 {strides = array<i32>} : memref<8x128xf32, #tpu.memory_space<vmem>>, vector<8x128xf32>,
    return
  }
}

</mosaic_0001>

<llo_original>
// kernel: tpu_custom_call.1
$region0: #{tpu_custom_call.1}
  #allocation0 [shape = 'u32[]', space=smem, size = 0x4, offset = 0x4, fixed_abs, tag = 'smem constant byte address 0x4 - core index']
  #allocation1 [shape = 'u32[144,128]{1,0:T(1,128)}', space=vmem, size = 0x12000, scoped, tag = 'internal scratch']
  #allocation2 [shape = 'bf16[256,640]{1,0:T(8,128)(2,1)}', space=vmem, size = 0x50000, scoped, tag = 'scratch operand']
  #allocation3 [shape = 'f32[64,1024]{1,0:T(8,128)}', space=vmem, size = 0x40000, scoped, tag = 'scratch operand']
  #allocation4 [shape = 's32[1]{0}', space=sflag, size = 0x4, scoped, tag = 'scratch operand']
  #allocation11 [shape = 's32[]', space=sflag, size = 0x4, offset = 0, fixed_abs, tag = 'sflag constant byte address 0x0 - dummy sync flag']
  #allocation12 [shape = 's32[]', space=sflag, size = 0x4, offset = 0, fixed_abs, tag = 'sflag constant byte address 0x0 - dummy sync flag']
  #allocation13 [shape = 'u32[]', space=smem, size = 0x4, offset = 0x44, fixed_abs, tag = 'smem constant byte address 0x44 - assertion arg 0']
  #allocation14 [shape = 'u32[]', space=smem, size = 0x4, offset = 0x48, fixed_abs, tag = 'smem constant byte address 0x48 - assertion arg 1']
  %s0 = inlined_call_operand.vmem [shape: bf16[64,16], index: 0, kind: input, shape index: {}]
  %s1 = inlined_call_operand.hbm [shape: bf16[16,1024], index: 1, kind: input, shape index: {}]
  %s2 = inlined_call_operand.hbm [shape: bf16[256,1024], index: 2, kind: input, shape index: {}]
  %s3 = inlined_call_operand.vmem [shape: f32[1,1664], index: 3, kind: input, shape index: {}]
  %s4 = inlined_call_operand.hbm [shape: bf16[256,640], index: 4, kind: input, shape index: {}]
  %s5 = inlined_call_operand.hbm [shape: f32[8,128], index: 5, kind: output, shape index: {}]
  %s6 = sld [smem:[#allocation0]]
  $region38: #{tpu_custom_call.1} parent=0
    _
  %s8 = ssub.s32 1, %s6
  %s9 = scalar_select 0, %s8, %s6
  $region1: #{tpu_custom_call.1} parent=0
    #allocation5 [shape = 'u8[32768]{0}', space=vmem, size = 0x8000, scoped, tag = 'input window, operand 1, single buffered']
    #allocation6 [shape = 's32[1]{0}', space=sflag, size = 0x4, scoped, tag = 'scoped memory for tpu_custom_call.1']
    #allocation7 [shape = 's32[1]{0}', space=sflag, size = 0x4, scoped, tag = 'scoped memory for tpu_custom_call.1']
    #allocation8 [shape = 'u8[524288]{0}', space=vmem, size = 0x80000, scoped, tag = 'input window, operand 2, single buffered']
    #allocation9 [shape = 's32[1]{0}', space=sflag, size = 0x4, scoped, tag = 'scoped memory for tpu_custom_call.1']
    #allocation10 [shape = 'u8[4096]{0}', space=vmem, size = 0x1000, scoped, tag = 'output window, operand 0, single buffered']
    %10 = vsyncpa [#allocation6], 0
    %11 = vsyncpa [#allocation9], 0
    %12 = vsyncpa [#allocation7], 0
    // Predicated region
    $region2: #{tpu_custom_call.1} parent=1 // pred_check
      _
    $region3: #{tpu_custom_call.1} parent=1 // pred_check_branch
      %14 = sbr.rel (0) target = $region5
    $region4: #{tpu_custom_call.1} parent=1 // pred_region
      _
    $region5: #{tpu_custom_call.1} parent=1 // pred_fallthru
      _
    // Predicated region
    $region6: #{tpu_custom_call.1} parent=1 // pred_check
      _
    $region7: #{tpu_custom_call.1} parent=1 // pred_check_branch
      %16 = sbr.rel (0) target = $region9
    $region8: #{tpu_custom_call.1} parent=1 // pred_region
      %s18 = ssub.s32 1024, 1024
      %19 = vsyncadd [#allocation6], %s18
      %s20 = sshll.u32 [#allocation5], 4
      %s21 = int_to_ptr.vmem [resolvable:$true] %s20
      %26 = dma.hbm_to_vmem [thread:$0]  %s1, 1024, %s21, [#allocation6], 512, 512, 32
    $region9: #{tpu_custom_call.1} parent=1 // pred_fallthru
      _
    // Predicated region
    $region10: #{tpu_custom_call.1} parent=1 // pred_check
      _
    $region11: #{tpu_custom_call.1} parent=1 // pred_check_branch
      %28 = sbr.rel (0) target = $region13
    $region12: #{tpu_custom_call.1} parent=1 // pred_region
      %s30 = ssub.s32 16384, 16384
      %31 = vsyncadd [#allocation9], %s30
      %s32 = sshll.u32 [#allocation8], 4
      %s33 = int_to_ptr.vmem [resolvable:$true] %s32
      %38 = dma.hbm_to_vmem [thread:$0]  %s2, 16384, %s33, [#allocation9], 512, 512, 32
    $region13: #{tpu_custom_call.1} parent=1 // pred_fallthru
      _
    // Predicated region
    $region14: #{tpu_custom_call.1} parent=1 // pred_check
      _
    $region15: #{tpu_custom_call.1} parent=1 // pred_check_branch
      %40 = sbr.rel (0) target = $region17
    $region16: #{tpu_custom_call.1} parent=1 // pred_region
      _
    $region17: #{tpu_custom_call.1} parent=1 // pred_fallthru
      _
    // Predicated region
    $region18: #{tpu_custom_call.1} parent=1 // pred_check
      _
    $region19: #{tpu_custom_call.1} parent=1 // pred_check_branch
      %42 = sbr.rel (0) target = $region21
    $region20: #{tpu_custom_call.1} parent=1 // pred_region
      %43 = dma.done [#allocation6], 1024
    $region21: #{tpu_custom_call.1} parent=1 // pred_fallthru
      _
    // Predicated region
    $region22: #{tpu_custom_call.1} parent=1 // pred_check
      _
    $region23: #{tpu_custom_call.1} parent=1 // pred_check_branch
      %45 = sbr.rel (0) target = $region25
    $region24: #{tpu_custom_call.1} parent=1 // pred_region
      %46 = dma.done [#allocation9], 16384
    $region25: #{tpu_custom_call.1} parent=1 // pred_fallthru
      _
    // Predicated region
    $region26: #{tpu_custom_call.1} parent=1 // pred_check
      _
    $region27: #{tpu_custom_call.1} parent=1 // pred_check_branch
      %49 = sbr.rel target = $region29
    $region28: #{tpu_custom_call.1} parent=1 // pred_region
      %50 = sst [smem:[#allocation13]] [#allocation12]
      %51 = sst [smem:[#allocation14]] [#allocation11]
    $region29: #{tpu_custom_call.1} parent=1 // pred_fallthru
      _
    %53 = shalt.err (0)
    %s55 = sshll.u32 [#allocation2], 4
    %s56 = int_to_ptr.vmem [resolvable:$true] %s55
    %58 = dma.hbm_to_vmem [thread:$0]  %s4, 10240, %s56, [#allocation4]
    %v59 = vld [vmem:[#allocation8] sm:$0xff]
    %v60 = vld [vmem:[#allocation8 + $0x8] sm:$0xff]
    %v61 = vld [vmem:[#allocation8 + $0x10] sm:$0xff]
    %v62 = vld [vmem:[#allocation8 + $0x18] sm:$0xff]
    %v63 = vld [vmem:[#allocation8 + $0x20] sm:$0xff]
    %v64 = vld [vmem:[#allocation8 + $0x28] sm:$0xff]
    %v65 = vld [vmem:[#allocation8 + $0x30] sm:$0xff]
    %v66 = vld [vmem:[#allocation8 + $0x38] sm:$0xff]
    %v67 = vld [vmem:[#allocation8 + $0x40] sm:$0xff]
    %v68 = vld [vmem:[#allocation8 + $0x48] sm:$0xff]
    %v69 = vld [vmem:[#allocation8 + $0x50] sm:$0xff]
    %v70 = vld [vmem:[#allocation8 + $0x58] sm:$0xff]
    %v71 = vld [vmem:[#allocation8 + $0x60] sm:$0xff]
    %v72 = vld [vmem:[#allocation8 + $0x68] sm:$0xff]
    %v73 = vld [vmem:[#allocation8 + $0x70] sm:$0xff]
    %v74 = vld [vmem:[#allocation8 + $0x78] sm:$0xff]
    %v75 = vld [vmem:[#allocation8 + $0x80] sm:$0xff]
    %v76 = vld [vmem:[#allocation8 + $0x88] sm:$0xff]
    %v77 = vld [vmem:[#allocation8 + $0x90] sm:$0xff]
    %v78 = vld [vmem:[#allocation8 + $0x98] sm:$0xff]
    %v79 = vld [vmem:[#allocation8 + $0xa0] sm:$0xff]
    %v80 = vld [vmem:[#allocation8 + $0xa8] sm:$0xff]
    %v81 = vld [vmem:[#allocation8 + $0xb0] sm:$0xff]
    %v82 = vld [vmem:[#allocation8 + $0xb8] sm:$0xff]
    %v83 = vld [vmem:[#allocation8 + $0xc0] sm:$0xff]
    %v84 = vld [vmem:[#allocation8 + $0xc8] sm:$0xff]
    %v85 = vld [vmem:[#allocation8 + $0xd0] sm:$0xff]
    %v86 = vld [vmem:[#allocation8 + $0xd8] sm:$0xff]
    %v87 = vld [vmem:[#allocation8 + $0xe0] sm:$0xff]
    %v88 = vld [vmem:[#allocation8 + $0xe8] sm:$0xff]
    %v89 = vld [vmem:[#allocation8 + $0xf0] sm:$0xff]
    %v90 = vld [vmem:[#allocation8 + $0xf8] sm:$0xff]
    %v91 = vld [vmem:[#allocation8 + $0x100] sm:$0xff]
    %v92 = vld [vmem:[#allocation8 + $0x108] sm:$0xff]
    %v93 = vld [vmem:[#allocation8 + $0x110] sm:$0xff]
    %v94 = vld [vmem:[#allocation8 + $0x118] sm:$0xff]
    %v95 = vld [vmem:[#allocation8 + $0x120] sm:$0xff]
    %v96 = vld [vmem:[#allocation8 + $0x128] sm:$0xff]
    %v97 = vld [vmem:[#allocation8 + $0x130] sm:$0xff]
    %v98 = vld [vmem:[#allocation8 + $0x138] sm:$0xff]
    %v99 = vld [vmem:[#allocation8 + $0x140] sm:$0xff]
    %v100 = vld [vmem:[#allocation8 + $0x148] sm:$0xff]
    %v101 = vld [vmem:[#allocation8 + $0x150] sm:$0xff]
    %v102 = vld [vmem:[#allocation8 + $0x158] sm:$0xff]
    %v103 = vld [vmem:[#allocation8 + $0x160] sm:$0xff]
    %v104 = vld [vmem:[#allocation8 + $0x168] sm:$0xff]
    %v105 = vld [vmem:[#allocation8 + $0x170] sm:$0xff]
    %v106 = vld [vmem:[#allocation8 + $0x178] sm:$0xff]
    %v107 = vld [vmem:[#allocation8 + $0x180] sm:$0xff]
    %v108 = vld [vmem:[#allocation8 + $0x188] sm:$0xff]
    %v109 = vld [vmem:[#allocation8 + $0x190] sm:$0xff]
    %v110 = vld [vmem:[#allocation8 + $0x198] sm:$0xff]
    %v111 = vld [vmem:[#allocation8 + $0x1a0] sm:$0xff]
    %v112 = vld [vmem:[#allocation8 + $0x1a8] sm:$0xff]
    %v113 = vld [vmem:[#allocation8 + $0x1b0] sm:$0xff]
    %v114 = vld [vmem:[#allocation8 + $0x1b8] sm:$0xff]
    %v115 = vld [vmem:[#allocation8 + $0x1c0] sm:$0xff]
    %v116 = vld [vmem:[#allocation8 + $0x1c8] sm:$0xff]
    %v117 = vld [vmem:[#allocation8 + $0x1d0] sm:$0xff]
    %v118 = vld [vmem:[#allocation8 + $0x1d8] sm:$0xff]
    %v119 = vld [vmem:[#allocation8 + $0x1e0] sm:$0xff]
    %v120 = vld [vmem:[#allocation8 + $0x1e8] sm:$0xff]
    %v121 = vld [vmem:[#allocation8 + $0x1f0] sm:$0xff]
    %v122 = vld [vmem:[#allocation8 + $0x1f8] sm:$0xff]
    %v123 = vld [vmem:[#allocation8 + $0x200] sm:$0xff]
    %v124 = vld [vmem:[#allocation8 + $0x208] sm:$0xff]
    %v125 = vld [vmem:[#allocation8 + $0x210] sm:$0xff]
    %v126 = vld [vmem:[#allocation8 + $0x218] sm:$0xff]
    %v127 = vld [vmem:[#allocation8 + $0x220] sm:$0xff]
    %v128 = vld [vmem:[#allocation8 + $0x228] sm:$0xff]
    %v129 = vld [vmem:[#allocation8 + $0x230] sm:$0xff]
    %v130 = vld [vmem:[#allocation8 + $0x238] sm:$0xff]
    %v131 = vld [vmem:[#allocation8 + $0x240] sm:$0xff]
    %v132 = vld [vmem:[#allocation8 + $0x248] sm:$0xff]
    %v133 = vld [vmem:[#allocation8 + $0x250] sm:$0xff]
    %v134 = vld [vmem:[#allocation8 + $0x258] sm:$0xff]
    %v135 = vld [vmem:[#allocation8 + $0x260] sm:$0xff]
    %v136 = vld [vmem:[#allocation8 + $0x268] sm:$0xff]
    %v137 = vld [vmem:[#allocation8 + $0x270] sm:$0xff]
    %v138 = vld [vmem:[#allocation8 + $0x278] sm:$0xff]
    %v139 = vld [vmem:[#allocation8 + $0x280] sm:$0xff]
    %v140 = vld [vmem:[#allocation8 + $0x288] sm:$0xff]
    %v141 = vld [vmem:[#allocation8 + $0x290] sm:$0xff]
    %v142 = vld [vmem:[#allocation8 + $0x298] sm:$0xff]
    %v143 = vld [vmem:[#allocation8 + $0x2a0] sm:$0xff]
    %v144 = vld [vmem:[#allocation8 + $0x2a8] sm:$0xff]
    %v145 = vld [vmem:[#allocation8 + $0x2b0] sm:$0xff]
    %v146 = vld [vmem:[#allocation8 + $0x2b8] sm:$0xff]
    %v147 = vld [vmem:[#allocation8 + $0x2c0] sm:$0xff]
    %v148 = vld [vmem:[#allocation8 + $0x2c8] sm:$0xff]
    %v149 = vld [vmem:[#allocation8 + $0x2d0] sm:$0xff]
    %v150 = vld [vmem:[#allocation8 + $0x2d8] sm:$0xff]
    %v151 = vld [vmem:[#allocation8 + $0x2e0] sm:$0xff]
    %v152 = vld [vmem:[#allocation8 + $0x2e8] sm:$0xff]
    %v153 = vld [vmem:[#allocation8 + $0x2f0] sm:$0xff]
    %v154 = vld [vmem:[#allocation8 + $0x2f8] sm:$0xff]
    %v155 = vld [vmem:[#allocation8 + $0x300] sm:$0xff]
    %v156 = vld [vmem:[#allocation8 + $0x308] sm:$0xff]
    %v157 = vld [vmem:[#allocation8 + $0x310] sm:$0xff]
    %v158 = vld [vmem:[#allocation8 + $0x318] sm:$0xff]
    %v159 = vld [vmem:[#allocation8 + $0x320] sm:$0xff]
    %v160 = vld [vmem:[#allocation8 + $0x328] sm:$0xff]
    %v161 = vld [vmem:[#allocation8 + $0x330] sm:$0xff]
    %v162 = vld [vmem:[#allocation8 + $0x338] sm:$0xff]
    %v163 = vld [vmem:[#allocation8 + $0x340] sm:$0xff]
    %v164 = vld [vmem:[#allocation8 + $0x348] sm:$0xff]
    %v165 = vld [vmem:[#allocation8 + $0x350] sm:$0xff]
    %v166 = vld [vmem:[#allocation8 + $0x358] sm:$0xff]
    %v167 = vld [vmem:[#allocation8 + $0x360] sm:$0xff]
    %v168 = vld [vmem:[#allocation8 + $0x368] sm:$0xff]
    %v169 = vld [vmem:[#allocation8 + $0x370] sm:$0xff]
    %v170 = vld [vmem:[#allocation8 + $0x378] sm:$0xff]
    %v171 = vld [vmem:[#allocation8 + $0x380] sm:$0xff]
    %v172 = vld [vmem:[#allocation8 + $0x388] sm:$0xff]
    %v173 = vld [vmem:[#allocation8 + $0x390] sm:$0xff]
    %v174 = vld [vmem:[#allocation8 + $0x398] sm:$0xff]
    %v175 = vld [vmem:[#allocation8 + $0x3a0] sm:$0xff]
    %v176 = vld [vmem:[#allocation8 + $0x3a8] sm:$0xff]
    %v177 = vld [vmem:[#allocation8 + $0x3b0] sm:$0xff]
    %v178 = vld [vmem:[#allocation8 + $0x3b8] sm:$0xff]
    %v179 = vld [vmem:[#allocation8 + $0x3c0] sm:$0xff]
    %v180 = vld [vmem:[#allocation8 + $0x3c8] sm:$0xff]
    %v181 = vld [vmem:[#allocation8 + $0x3d0] sm:$0xff]
    %v182 = vld [vmem:[#allocation8 + $0x3d8] sm:$0xff]
    %v183 = vld [vmem:[#allocation8 + $0x3e0] sm:$0xff]
    %v184 = vld [vmem:[#allocation8 + $0x3e8] sm:$0xff]
    %v185 = vld [vmem:[#allocation8 + $0x3f0] sm:$0xff]
    %v186 = vld [vmem:[#allocation8 + $0x3f8] sm:$0xff]
    %v187 = vld [vmem:[%s3] sm:$0xff]
    %v188 = vld [vmem:[%s0] sm:$0xf]
    %v189 = vld [vmem:[%s0 + $0x4] sm:$0xf]
    %v190 = vld [vmem:[%s0 + $0x8] sm:$0xf]
    %v191 = vld [vmem:[%s0 + $0xc] sm:$0xf]
    %v192 = vld [vmem:[%s0 + $0x10] sm:$0xf]
    %v193 = vld [vmem:[%s0 + $0x14] sm:$0xf]
    %v194 = vld [vmem:[%s0 + $0x18] sm:$0xf]
    %v195 = vld [vmem:[%s0 + $0x1c] sm:$0xf]
    %v196 = vld [vmem:[#allocation5] sm:$0xff]
    %v197 = vld [vmem:[#allocation5 + $0x8] sm:$0xff]
    %v198 = vld [vmem:[#allocation5 + $0x10] sm:$0xff]
    %v199 = vld [vmem:[#allocation5 + $0x18] sm:$0xff]
    %v200 = vld [vmem:[#allocation5 + $0x20] sm:$0xff]
    %v201 = vld [vmem:[#allocation5 + $0x28] sm:$0xff]
    %v202 = vld [vmem:[#allocation5 + $0x30] sm:$0xff]
    %v203 = vld [vmem:[#allocation5 + $0x38] sm:$0xff]
    %v205 = vlaneseq
    %v206 = vshrl.u32 %v205, 7
    %v207 = vsub.s32 0, %v206
    %v208 = vrot.slane %v187, %v207
    %v209 = vlaneseq
    %v210 = vshrl.u32 %v209, 7
    %v211 = vsub.s32 1, %v210
    %v212 = vrot.slane %v187, %v211
    %v213 = vlaneseq
    %v214 = vshrl.u32 %v213, 7
    %v215 = vsub.s32 2, %v214
    %v216 = vrot.slane %v187, %v215
    %v217 = vlaneseq
    %v218 = vshrl.u32 %v217, 7
    %v219 = vsub.s32 3, %v218
    %v220 = vrot.slane %v187, %v219
    %v221 = vlaneseq
    %v222 = vshrl.u32 %v221, 7
    %v223 = vsub.s32 4, %v222
    %v224 = vrot.slane %v187, %v223
    %v225 = vlaneseq
    %v226 = vshrl.u32 %v225, 7
    %v227 = vsub.s32 5, %v226
    %v228 = vrot.slane %v187, %v227
    %v229 = vlaneseq
    %v230 = vshrl.u32 %v229, 7
    %v231 = vsub.s32 6, %v230
    %v232 = vrot.slane %v187, %v231
    %v233 = vlaneseq
    %v234 = vshrl.u32 %v233, 7
    %v235 = vsub.s32 7, %v234
    %v236 = vrot.slane %v187, %v235
    %v253 = vunpack.c.l.b16 %v188
    %v254 = vunpack.c.l.b16 %v189
    %v255 = vunpack.c.l.b16 %v190
    %v256 = vunpack.c.l.b16 %v191
    %v257 = vunpack.c.l.b16 %v192
    %v258 = vunpack.c.l.b16 %v193
    %v259 = vunpack.c.l.b16 %v194
    %v260 = vunpack.c.l.b16 %v195
    %v261 = vpack.c.b16 %v254, %v253
    %v262 = vpack.c.b16 %v256, %v255
    %v263 = vpack.c.b16 %v258, %v257
    %v264 = vpack.c.b16 %v260, %v259
    %v273 = vunpack.c.l.b16 %v196
    %v274 = vunpack.c.h.b16 %v196
    %v275 = vunpack.c.l.b16 %v197
    %v276 = vunpack.c.h.b16 %v197
    %v277 = vunpack.c.l.b16 %v198
    %v278 = vunpack.c.h.b16 %v198
    %v279 = vunpack.c.l.b16 %v199
    %v280 = vunpack.c.h.b16 %v199
    %v281 = vunpack.c.l.b16 %v200
    %v282 = vunpack.c.h.b16 %v200
    %v283 = vunpack.c.l.b16 %v201
    %v284 = vunpack.c.h.b16 %v201
    %v285 = vunpack.c.l.b16 %v202
    %v286 = vunpack.c.h.b16 %v202
    %v287 = vunpack.c.l.b16 %v203
    %v288 = vunpack.c.h.b16 %v203
    %v289 = vpack.c.b16 %v281, %v273
    %v290 = vpack.c.b16 %v282, %v274
    %v291 = vpack.c.b16 %v283, %v275
    %v292 = vpack.c.b16 %v284, %v276
    %v293 = vpack.c.b16 %v285, %v277
    %v294 = vpack.c.b16 %v286, %v278
    %v295 = vpack.c.b16 %v287, %v279
    %v296 = vpack.c.b16 %v288, %v280
    %vm305 = vcmask 130048
    %v307 = vsel %vm305, %v261, 0
    %v310 = vsel %vm305, %v262, 0
    %v313 = vsel %vm305, %v263, 0
    %v316 = vsel %vm305, %v264, 0
    %318 = vmatprep.subr.bf16.mxu0 0
    %319 = vmatpush1.bf16.msra.mxu0 0
    %320 = vmatprep.subr.bf16.mxu0 0
    %321 = vmatpush1.bf16.msra.mxu0 0
    %322 = vmatprep.subr.bf16.mxu0 0
    %323 = vmatpush1.bf16.msra.mxu0 0
    %324 = vmatprep.subr.bf16.mxu0 0
    %325 = vmatpush1.bf16.msra.mxu0 0
    %326 = vmatprep.subr.bf16.mxu0 0
    %327 = vmatpush1.bf16.msra.mxu0 0
    %328 = vmatprep.subr.bf16.mxu0 0
    %329 = vmatpush1.bf16.msra.mxu0 0
    %330 = vmatprep.subr.bf16.mxu0 0
    %331 = vmatpush1.bf16.msra.mxu0 0
    %332 = vmatprep.subr.bf16.mxu0 %v290
    %333 = vmatpush1.bf16.msra.mxu0 %v289
    %334 = vmatprep.subr.bf16.mxu0 0
    %335 = vmatpush2.bf16.msra.mxu0 0
    %336 = vmatprep.subr.bf16.mxu0 0
    %337 = vmatpush2.bf16.msra.mxu0 0
    %338 = vmatprep.subr.bf16.mxu0 0
    %339 = vmatpush2.bf16.msra.mxu0 0
    %340 = vmatprep.subr.bf16.mxu0 0
    %341 = vmatpush2.bf16.msra.mxu0 0
    %342 = vmatprep.subr.bf16.mxu0 0
    %343 = vmatpush2.bf16.msra.mxu0 0
    %344 = vmatprep.subr.bf16.mxu0 0
    %345 = vmatpush2.bf16.msra.mxu0 0
    %346 = vmatprep.subr.bf16.mxu0 0
    %347 = vmatpush2.bf16.msra.mxu0 0
    %348 = vmatprep.subr.bf16.mxu0 0
    %349 = vmatpush2.bf16.msra.mxu0 0
    %350 = vmatprep.mubr.bf16.mxu0 0
    %351 = vmatmul.mubr.bf16.gmra.mxu0 %v307
    %v352 = vpop.f32.mrf.mxu0
    %v353 = vadd.f32 %v208, %v352
    %v354 = vpop.f32.mrf.mxu0
    %v355 = vadd.f32 %v212, %v354
    %v356 = vpop.f32.mrf.mxu0
    %v357 = vadd.f32 %v208, %v356
    %v358 = vpop.f32.mrf.mxu0
    %v359 = vadd.f32 %v212, %v358
    %360 = vmatprep.mubr.bf16.mxu0 0
    %361 = vmatmul.mubr.bf16.gmra.mxu0 %v310
    %v362 = vpop.f32.mrf.mxu0
    %v363 = vadd.f32 %v208, %v362
    %v364 = vpop.f32.mrf.mxu0
    %v365 = vadd.f32 %v212, %v364
    %v366 = vpop.f32.mrf.mxu0
    %v367 = vadd.f32 %v208, %v366
    %v368 = vpop.f32.mrf.mxu0
    %v369 = vadd.f32 %v212, %v368
    %370 = vmatprep.mubr.bf16.mxu0 0
    %371 = vmatmul.mubr.bf16.gmra.mxu0 %v313
    %v372 = vpop.f32.mrf.mxu0
    %v373 = vadd.f32 %v208, %v372
    %v374 = vpop.f32.mrf.mxu0
    %v375 = vadd.f32 %v212, %v374
    %v376 = vpop.f32.mrf.mxu0
    %v377 = vadd.f32 %v208, %v376
    %v378 = vpop.f32.mrf.mxu0
    %v379 = vadd.f32 %v212, %v378
    %380 = vmatprep.mubr.bf16.mxu0 0
    %381 = vmatmul.mubr.bf16.gmra.mxu0 %v316
    %v382 = vpop.f32.mrf.mxu0
    %v383 = vadd.f32 %v208, %v382
    %v384 = vpop.f32.mrf.mxu0
    %v385 = vadd.f32 %v212, %v384
    %v386 = vpop.f32.mrf.mxu0
    %v387 = vadd.f32 %v208, %v386
    %v388 = vpop.f32.mrf.mxu0
    %v389 = vadd.f32 %v212, %v388
    %390 = vdwg.mxu0
    %391 = vmatprep.subr.bf16.mxu0 0
    %392 = vmatpush1.bf16.msra.mxu0 0
    %393 = vmatprep.subr.bf16.mxu0 0
    %394 = vmatpush1.bf16.msra.mxu0 0
    %395 = vmatprep.subr.bf16.mxu0 0
    %396 = vmatpush1.bf16.msra.mxu0 0
    %397 = vmatprep.subr.bf16.mxu0 0
    %398 = vmatpush1.bf16.msra.mxu0 0
    %399 = vmatprep.subr.bf16.mxu0 0
    %400 = vmatpush1.bf16.msra.mxu0 0
    %401 = vmatprep.subr.bf16.mxu0 0
    %402 = vmatpush1.bf16.msra.mxu0 0
    %403 = vmatprep.subr.bf16.mxu0 0
    %404 = vmatpush1.bf16.msra.mxu0 0
    %405 = vmatprep.subr.bf16.mxu0 %v292
    %406 = vmatpush1.bf16.msra.mxu0 %v291
    %407 = vmatprep.subr.bf16.mxu0 0
    %408 = vmatpush2.bf16.msra.mxu0 0
    %409 = vmatprep.subr.bf16.mxu0 0
    %410 = vmatpush2.bf16.msra.mxu0 0
    %411 = vmatprep.subr.bf16.mxu0 0
    %412 = vmatpush2.bf16.msra.mxu0 0
    %413 = vmatprep.subr.bf16.mxu0 0
    %414 = vmatpush2.bf16.msra.mxu0 0
    %415 = vmatprep.subr.bf16.mxu0 0
    %416 = vmatpush2.bf16.msra.mxu0 0
    %417 = vmatprep.subr.bf16.mxu0 0
    %418 = vmatpush2.bf16.msra.mxu0 0
    %419 = vmatprep.subr.bf16.mxu0 0
    %420 = vmatpush2.bf16.msra.mxu0 0
    %421 = vmatprep.subr.bf16.mxu0 0
    %422 = vmatpush2.bf16.msra.mxu0 0
    %423 = vmatprep.mubr.bf16.mxu0 0
    %424 = vmatmul.mubr.bf16.gmra.mxu0 %v307
    %v425 = vpop.f32.mrf.mxu0
    %v426 = vadd.f32 %v216, %v425
    %v427 = vpop.f32.mrf.mxu0
    %v428 = vadd.f32 %v220, %v427
    %v429 = vpop.f32.mrf.mxu0
    %v430 = vadd.f32 %v216, %v429
    %v431 = vpop.f32.mrf.mxu0
    %v432 = vadd.f32 %v220, %v431
    %433 = vmatprep.mubr.bf16.mxu0 0
    %434 = vmatmul.mubr.bf16.gmra.mxu0 %v310
    %v435 = vpop.f32.mrf.mxu0
    %v436 = vadd.f32 %v216, %v435
    %v437 = vpop.f32.mrf.mxu0
    %v438 = vadd.f32 %v220, %v437
    %v439 = vpop.f32.mrf.mxu0
    %v440 = vadd.f32 %v216, %v439
    %v441 = vpop.f32.mrf.mxu0
    %v442 = vadd.f32 %v220, %v441
    %443 = vmatprep.mubr.bf16.mxu0 0
    %444 = vmatmul.mubr.bf16.gmra.mxu0 %v313
    %v445 = vpop.f32.mrf.mxu0
    %v446 = vadd.f32 %v216, %v445
    %v447 = vpop.f32.mrf.mxu0
    %v448 = vadd.f32 %v220, %v447
    %v449 = vpop.f32.mrf.mxu0
    %v450 = vadd.f32 %v216, %v449
    %v451 = vpop.f32.mrf.mxu0
    %v452 = vadd.f32 %v220, %v451
    %453 = vmatprep.mubr.bf16.mxu0 0
    %454 = vmatmul.mubr.bf16.gmra.mxu0 %v316
    %v455 = vpop.f32.mrf.mxu0
    %v456 = vadd.f32 %v216, %v455
    %v457 = vpop.f32.mrf.mxu0
    %v458 = vadd.f32 %v220, %v457
    %v459 = vpop.f32.mrf.mxu0
    %v460 = vadd.f32 %v216, %v459
    %v461 = vpop.f32.mrf.mxu0
    %v462 = vadd.f32 %v220, %v461
    %463 = vdwg.mxu0
    %464 = vmatprep.subr.bf16.mxu0 0
    %465 = vmatpush1.bf16.msra.mxu0 0
    %466 = vmatprep.subr.bf16.mxu0 0
    %467 = vmatpush1.bf16.msra.mxu0 0
    %468 = vmatprep.subr.bf16.mxu0 0
    %469 = vmatpush1.bf16.msra.mxu0 0
    %470 = vmatprep.subr.bf16.mxu0 0
    %471 = vmatpush1.bf16.msra.mxu0 0
    %472 = vmatprep.subr.bf16.mxu0 0
    %473 = vmatpush1.bf16.msra.mxu0 0
    %474 = vmatprep.subr.bf16.mxu0 0
    %475 = vmatpush1.bf16.msra.mxu0 0
    %476 = vmatprep.subr.bf16.mxu0 0
    %477 = vmatpush1.bf16.msra.mxu0 0
    %478 = vmatprep.subr.bf16.mxu0 %v294
    %479 = vmatpush1.bf16.msra.mxu0 %v293
    %480 = vmatprep.subr.bf16.mxu0 0
    %481 = vmatpush2.bf16.msra.mxu0 0
    %482 = vmatprep.subr.bf16.mxu0 0
    %483 = vmatpush2.bf16.msra.mxu0 0
    %484 = vmatprep.subr.bf16.mxu0 0
    %485 = vmatpush2.bf16.msra.mxu0 0
    %486 = vmatprep.subr.bf16.mxu0 0
    %487 = vmatpush2.bf16.msra.mxu0 0
    %488 = vmatprep.subr.bf16.mxu0 0
    %489 = vmatpush2.bf16.msra.mxu0 0
    %490 = vmatprep.subr.bf16.mxu0 0
    %491 = vmatpush2.bf16.msra.mxu0 0
    %492 = vmatprep.subr.bf16.mxu0 0
    %493 = vmatpush2.bf16.msra.mxu0 0
    %494 = vmatprep.subr.bf16.mxu0 0
    %495 = vmatpush2.bf16.msra.mxu0 0
    %496 = vmatprep.mubr.bf16.mxu0 0
    %497 = vmatmul.mubr.bf16.gmra.mxu0 %v307
    %v498 = vpop.f32.mrf.mxu0
    %v499 = vadd.f32 %v224, %v498
    %v500 = vpop.f32.mrf.mxu0
    %v501 = vadd.f32 %v228, %v500
    %v502 = vpop.f32.mrf.mxu0
    %v503 = vadd.f32 %v224, %v502
    %v504 = vpop.f32.mrf.mxu0
    %v505 = vadd.f32 %v228, %v504
    %506 = vmatprep.mubr.bf16.mxu0 0
    %507 = vmatmul.mubr.bf16.gmra.mxu0 %v310
    %v508 = vpop.f32.mrf.mxu0
    %v509 = vadd.f32 %v224, %v508
    %v510 = vpop.f32.mrf.mxu0
    %v511 = vadd.f32 %v228, %v510
    %v512 = vpop.f32.mrf.mxu0
    %v513 = vadd.f32 %v224, %v512
    %v514 = vpop.f32.mrf.mxu0
    %v515 = vadd.f32 %v228, %v514
    %516 = vmatprep.mubr.bf16.mxu0 0
    %517 = vmatmul.mubr.bf16.gmra.mxu0 %v313
    %v518 = vpop.f32.mrf.mxu0
    %v519 = vadd.f32 %v224, %v518
    %v520 = vpop.f32.mrf.mxu0
    %v521 = vadd.f32 %v228, %v520
    %v522 = vpop.f32.mrf.mxu0
    %v523 = vadd.f32 %v224, %v522
    %v524 = vpop.f32.mrf.mxu0
    %v525 = vadd.f32 %v228, %v524
    %526 = vmatprep.mubr.bf16.mxu0 0
    %527 = vmatmul.mubr.bf16.gmra.mxu0 %v316
    %v528 = vpop.f32.mrf.mxu0
    %v529 = vadd.f32 %v224, %v528
    %v530 = vpop.f32.mrf.mxu0
    %v531 = vadd.f32 %v228, %v530
    %v532 = vpop.f32.mrf.mxu0
    %v533 = vadd.f32 %v224, %v532
    %v534 = vpop.f32.mrf.mxu0
    %v535 = vadd.f32 %v228, %v534
    %536 = vdwg.mxu0
    %537 = vmatprep.subr.bf16.mxu0 0
    %538 = vmatpush1.bf16.msra.mxu0 0
    %539 = vmatprep.subr.bf16.mxu0 0
    %540 = vmatpush1.bf16.msra.mxu0 0
    %541 = vmatprep.subr.bf16.mxu0 0
    %542 = vmatpush1.bf16.msra.mxu0 0
    %543 = vmatprep.subr.bf16.mxu0 0
    %544 = vmatpush1.bf16.msra.mxu0 0
    %545 = vmatprep.subr.bf16.mxu0 0
    %546 = vmatpush1.bf16.msra.mxu0 0
    %547 = vmatprep.subr.bf16.mxu0 0
    %548 = vmatpush1.bf16.msra.mxu0 0
    %549 = vmatprep.subr.bf16.mxu0 0
    %550 = vmatpush1.bf16.msra.mxu0 0
    %551 = vmatprep.subr.bf16.mxu0 %v296
    %552 = vmatpush1.bf16.msra.mxu0 %v295
    %553 = vmatprep.subr.bf16.mxu0 0
    %554 = vmatpush2.bf16.msra.mxu0 0
    %555 = vmatprep.subr.bf16.mxu0 0
    %556 = vmatpush2.bf16.msra.mxu0 0
    %557 = vmatprep.subr.bf16.mxu0 0
    %558 = vmatpush2.bf16.msra.mxu0 0
    %559 = vmatprep.subr.bf16.mxu0 0
    %560 = vmatpush2.bf16.msra.mxu0 0
    %561 = vmatprep.subr.bf16.mxu0 0
    %562 = vmatpush2.bf16.msra.mxu0 0
    %563 = vmatprep.subr.bf16.mxu0 0
    %564 = vmatpush2.bf16.msra.mxu0 0
    %565 = vmatprep.subr.bf16.mxu0 0
    %566 = vmatpush2.bf16.msra.mxu0 0
    %567 = vmatprep.subr.bf16.mxu0 0
    %568 = vmatpush2.bf16.msra.mxu0 0
    %569 = vmatprep.mubr.bf16.mxu0 0
    %570 = vmatmul.mubr.bf16.gmra.mxu0 %v307
    %v571 = vpop.f32.mrf.mxu0
    %v572 = vadd.f32 %v232, %v571
    %v573 = vpop.f32.mrf.mxu0
    %v574 = vadd.f32 %v236, %v573
    %v575 = vpop.f32.mrf.mxu0
    %v576 = vadd.f32 %v232, %v575
    %v577 = vpop.f32.mrf.mxu0
    %v578 = vadd.f32 %v236, %v577
    %579 = vmatprep.mubr.bf16.mxu0 0
    %580 = vmatmul.mubr.bf16.gmra.mxu0 %v310
    %v581 = vpop.f32.mrf.mxu0
    %v582 = vadd.f32 %v232, %v581
    %v583 = vpop.f32.mrf.mxu0
    %v584 = vadd.f32 %v236, %v583
    %v585 = vpop.f32.mrf.mxu0
    %v586 = vadd.f32 %v232, %v585
    %v587 = vpop.f32.mrf.mxu0
    %v588 = vadd.f32 %v236, %v587
    %589 = vmatprep.mubr.bf16.mxu0 0
    %590 = vmatmul.mubr.bf16.gmra.mxu0 %v313
    %v591 = vpop.f32.mrf.mxu0
    %v592 = vadd.f32 %v232, %v591
    %v593 = vpop.f32.mrf.mxu0
    %v594 = vadd.f32 %v236, %v593
    %v595 = vpop.f32.mrf.mxu0
    %v596 = vadd.f32 %v232, %v595
    %v597 = vpop.f32.mrf.mxu0
    %v598 = vadd.f32 %v236, %v597
    %599 = vmatprep.mubr.bf16.mxu0 0
    %600 = vmatmul.mubr.bf16.gmra.mxu0 %v316
    %v601 = vpop.f32.mrf.mxu0
    %v602 = vadd.f32 %v232, %v601
    %v603 = vpop.f32.mrf.mxu0
    %v604 = vadd.f32 %v236, %v603
    %v605 = vpop.f32.mrf.mxu0
    %v606 = vadd.f32 %v232, %v605
    %v607 = vpop.f32.mrf.mxu0
    %v608 = vadd.f32 %v236, %v607
    %609 = vdwg.mxu0
    %610 = vst [vmem:[#allocation3] sm:$0xff] %v353
    %611 = vst [vmem:[#allocation3 + $0x8] sm:$0xff] %v355
    %612 = vst [vmem:[#allocation3 + $0x10] sm:$0xff] %v426
    %613 = vst [vmem:[#allocation3 + $0x18] sm:$0xff] %v428
    %614 = vst [vmem:[#allocation3 + $0x20] sm:$0xff] %v499
    %615 = vst [vmem:[#allocation3 + $0x28] sm:$0xff] %v501
    %616 = vst [vmem:[#allocation3 + $0x30] sm:$0xff] %v572
    %617 = vst [vmem:[#allocation3 + $0x38] sm:$0xff] %v574
    %618 = vst [vmem:[#allocation3 + $0x40] sm:$0xff] %v357
    %619 = vst [vmem:[#allocation3 + $0x48] sm:$0xff] %v359
    %620 = vst [vmem:[#allocation3 + $0x50] sm:$0xff] %v430
    %621 = vst [vmem:[#allocation3 + $0x58] sm:$0xff] %v432
    %622 = vst [vmem:[#allocation3 + $0x60] sm:$0xff] %v503
    %623 = vst [vmem:[#allocation3 + $0x68] sm:$0xff] %v505
    %624 = vst [vmem:[#allocation3 + $0x70] sm:$0xff] %v576
    %625 = vst [vmem:[#allocation3 + $0x78] sm:$0xff] %v578
    %626 = vst [vmem:[#allocation3 + $0x80] sm:$0xff] %v363
    %627 = vst [vmem:[#allocation3 + $0x88] sm:$0xff] %v365
    %628 = vst [vmem:[#allocation3 + $0x90] sm:$0xff] %v436
    %629 = vst [vmem:[#allocation3 + $0x98] sm:$0xff] %v438
    %630 = vst [vmem:[#allocation3 + $0xa0] sm:$0xff] %v509
    %631 = vst [vmem:[#allocation3 + $0xa8] sm:$0xff] %v511
    %632 = vst [vmem:[#allocation3 + $0xb0] sm:$0xff] %v582
    %633 = vst [vmem:[#allocation3 + $0xb8] sm:$0xff] %v584
    %634 = vst [vmem:[#allocation3 + $0xc0] sm:$0xff] %v367
    %635 = vst [vmem:[#allocation3 + $0xc8] sm:$0xff] %v369
    %636 = vst [vmem:[#allocation3 + $0xd0] sm:$0xff] %v440
    %637 = vst [vmem:[#allocation3 + $0xd8] sm:$0xff] %v442
    %638 = vst [vmem:[#allocation3 + $0xe0] sm:$0xff] %v513
    %639 = vst [vmem:[#allocation3 + $0xe8] sm:$0xff] %v515
    %640 = vst [vmem:[#allocation3 + $0xf0] sm:$0xff] %v586
    %641 = vst [vmem:[#allocation3 + $0xf8] sm:$0xff] %v588
    %642 = vst [vmem:[#allocation3 + $0x100] sm:$0xff] %v373
    %643 = vst [vmem:[#allocation3 + $0x108] sm:$0xff] %v375
    %644 = vst [vmem:[#allocation3 + $0x110] sm:$0xff] %v446
    %645 = vst [vmem:[#allocation3 + $0x118] sm:$0xff] %v448
    %646 = vst [vmem:[#allocation3 + $0x120] sm:$0xff] %v519
    %647 = vst [vmem:[#allocation3 + $0x128] sm:$0xff] %v521
    %648 = vst [vmem:[#allocation3 + $0x130] sm:$0xff] %v592
    %649 = vst [vmem:[#allocation3 + $0x138] sm:$0xff] %v594
    %650 = vst [vmem:[#allocation3 + $0x140] sm:$0xff] %v377
    %651 = vst [vmem:[#allocation3 + $0x148] sm:$0xff] %v379
    %652 = vst [vmem:[#allocation3 + $0x150] sm:$0xff] %v450
    %653 = vst [vmem:[#allocation3 + $0x158] sm:$0xff] %v452
    %654 = vst [vmem:[#allocation3 + $0x160] sm:$0xff] %v523
    %655 = vst [vmem:[#allocation3 + $0x168] sm:$0xff] %v525
    %656 = vst [vmem:[#allocation3 + $0x170] sm:$0xff] %v596
    %657 = vst [vmem:[#allocation3 + $0x178] sm:$0xff] %v598
    %658 = vst [vmem:[#allocation3 + $0x180] sm:$0xff] %v383
    %659 = vst [vmem:[#allocation3 + $0x188] sm:$0xff] %v385
    %660 = vst [vmem:[#allocation3 + $0x190] sm:$0xff] %v456
    %661 = vst [vmem:[#allocation3 + $0x198] sm:$0xff] %v458
    %662 = vst [vmem:[#allocation3 + $0x1a0] sm:$0xff] %v529
    %663 = vst [vmem:[#allocation3 + $0x1a8] sm:$0xff] %v531
    %664 = vst [vmem:[#allocation3 + $0x1b0] sm:$0xff] %v602
    %665 = vst [vmem:[#allocation3 + $0x1b8] sm:$0xff] %v604
    %666 = vst [vmem:[#allocation3 + $0x1c0] sm:$0xff] %v387
    %667 = vst [vmem:[#allocation3 + $0x1c8] sm:$0xff] %v389
    %668 = vst [vmem:[#allocation3 + $0x1d0] sm:$0xff] %v460
    %669 = vst [vmem:[#allocation3 + $0x1d8] sm:$0xff] %v462
    %670 = vst [vmem:[#allocation3 + $0x1e0] sm:$0xff] %v533
    %671 = vst [vmem:[#allocation3 + $0x1e8] sm:$0xff] %v535
    %672 = vst [vmem:[#allocation3 + $0x1f0] sm:$0xff] %v606
    %673 = vst [vmem:[#allocation3 + $0x1f8] sm:$0xff] %v608
    %v674 = vld [vmem:[#allocation3] sm:$0xff]
    %v675 = vld [vmem:[#allocation3 + $0x8] sm:$0xff]
    %v676 = vld [vmem:[#allocation3 + $0x10] sm:$0xff]
    %v677 = vld [vmem:[#allocation3 + $0x18] sm:$0xff]
    %v678 = vld [vmem:[#allocation3 + $0x20] sm:$0xff]
    %v679 = vld [vmem:[#allocation3 + $0x28] sm:$0xff]
    %v680 = vld [vmem:[#allocation3 + $0x30] sm:$0xff]
    %v681 = vld [vmem:[#allocation3 + $0x38] sm:$0xff]
    %v810 = vunpack.c.l.b16 %v59
    %v811 = vunpack.c.h.b16 %v59
    %v812 = vunpack.c.l.b16 %v60
    %v813 = vunpack.c.h.b16 %v60
    %v814 = vunpack.c.l.b16 %v61
    %v815 = vunpack.c.h.b16 %v61
    %v816 = vunpack.c.l.b16 %v62
    %v817 = vunpack.c.h.b16 %v62
    %v818 = vunpack.c.l.b16 %v63
    %v819 = vunpack.c.h.b16 %v63
    %v820 = vunpack.c.l.b16 %v64
    %v821 = vunpack.c.h.b16 %v64
    %v822 = vunpack.c.l.b16 %v65
    %v823 = vunpack.c.h.b16 %v65
    %v824 = vunpack.c.l.b16 %v66
    %v825 = vunpack.c.h.b16 %v66
    %v826 = vunpack.c.l.b16 %v67
    %v827 = vunpack.c.h.b16 %v67
    %v828 = vunpack.c.l.b16 %v68
    %v829 = vunpack.c.h.b16 %v68
    %v830 = vunpack.c.l.b16 %v69
    %v831 = vunpack.c.h.b16 %v69
    %v832 = vunpack.c.l.b16 %v70
    %v833 = vunpack.c.h.b16 %v70
    %v834 = vunpack.c.l.b16 %v71
    %v835 = vunpack.c.h.b16 %v71
    %v836 = vunpack.c.l.b16 %v72
    %v837 = vunpack.c.h.b16 %v72
    %v838 = vunpack.c.l.b16 %v73
    %v839 = vunpack.c.h.b16 %v73
    %v840 = vunpack.c.l.b16 %v74
    %v841 = vunpack.c.h.b16 %v74
    %v842 = vunpack.c.l.b16 %v75
    %v843 = vunpack.c.h.b16 %v75
    %v844 = vunpack.c.l.b16 %v76
    %v845 = vunpack.c.h.b16 %v76
    %v846 = vunpack.c.l.b16 %v77
    %v847 = vunpack.c.h.b16 %v77
    %v848 = vunpack.c.l.b16 %v78
    %v849 = vunpack.c.h.b16 %v78
    %v850 = vunpack.c.l.b16 %v79
    %v851 = vunpack.c.h.b16 %v79
    %v852 = vunpack.c.l.b16 %v80
    %v853 = vunpack.c.h.b16 %v80
    %v854 = vunpack.c.l.b16 %v81
    %v855 = vunpack.c.h.b16 %v81
    %v856 = vunpack.c.l.b16 %v82
    %v857 = vunpack.c.h.b16 %v82
    %v858 = vunpack.c.l.b16 %v83
    %v859 = vunpack.c.h.b16 %v83
    %v860 = vunpack.c.l.b16 %v84
    %v861 = vunpack.c.h.b16 %v84
    %v862 = vunpack.c.l.b16 %v85
    %v863 = vunpack.c.h.b16 %v85
    %v864 = vunpack.c.l.b16 %v86
    %v865 = vunpack.c.h.b16 %v86
    %v866 = vunpack.c.l.b16 %v87
    %v867 = vunpack.c.h.b16 %v87
    %v868 = vunpack.c.l.b16 %v88
    %v869 = vunpack.c.h.b16 %v88
    %v870 = vunpack.c.l.b16 %v89
    %v871 = vunpack.c.h.b16 %v89
    %v872 = vunpack.c.l.b16 %v90
    %v873 = vunpack.c.h.b16 %v90
    %v874 = vunpack.c.l.b16 %v91
    %v875 = vunpack.c.h.b16 %v91
    %v876 = vunpack.c.l.b16 %v92
    %v877 = vunpack.c.h.b16 %v92
    %v878 = vunpack.c.l.b16 %v93
    %v879 = vunpack.c.h.b16 %v93
    %v880 = vunpack.c.l.b16 %v94
    %v881 = vunpack.c.h.b16 %v94
    %v882 = vunpack.c.l.b16 %v95
    %v883 = vunpack.c.h.b16 %v95
    %v884 = vunpack.c.l.b16 %v96
    %v885 = vunpack.c.h.b16 %v96
    %v886 = vunpack.c.l.b16 %v97
    %v887 = vunpack.c.h.b16 %v97
    %v888 = vunpack.c.l.b16 %v98
    %v889 = vunpack.c.h.b16 %v98
    %v890 = vunpack.c.l.b16 %v99
    %v891 = vunpack.c.h.b16 %v99
    %v892 = vunpack.c.l.b16 %v100
    %v893 = vunpack.c.h.b16 %v100
    %v894 = vunpack.c.l.b16 %v101
    %v895 = vunpack.c.h.b16 %v101
    %v896 = vunpack.c.l.b16 %v102
    %v897 = vunpack.c.h.b16 %v102
    %v898 = vunpack.c.l.b16 %v103
    %v899 = vunpack.c.h.b16 %v103
    %v900 = vunpack.c.l.b16 %v104
    %v901 = vunpack.c.h.b16 %v104
    %v902 = vunpack.c.l.b16 %v105
    %v903 = vunpack.c.h.b16 %v105
    %v904 = vunpack.c.l.b16 %v106
    %v905 = vunpack.c.h.b16 %v106
    %v906 = vunpack.c.l.b16 %v107
    %v907 = vunpack.c.h.b16 %v107
    %v908 = vunpack.c.l.b16 %v108
    %v909 = vunpack.c.h.b16 %v108
    %v910 = vunpack.c.l.b16 %v109
    %v911 = vunpack.c.h.b16 %v109
    %v912 = vunpack.c.l.b16 %v110
    %v913 = vunpack.c.h.b16 %v110
    %v914 = vunpack.c.l.b16 %v111
    %v915 = vunpack.c.h.b16 %v111
    %v916 = vunpack.c.l.b16 %v112
    %v917 = vunpack.c.h.b16 %v112
    %v918 = vunpack.c.l.b16 %v113
    %v919 = vunpack.c.h.b16 %v113
    %v920 = vunpack.c.l.b16 %v114
    %v921 = vunpack.c.h.b16 %v114
    %v922 = vunpack.c.l.b16 %v115
    %v923 = vunpack.c.h.b16 %v115
    %v924 = vunpack.c.l.b16 %v116
    %v925 = vunpack.c.h.b16 %v116
    %v926 = vunpack.c.l.b16 %v117
    %v927 = vunpack.c.h.b16 %v117
    %v928 = vunpack.c.l.b16 %v118
    %v929 = vunpack.c.h.b16 %v118
    %v930 = vunpack.c.l.b16 %v119
    %v931 = vunpack.c.h.b16 %v119
    %v932 = vunpack.c.l.b16 %v120
    %v933 = vunpack.c.h.b16 %v120
    %v934 = vunpack.c.l.b16 %v121
    %v935 = vunpack.c.h.b16 %v121
    %v936 = vunpack.c.l.b16 %v122
    %v937 = vunpack.c.h.b16 %v122
    %v938 = vunpack.c.l.b16 %v123
    %v939 = vunpack.c.h.b16 %v123
    %v940 = vunpack.c.l.b16 %v124
    %v941 = vunpack.c.h.b16 %v124
    %v942 = vunpack.c.l.b16 %v125
    %v943 = vunpack.c.h.b16 %v125
    %v944 = vunpack.c.l.b16 %v126
    %v945 = vunpack.c.h.b16 %v126
    %v946 = vunpack.c.l.b16 %v127
    %v947 = vunpack.c.h.b16 %v127
    %v948 = vunpack.c.l.b16 %v128
    %v949 = vunpack.c.h.b16 %v128
    %v950 = vunpack.c.l.b16 %v129
    %v951 = vunpack.c.h.b16 %v129
    %v952 = vunpack.c.l.b16 %v130
    %v953 = vunpack.c.h.b16 %v130
    %v954 = vunpack.c.l.b16 %v131
    %v955 = vunpack.c.h.b16 %v131
    %v956 = vunpack.c.l.b16 %v132
    %v957 = vunpack.c.h.b16 %v132
    %v958 = vunpack.c.l.b16 %v133
    %v959 = vunpack.c.h.b16 %v133
    %v960 = vunpack.c.l.b16 %v134
    %v961 = vunpack.c.h.b16 %v134
    %v962 = vunpack.c.l.b16 %v135
    %v963 = vunpack.c.h.b16 %v135
    %v964 = vunpack.c.l.b16 %v136
    %v965 = vunpack.c.h.b16 %v136
    %v966 = vunpack.c.l.b16 %v137
    %v967 = vunpack.c.h.b16 %v137
    %v968 = vunpack.c.l.b16 %v138
    %v969 = vunpack.c.h.b16 %v138
    %v970 = vunpack.c.l.b16 %v139
    %v971 = vunpack.c.h.b16 %v139
    %v972 = vunpack.c.l.b16 %v140
    %v973 = vunpack.c.h.b16 %v140
    %v974 = vunpack.c.l.b16 %v141
    %v975 = vunpack.c.h.b16 %v141
    %v976 = vunpack.c.l.b16 %v142
    %v977 = vunpack.c.h.b16 %v142
    %v978 = vunpack.c.l.b16 %v143
    %v979 = vunpack.c.h.b16 %v143
    %v980 = vunpack.c.l.b16 %v144
    %v981 = vunpack.c.h.b16 %v144
    %v982 = vunpack.c.l.b16 %v145
    %v983 = vunpack.c.h.b16 %v145
    %v984 = vunpack.c.l.b16 %v146
    %v985 = vunpack.c.h.b16 %v146
    %v986 = vunpack.c.l.b16 %v147
    %v987 = vunpack.c.h.b16 %v147
    %v988 = vunpack.c.l.b16 %v148
    %v989 = vunpack.c.h.b16 %v148
    %v990 = vunpack.c.l.b16 %v149
    %v991 = vunpack.c.h.b16 %v149
    %v992 = vunpack.c.l.b16 %v150
    %v993 = vunpack.c.h.b16 %v150
    %v994 = vunpack.c.l.b16 %v151
    %v995 = vunpack.c.h.b16 %v151
    %v996 = vunpack.c.l.b16 %v152
    %v997 = vunpack.c.h.b16 %v152
    %v998 = vunpack.c.l.b16 %v153
    %v999 = vunpack.c.h.b16 %v153
    %v1000 = vunpack.c.l.b16 %v154
    %v1001 = vunpack.c.h.b16 %v154
    %v1002 = vunpack.c.l.b16 %v155
    %v1003 = vunpack.c.h.b16 %v155
    %v1004 = vunpack.c.l.b16 %v156
    %v1005 = vunpack.c.h.b16 %v156
    %v1006 = vunpack.c.l.b16 %v157
    %v1007 = vunpack.c.h.b16 %v157
    %v1008 = vunpack.c.l.b16 %v158
    %v1009 = vunpack.c.h.b16 %v158
    %v1010 = vunpack.c.l.b16 %v159
    %v1011 = vunpack.c.h.b16 %v159
    %v1012 = vunpack.c.l.b16 %v160
    %v1013 = vunpack.c.h.b16 %v160
    %v1014 = vunpack.c.l.b16 %v161
    %v1015 = vunpack.c.h.b16 %v161
    %v1016 = vunpack.c.l.b16 %v162
    %v1017 = vunpack.c.h.b16 %v162
    %v1018 = vunpack.c.l.b16 %v163
    %v1019 = vunpack.c.h.b16 %v163
    %v1020 = vunpack.c.l.b16 %v164
    %v1021 = vunpack.c.h.b16 %v164
    %v1022 = vunpack.c.l.b16 %v165
    %v1023 = vunpack.c.h.b16 %v165
    %v1024 = vunpack.c.l.b16 %v166
    %v1025 = vunpack.c.h.b16 %v166
    %v1026 = vunpack.c.l.b16 %v167
    %v1027 = vunpack.c.h.b16 %v167
    %v1028 = vunpack.c.l.b16 %v168
    %v1029 = vunpack.c.h.b16 %v168
    %v1030 = vunpack.c.l.b16 %v169
    %v1031 = vunpack.c.h.b16 %v169
    %v1032 = vunpack.c.l.b16 %v170
    %v1033 = vunpack.c.h.b16 %v170
    %v1034 = vunpack.c.l.b16 %v171
    %v1035 = vunpack.c.h.b16 %v171
    %v1036 = vunpack.c.l.b16 %v172
    %v1037 = vunpack.c.h.b16 %v172
    %v1038 = vunpack.c.l.b16 %v173
    %v1039 = vunpack.c.h.b16 %v173
    %v1040 = vunpack.c.l.b16 %v174
    %v1041 = vunpack.c.h.b16 %v174
    %v1042 = vunpack.c.l.b16 %v175
    %v1043 = vunpack.c.h.b16 %v175
    %v1044 = vunpack.c.l.b16 %v176
    %v1045 = vunpack.c.h.b16 %v176
    %v1046 = vunpack.c.l.b16 %v177
    %v1047 = vunpack.c.h.b16 %v177
    %v1048 = vunpack.c.l.b16 %v178
    %v1049 = vunpack.c.h.b16 %v178
    %v1050 = vunpack.c.l.b16 %v179
    %v1051 = vunpack.c.h.b16 %v179
    %v1052 = vunpack.c.l.b16 %v180
    %v1053 = vunpack.c.h.b16 %v180
    %v1054 = vunpack.c.l.b16 %v181
    %v1055 = vunpack.c.h.b16 %v181
    %v1056 = vunpack.c.l.b16 %v182
    %v1057 = vunpack.c.h.b16 %v182
    %v1058 = vunpack.c.l.b16 %v183
    %v1059 = vunpack.c.h.b16 %v183
    %v1060 = vunpack.c.l.b16 %v184
    %v1061 = vunpack.c.h.b16 %v184
    %v1062 = vunpack.c.l.b16 %v185
    %v1063 = vunpack.c.h.b16 %v185
    %v1064 = vunpack.c.l.b16 %v186
    %v1065 = vunpack.c.h.b16 %v186
    %v1066 = vpack.c.b16 %v818, %v810
    %v1067 = vpack.c.b16 %v819, %v811
    %v1068 = vpack.c.b16 %v820, %v812
    %v1069 = vpack.c.b16 %v821, %v813
    %v1070 = vpack.c.b16 %v822, %v814
    %v1071 = vpack.c.b16 %v823, %v815
    %v1072 = vpack.c.b16 %v824, %v816
    %v1073 = vpack.c.b16 %v825, %v817
    %v1074 = vpack.c.b16 %v834, %v826
    %v1075 = vpack.c.b16 %v835, %v827
    %v1076 = vpack.c.b16 %v836, %v828
    %v1077 = vpack.c.b16 %v837, %v829
    %v1078 = vpack.c.b16 %v838, %v830
    %v1079 = vpack.c.b16 %v839, %v831
    %v1080 = vpack.c.b16 %v840, %v832
    %v1081 = vpack.c.b16 %v841, %v833
    %v1082 = vpack.c.b16 %v850, %v842
    %v1083 = vpack.c.b16 %v851, %v843
    %v1084 = vpack.c.b16 %v852, %v844
    %v1085 = vpack.c.b16 %v853, %v845
    %v1086 = vpack.c.b16 %v854, %v846
    %v1087 = vpack.c.b16 %v855, %v847
    %v1088 = vpack.c.b16 %v856, %v848
    %v1089 = vpack.c.b16 %v857, %v849
    %v1090 = vpack.c.b16 %v866, %v858
    %v1091 = vpack.c.b16 %v867, %v859
    %v1092 = vpack.c.b16 %v868, %v860
    %v1093 = vpack.c.b16 %v869, %v861
    %v1094 = vpack.c.b16 %v870, %v862
    %v1095 = vpack.c.b16 %v871, %v863
    %v1096 = vpack.c.b16 %v872, %v864
    %v1097 = vpack.c.b16 %v873, %v865
    %v1098 = vpack.c.b16 %v882, %v874
    %v1099 = vpack.c.b16 %v883, %v875
    %v1100 = vpack.c.b16 %v884, %v876
    %v1101 = vpack.c.b16 %v885, %v877
    %v1102 = vpack.c.b16 %v886, %v878
    %v1103 = vpack.c.b16 %v887, %v879
    %v1104 = vpack.c.b16 %v888, %v880
    %v1105 = vpack.c.b16 %v889, %v881
    %v1106 = vpack.c.b16 %v898, %v890
    %v1107 = vpack.c.b16 %v899, %v891
    %v1108 = vpack.c.b16 %v900, %v892
    %v1109 = vpack.c.b16 %v901, %v893
    %v1110 = vpack.c.b16 %v902, %v894
    %v1111 = vpack.c.b16 %v903, %v895
    %v1112 = vpack.c.b16 %v904, %v896
    %v1113 = vpack.c.b16 %v905, %v897
    %v1114 = vpack.c.b16 %v914, %v906
    %v1115 = vpack.c.b16 %v915, %v907
    %v1116 = vpack.c.b16 %v916, %v908
    %v1117 = vpack.c.b16 %v917, %v909
    %v1118 = vpack.c.b16 %v918, %v910
    %v1119 = vpack.c.b16 %v919, %v911
    %v1120 = vpack.c.b16 %v920, %v912
    %v1121 = vpack.c.b16 %v921, %v913
    %v1122 = vpack.c.b16 %v930, %v922
    %v1123 = vpack.c.b16 %v931, %v923
    %v1124 = vpack.c.b16 %v932, %v924
    %v1125 = vpack.c.b16 %v933, %v925
    %v1126 = vpack.c.b16 %v934, %v926
    %v1127 = vpack.c.b16 %v935, %v927
    %v1128 = vpack.c.b16 %v936, %v928
    %v1129 = vpack.c.b16 %v937, %v929
    %v1130 = vpack.c.b16 %v946, %v938
    %v1131 = vpack.c.b16 %v947, %v939
    %v1132 = vpack.c.b16 %v948, %v940
    %v1133 = vpack.c.b16 %v949, %v941
    %v1134 = vpack.c.b16 %v950, %v942
    %v1135 = vpack.c.b16 %v951, %v943
    %v1136 = vpack.c.b16 %v952, %v944
    %v1137 = vpack.c.b16 %v953, %v945
    %v1138 = vpack.c.b16 %v962, %v954
    %v1139 = vpack.c.b16 %v963, %v955
    %v1140 = vpack.c.b16 %v964, %v956
    %v1141 = vpack.c.b16 %v965, %v957
    %v1142 = vpack.c.b16 %v966, %v958
    %v1143 = vpack.c.b16 %v967, %v959
    %v1144 = vpack.c.b16 %v968, %v960
    %v1145 = vpack.c.b16 %v969, %v961
    %v1146 = vpack.c.b16 %v978, %v970
    %v1147 = vpack.c.b16 %v979, %v971
    %v1148 = vpack.c.b16 %v980, %v972
    %v1149 = vpack.c.b16 %v981, %v973
    %v1150 = vpack.c.b16 %v982, %v974
    %v1151 = vpack.c.b16 %v983, %v975
    %v1152 = vpack.c.b16 %v984, %v976
    %v1153 = vpack.c.b16 %v985, %v977
    %v1154 = vpack.c.b16 %v994, %v986
    %v1155 = vpack.c.b16 %v995, %v987
    %v1156 = vpack.c.b16 %v996, %v988
    %v1157 = vpack.c.b16 %v997, %v989
    %v1158 = vpack.c.b16 %v998, %v990
    %v1159 = vpack.c.b16 %v999, %v991
    %v1160 = vpack.c.b16 %v1000, %v992
    %v1161 = vpack.c.b16 %v1001, %v993
    %v1162 = vpack.c.b16 %v1010, %v1002
    %v1163 = vpack.c.b16 %v1011, %v1003
    %v1164 = vpack.c.b16 %v1012, %v1004
    %v1165 = vpack.c.b16 %v1013, %v1005
    %v1166 = vpack.c.b16 %v1014, %v1006
    %v1167 = vpack.c.b16 %v1015, %v1007
    %v1168 = vpack.c.b16 %v1016, %v1008
    %v1169 = vpack.c.b16 %v1017, %v1009
    %v1170 = vpack.c.b16 %v1026, %v1018
    %v1171 = vpack.c.b16 %v1027, %v1019
    %v1172 = vpack.c.b16 %v1028, %v1020
    %v1173 = vpack.c.b16 %v1029, %v1021
    %v1174 = vpack.c.b16 %v1030, %v1022
    %v1175 = vpack.c.b16 %v1031, %v1023
    %v1176 = vpack.c.b16 %v1032, %v1024
    %v1177 = vpack.c.b16 %v1033, %v1025
    %v1178 = vpack.c.b16 %v1042, %v1034
    %v1179 = vpack.c.b16 %v1043, %v1035
    %v1180 = vpack.c.b16 %v1044, %v1036
    %v1181 = vpack.c.b16 %v1045, %v1037
    %v1182 = vpack.c.b16 %v1046, %v1038
    %v1183 = vpack.c.b16 %v1047, %v1039
    %v1184 = vpack.c.b16 %v1048, %v1040
    %v1185 = vpack.c.b16 %v1049, %v1041
    %v1186 = vpack.c.b16 %v1058, %v1050
    %v1187 = vpack.c.b16 %v1059, %v1051
    %v1188 = vpack.c.b16 %v1060, %v1052
    %v1189 = vpack.c.b16 %v1061, %v1053
    %v1190 = vpack.c.b16 %v1062, %v1054
    %v1191 = vpack.c.b16 %v1063, %v1055
    %v1192 = vpack.c.b16 %v1064, %v1056
    %v1193 = vpack.c.b16 %v1065, %v1057
    %1322 = vmatprep.subr.bf16.mxu0 %v1123
    %1323 = vmatpush1.bf16.msra.mxu0 %v1122
    %1324 = vmatprep.subr.bf16.mxu0 %v1115
    %1325 = vmatpush1.bf16.msra.mxu0 %v1114
    %1326 = vmatprep.subr.bf16.mxu0 %v1107
    %1327 = vmatpush1.bf16.msra.mxu0 %v1106
    %1328 = vmatprep.subr.bf16.mxu0 %v1099
    %1329 = vmatpush1.bf16.msra.mxu0 %v1098
    %1330 = vmatprep.subr.bf16.mxu0 %v1091
    %1331 = vmatpush1.bf16.msra.mxu0 %v1090
    %1332 = vmatprep.subr.bf16.mxu0 %v1083
    %1333 = vmatpush1.bf16.msra.mxu0 %v1082
    %1334 = vmatprep.subr.bf16.mxu0 %v1075
    %1335 = vmatpush1.bf16.msra.mxu0 %v1074
    %1336 = vmatprep.subr.bf16.mxu0 %v1067
    %1337 = vmatpush1.bf16.msra.mxu0 %v1066
    %1338 = vmatprep.subr.bf16.mxu0 %v1187
    %1339 = vmatpush2.bf16.msra.mxu0 %v1186
    %1340 = vmatprep.subr.bf16.mxu0 %v1179
    %1341 = vmatpush2.bf16.msra.mxu0 %v1178
    %1342 = vmatprep.subr.bf16.mxu0 %v1171
    %1343 = vmatpush2.bf16.msra.mxu0 %v1170
    %1344 = vmatprep.subr.bf16.mxu0 %v1163
    %1345 = vmatpush2.bf16.msra.mxu0 %v1162
    %1346 = vmatprep.subr.bf16.mxu0 %v1155
    %1347 = vmatpush2.bf16.msra.mxu0 %v1154
    %1348 = vmatprep.subr.bf16.mxu0 %v1147
    %1349 = vmatpush2.bf16.msra.mxu0 %v1146
    %1350 = vmatprep.subr.bf16.mxu0 %v1139
    %1351 = vmatpush2.bf16.msra.mxu0 %v1138
    %1352 = vmatprep.subr.bf16.mxu0 %v1131
    %1353 = vmatpush2.bf16.msra.mxu0 %v1130
    %1354 = vmatprep.mubr.bf16.mxu0 0
    %1355 = vmatmul.mubr.bf16.gmra.mxu0 0
    %v1356 = vpop.f32.mrf.mxu0
    %v1357 = vadd.f32 0.0, %v1356
    %v1358 = vpop.f32.mrf.mxu0
    %v1359 = vadd.f32 0.0, %v1358
    %v1360 = vpop.f32.mrf.mxu0
    %v1361 = vpop.f32.mrf.mxu0
    %1362 = vdwg.mxu0
    %1363 = vmatprep.subr.bf16.mxu0 %v1125
    %1364 = vmatpush1.bf16.msra.mxu0 %v1124
    %1365 = vmatprep.subr.bf16.mxu0 %v1117
    %1366 = vmatpush1.bf16.msra.mxu0 %v1116
    %1367 = vmatprep.subr.bf16.mxu0 %v1109
    %1368 = vmatpush1.bf16.msra.mxu0 %v1108
    %1369 = vmatprep.subr.bf16.mxu0 %v1101
    %1370 = vmatpush1.bf16.msra.mxu0 %v1100
    %1371 = vmatprep.subr.bf16.mxu0 %v1093
    %1372 = vmatpush1.bf16.msra.mxu0 %v1092
    %1373 = vmatprep.subr.bf16.mxu0 %v1085
    %1374 = vmatpush1.bf16.msra.mxu0 %v1084
    %1375 = vmatprep.subr.bf16.mxu0 %v1077
    %1376 = vmatpush1.bf16.msra.mxu0 %v1076
    %1377 = vmatprep.subr.bf16.mxu0 %v1069
    %1378 = vmatpush1.bf16.msra.mxu0 %v1068
    %1379 = vmatprep.subr.bf16.mxu0 %v1189
    %1380 = vmatpush2.bf16.msra.mxu0 %v1188
    %1381 = vmatprep.subr.bf16.mxu0 %v1181
    %1382 = vmatpush2.bf16.msra.mxu0 %v1180
    %1383 = vmatprep.subr.bf16.mxu0 %v1173
    %1384 = vmatpush2.bf16.msra.mxu0 %v1172
    %1385 = vmatprep.subr.bf16.mxu0 %v1165
    %1386 = vmatpush2.bf16.msra.mxu0 %v1164
    %1387 = vmatprep.subr.bf16.mxu0 %v1157
    %1388 = vmatpush2.bf16.msra.mxu0 %v1156
    %1389 = vmatprep.subr.bf16.mxu0 %v1149
    %1390 = vmatpush2.bf16.msra.mxu0 %v1148
    %1391 = vmatprep.subr.bf16.mxu0 %v1141
    %1392 = vmatpush2.bf16.msra.mxu0 %v1140
    %1393 = vmatprep.subr.bf16.mxu0 %v1133
    %1394 = vmatpush2.bf16.msra.mxu0 %v1132
    %1395 = vmatprep.mubr.bf16.mxu0 0
    %1396 = vmatmul.mubr.bf16.gmra.mxu0 0
    %v1397 = vpop.f32.mrf.mxu0
    %v1398 = vadd.f32 0.0, %v1397
    %v1399 = vpop.f32.mrf.mxu0
    %v1400 = vadd.f32 0.0, %v1399
    %v1401 = vpop.f32.mrf.mxu0
    %v1402 = vpop.f32.mrf.mxu0
    %1403 = vdwg.mxu0
    %1404 = vmatprep.subr.bf16.mxu0 %v1127
    %1405 = vmatpush1.bf16.msra.mxu0 %v1126
    %1406 = vmatprep.subr.bf16.mxu0 %v1119
    %1407 = vmatpush1.bf16.msra.mxu0 %v1118
    %1408 = vmatprep.subr.bf16.mxu0 %v1111
    %1409 = vmatpush1.bf16.msra.mxu0 %v1110
    %1410 = vmatprep.subr.bf16.mxu0 %v1103
    %1411 = vmatpush1.bf16.msra.mxu0 %v1102
    %1412 = vmatprep.subr.bf16.mxu0 %v1095
    %1413 = vmatpush1.bf16.msra.mxu0 %v1094
    %1414 = vmatprep.subr.bf16.mxu0 %v1087
    %1415 = vmatpush1.bf16.msra.mxu0 %v1086
    %1416 = vmatprep.subr.bf16.mxu0 %v1079
    %1417 = vmatpush1.bf16.msra.mxu0 %v1078
    %1418 = vmatprep.subr.bf16.mxu0 %v1071
    %1419 = vmatpush1.bf16.msra.mxu0 %v1070
    %1420 = vmatprep.subr.bf16.mxu0 %v1191
    %1421 = vmatpush2.bf16.msra.mxu0 %v1190
    %1422 = vmatprep.subr.bf16.mxu0 %v1183
    %1423 = vmatpush2.bf16.msra.mxu0 %v1182
    %1424 = vmatprep.subr.bf16.mxu0 %v1175
    %1425 = vmatpush2.bf16.msra.mxu0 %v1174
    %1426 = vmatprep.subr.bf16.mxu0 %v1167
    %1427 = vmatpush2.bf16.msra.mxu0 %v1166
    %1428 = vmatprep.subr.bf16.mxu0 %v1159
    %1429 = vmatpush2.bf16.msra.mxu0 %v1158
    %1430 = vmatprep.subr.bf16.mxu0 %v1151
    %1431 = vmatpush2.bf16.msra.mxu0 %v1150
    %1432 = vmatprep.subr.bf16.mxu0 %v1143
    %1433 = vmatpush2.bf16.msra.mxu0 %v1142
    %1434 = vmatprep.subr.bf16.mxu0 %v1135
    %1435 = vmatpush2.bf16.msra.mxu0 %v1134
    %1436 = vmatprep.mubr.bf16.mxu0 0
    %1437 = vmatmul.mubr.bf16.gmra.mxu0 0
    %v1438 = vpop.f32.mrf.mxu0
    %v1439 = vadd.f32 0.0, %v1438
    %v1440 = vpop.f32.mrf.mxu0
    %v1441 = vadd.f32 0.0, %v1440
    %v1442 = vpop.f32.mrf.mxu0
    %v1443 = vpop.f32.mrf.mxu0
    %1444 = vdwg.mxu0
    %1445 = vmatprep.subr.bf16.mxu0 %v1129
    %1446 = vmatpush1.bf16.msra.mxu0 %v1128
    %1447 = vmatprep.subr.bf16.mxu0 %v1121
    %1448 = vmatpush1.bf16.msra.mxu0 %v1120
    %1449 = vmatprep.subr.bf16.mxu0 %v1113
    %1450 = vmatpush1.bf16.msra.mxu0 %v1112
    %1451 = vmatprep.subr.bf16.mxu0 %v1105
    %1452 = vmatpush1.bf16.msra.mxu0 %v1104
    %1453 = vmatprep.subr.bf16.mxu0 %v1097
    %1454 = vmatpush1.bf16.msra.mxu0 %v1096
    %1455 = vmatprep.subr.bf16.mxu0 %v1089
    %1456 = vmatpush1.bf16.msra.mxu0 %v1088
    %1457 = vmatprep.subr.bf16.mxu0 %v1081
    %1458 = vmatpush1.bf16.msra.mxu0 %v1080
    %1459 = vmatprep.subr.bf16.mxu0 %v1073
    %1460 = vmatpush1.bf16.msra.mxu0 %v1072
    %1461 = vmatprep.subr.bf16.mxu0 %v1193
    %1462 = vmatpush2.bf16.msra.mxu0 %v1192
    %1463 = vmatprep.subr.bf16.mxu0 %v1185
    %1464 = vmatpush2.bf16.msra.mxu0 %v1184
    %1465 = vmatprep.subr.bf16.mxu0 %v1177
    %1466 = vmatpush2.bf16.msra.mxu0 %v1176
    %1467 = vmatprep.subr.bf16.mxu0 %v1169
    %1468 = vmatpush2.bf16.msra.mxu0 %v1168
    %1469 = vmatprep.subr.bf16.mxu0 %v1161
    %1470 = vmatpush2.bf16.msra.mxu0 %v1160
    %1471 = vmatprep.subr.bf16.mxu0 %v1153
    %1472 = vmatpush2.bf16.msra.mxu0 %v1152
    %1473 = vmatprep.subr.bf16.mxu0 %v1145
    %1474 = vmatpush2.bf16.msra.mxu0 %v1144
    %1475 = vmatprep.subr.bf16.mxu0 %v1137
    %1476 = vmatpush2.bf16.msra.mxu0 %v1136
    %1477 = vmatprep.mubr.bf16.mxu0 0
    %1478 = vmatmul.mubr.bf16.gmra.mxu0 0
    %v1479 = vpop.f32.mrf.mxu0
    %v1480 = vadd.f32 0.0, %v1479
    %v1481 = vpop.f32.mrf.mxu0
    %v1482 = vadd.f32 0.0, %v1481
    %v1483 = vpop.f32.mrf.mxu0
    %v1484 = vpop.f32.mrf.mxu0
    %1485 = vdwg.mxu0
    %v1486 = vadd.f32 %v674, %v1357
    %v1487 = vadd.f32 %v675, %v1359
    %v1488 = vadd.f32 %v676, %v1398
    %v1489 = vadd.f32 %v677, %v1400
    %v1490 = vadd.f32 %v678, %v1439
    %v1491 = vadd.f32 %v679, %v1441
    %v1492 = vadd.f32 %v680, %v1480
    %v1493 = vadd.f32 %v681, %v1482
    %v1494 = vmul.f32 %v1486, 0.5
    %v1495 = vmul.f32 %v1487, 0.5
    %v1496 = vtanh.pop %v1494
    %v1497 = vtanh.pop %v1495
    %v1498 = vmul.f32 %v1496, 0.5
    %v1499 = vmul.f32 %v1497, 0.5
    %v1500 = vadd.f32 %v1498, 0.5
    %v1501 = vadd.f32 %v1499, 0.5
    %v1502 = vmul.f32 %v1488, 0.5
    %v1503 = vmul.f32 %v1489, 0.5
    %v1504 = vtanh.pop %v1502
    %v1505 = vtanh.pop %v1503
    %v1506 = vmul.f32 %v1504, 0.5
    %v1507 = vmul.f32 %v1505, 0.5
    %v1508 = vadd.f32 %v1506, 0.5
    %v1509 = vadd.f32 %v1507, 0.5
    %v1510 = vtanh.pop %v1490
    %v1511 = vtanh.pop %v1491
    %v1512 = vmul.f32 %v1492, 0.5
    %v1513 = vmul.f32 %v1493, 0.5
    %v1514 = vtanh.pop %v1512
    %v1515 = vtanh.pop %v1513
    %v1516 = vmul.f32 %v1514, 0.5
    %v1517 = vmul.f32 %v1515, 0.5
    %v1518 = vadd.f32 %v1516, 0.5
    %v1519 = vadd.f32 %v1517, 0.5
    %v1520 = vmul.f32 %v1508, 0.0
    %v1521 = vmul.f32 %v1509, 0.0
    %v1522 = vmul.f32 %v1500, %v1510
    %v1523 = vmul.f32 %v1501, %v1511
    %v1524 = vadd.f32 %v1520, %v1522
    %v1525 = vadd.f32 %v1521, %v1523
    %v1526 = vtanh.pop %v1524
    %v1527 = vtanh.pop %v1525
    %v1528 = vmul.f32 %v1518, %v1526
    %v1529 = vmul.f32 %v1519, %v1527
    %v1530 = vld [vmem:[#allocation3 + $0x40] sm:$0xff]
    %v1531 = vld [vmem:[#allocation3 + $0x48] sm:$0xff]
    %v1532 = vld [vmem:[#allocation3 + $0x50] sm:$0xff]
    %v1533 = vld [vmem:[#allocation3 + $0x58] sm:$0xff]
    %v1534 = vld [vmem:[#allocation3 + $0x60] sm:$0xff]
    %v1535 = vld [vmem:[#allocation3 + $0x68] sm:$0xff]
    %v1536 = vld [vmem:[#allocation3 + $0x70] sm:$0xff]
    %v1537 = vld [vmem:[#allocation3 + $0x78] sm:$0xff]
    %v1538 = vpack.c.bf16 %v1528, %v1528
    %v1539 = vpack.c.bf16 %v1529, %v1529
    %1540 = vmatprep.subr.bf16.mxu0 %v1123
    %1541 = vmatpush1.bf16.msra.mxu0 %v1122
    %1542 = vmatprep.subr.bf16.mxu0 %v1115
    %1543 = vmatpush1.bf16.msra.mxu0 %v1114
    %1544 = vmatprep.subr.bf16.mxu0 %v1107
    %1545 = vmatpush1.bf16.msra.mxu0 %v1106
    %1546 = vmatprep.subr.bf16.mxu0 %v1099
    %1547 = vmatpush1.bf16.msra.mxu0 %v1098
    %1548 = vmatprep.subr.bf16.mxu0 %v1091
    %1549 = vmatpush1.bf16.msra.mxu0 %v1090
    %1550 = vmatprep.subr.bf16.mxu0 %v1083
    %1551 = vmatpush1.bf16.msra.mxu0 %v1082
    %1552 = vmatprep.subr.bf16.mxu0 %v1075
    %1553 = vmatpush1.bf16.msra.mxu0 %v1074
    %1554 = vmatprep.subr.bf16.mxu0 %v1067
    %1555 = vmatpush1.bf16.msra.mxu0 %v1066
    %1556 = vmatprep.subr.bf16.mxu0 %v1187
    %1557 = vmatpush2.bf16.msra.mxu0 %v1186
    %1558 = vmatprep.subr.bf16.mxu0 %v1179
    %1559 = vmatpush2.bf16.msra.mxu0 %v1178
    %1560 = vmatprep.subr.bf16.mxu0 %v1171
    %1561 = vmatpush2.bf16.msra.mxu0 %v1170
    %1562 = vmatprep.subr.bf16.mxu0 %v1163
    %1563 = vmatpush2.bf16.msra.mxu0 %v1162
    %1564 = vmatprep.subr.bf16.mxu0 %v1155
    %1565 = vmatpush2.bf16.msra.mxu0 %v1154
    %1566 = vmatprep.subr.bf16.mxu0 %v1147
    %1567 = vmatpush2.bf16.msra.mxu0 %v1146
    %1568 = vmatprep.subr.bf16.mxu0 %v1139
    %1569 = vmatpush2.bf16.msra.mxu0 %v1138
    %1570 = vmatprep.subr.bf16.mxu0 %v1131
    %1571 = vmatpush2.bf16.msra.mxu0 %v1130
    %1572 = vmatprep.mubr.bf16.mxu0 %v1539
    %1573 = vmatmul.mubr.bf16.gmra.mxu0 %v1538
    %v1574 = vpop.f32.mrf.mxu0
    %v1575 = vadd.f32 0.0, %v1574
    %v1576 = vpop.f32.mrf.mxu0
    %v1577 = vadd.f32 0.0, %v1576
    %v1578 = vpop.f32.mrf.mxu0
    %v1579 = vpop.f32.mrf.mxu0
    %1580 = vdwg.mxu0
    %1581 = vmatprep.subr.bf16.mxu0 %v1125
    %1582 = vmatpush1.bf16.msra.mxu0 %v1124
    %1583 = vmatprep.subr.bf16.mxu0 %v1117
    %1584 = vmatpush1.bf16.msra.mxu0 %v1116
    %1585 = vmatprep.subr.bf16.mxu0 %v1109
    %1586 = vmatpush1.bf16.msra.mxu0 %v1108
    %1587 = vmatprep.subr.bf16.mxu0 %v1101
    %1588 = vmatpush1.bf16.msra.mxu0 %v1100
    %1589 = vmatprep.subr.bf16.mxu0 %v1093
    %1590 = vmatpush1.bf16.msra.mxu0 %v1092
    %1591 = vmatprep.subr.bf16.mxu0 %v1085
    %1592 = vmatpush1.bf16.msra.mxu0 %v1084
    %1593 = vmatprep.subr.bf16.mxu0 %v1077
    %1594 = vmatpush1.bf16.msra.mxu0 %v1076
    %1595 = vmatprep.subr.bf16.mxu0 %v1069
    %1596 = vmatpush1.bf16.msra.mxu0 %v1068
    %1597 = vmatprep.subr.bf16.mxu0 %v1189
    %1598 = vmatpush2.bf16.msra.mxu0 %v1188
    %1599 = vmatprep.subr.bf16.mxu0 %v1181
    %1600 = vmatpush2.bf16.msra.mxu0 %v1180
    %1601 = vmatprep.subr.bf16.mxu0 %v1173
    %1602 = vmatpush2.bf16.msra.mxu0 %v1172
    %1603 = vmatprep.subr.bf16.mxu0 %v1165
    %1604 = vmatpush2.bf16.msra.mxu0 %v1164
    %1605 = vmatprep.subr.bf16.mxu0 %v1157
    %1606 = vmatpush2.bf16.msra.mxu0 %v1156
    %1607 = vmatprep.subr.bf16.mxu0 %v1149
    %1608 = vmatpush2.bf16.msra.mxu0 %v1148
    %1609 = vmatprep.subr.bf16.mxu0 %v1141
    %1610 = vmatpush2.bf16.msra.mxu0 %v1140
    %1611 = vmatprep.subr.bf16.mxu0 %v1133
    %1612 = vmatpush2.bf16.msra.mxu0 %v1132
    %1613 = vmatprep.mubr.bf16.mxu0 %v1539
    %1614 = vmatmul.mubr.bf16.gmra.mxu0 %v1538
    %v1615 = vpop.f32.mrf.mxu0
    %v1616 = vadd.f32 0.0, %v1615
    %v1617 = vpop.f32.mrf.mxu0
    %v1618 = vadd.f32 0.0, %v1617
    %v1619 = vpop.f32.mrf.mxu0
    %v1620 = vpop.f32.mrf.mxu0
    %1621 = vdwg.mxu0
    %1622 = vmatprep.subr.bf16.mxu0 %v1127
    %1623 = vmatpush1.bf16.msra.mxu0 %v1126
    %1624 = vmatprep.subr.bf16.mxu0 %v1119
    %1625 = vmatpush1.bf16.msra.mxu0 %v1118
    %1626 = vmatprep.subr.bf16.mxu0 %v1111
    %1627 = vmatpush1.bf16.msra.mxu0 %v1110
    %1628 = vmatprep.subr.bf16.mxu0 %v1103
    %1629 = vmatpush1.bf16.msra.mxu0 %v1102
    %1630 = vmatprep.subr.bf16.mxu0 %v1095
    %1631 = vmatpush1.bf16.msra.mxu0 %v1094
    %1632 = vmatprep.subr.bf16.mxu0 %v1087
    %1633 = vmatpush1.bf16.msra.mxu0 %v1086
    %1634 = vmatprep.subr.bf16.mxu0 %v1079
    %1635 = vmatpush1.bf16.msra.mxu0 %v1078
    %1636 = vmatprep.subr.bf16.mxu0 %v1071
    %1637 = vmatpush1.bf16.msra.mxu0 %v1070
    %1638 = vmatprep.subr.bf16.mxu0 %v1191
    %1639 = vmatpush2.bf16.msra.mxu0 %v1190
    %1640 = vmatprep.subr.bf16.mxu0 %v1183
    %1641 = vmatpush2.bf16.msra.mxu0 %v1182
    %1642 = vmatprep.subr.bf16.mxu0 %v1175
    %1643 = vmatpush2.bf16.msra.mxu0 %v1174
    %1644 = vmatprep.subr.bf16.mxu0 %v1167
    %1645 = vmatpush2.bf16.msra.mxu0 %v1166
    %1646 = vmatprep.subr.bf16.mxu0 %v1159
    %1647 = vmatpush2.bf16.msra.mxu0 %v1158
    %1648 = vmatprep.subr.bf16.mxu0 %v1151
    %1649 = vmatpush2.bf16.msra.mxu0 %v1150
    %1650 = vmatprep.subr.bf16.mxu0 %v1143
    %1651 = vmatpush2.bf16.msra.mxu0 %v1142
    %1652 = vmatprep.subr.bf16.mxu0 %v1135
    %1653 = vmatpush2.bf16.msra.mxu0 %v1134
    %1654 = vmatprep.mubr.bf16.mxu0 %v1539
    %1655 = vmatmul.mubr.bf16.gmra.mxu0 %v1538
    %v1656 = vpop.f32.mrf.mxu0
    %v1657 = vadd.f32 0.0, %v1656
    %v1658 = vpop.f32.mrf.mxu0
    %v1659 = vadd.f32 0.0, %v1658
    %v1660 = vpop.f32.mrf.mxu0
    %v1661 = vpop.f32.mrf.mxu0
    %1662 = vdwg.mxu0
    %1663 = vmatprep.subr.bf16.mxu0 %v1129
    %1664 = vmatpush1.bf16.msra.mxu0 %v1128
    %1665 = vmatprep.subr.bf16.mxu0 %v1121
    %1666 = vmatpush1.bf16.msra.mxu0 %v1120
    %1667 = vmatprep.subr.bf16.mxu0 %v1113
    %1668 = vmatpush1.bf16.msra.mxu0 %v1112
    %1669 = vmatprep.subr.bf16.mxu0 %v1105
    %1670 = vmatpush1.bf16.msra.mxu0 %v1104
    %1671 = vmatprep.subr.bf16.mxu0 %v1097
    %1672 = vmatpush1.bf16.msra.mxu0 %v1096
    %1673 = vmatprep.subr.bf16.mxu0 %v1089
    %1674 = vmatpush1.bf16.msra.mxu0 %v1088
    %1675 = vmatprep.subr.bf16.mxu0 %v1081
    %1676 = vmatpush1.bf16.msra.mxu0 %v1080
    %1677 = vmatprep.subr.bf16.mxu0 %v1073
    %1678 = vmatpush1.bf16.msra.mxu0 %v1072
    %1679 = vmatprep.subr.bf16.mxu0 %v1193
    %1680 = vmatpush2.bf16.msra.mxu0 %v1192
    %1681 = vmatprep.subr.bf16.mxu0 %v1185
    %1682 = vmatpush2.bf16.msra.mxu0 %v1184
    %1683 = vmatprep.subr.bf16.mxu0 %v1177
    %1684 = vmatpush2.bf16.msra.mxu0 %v1176
    %1685 = vmatprep.subr.bf16.mxu0 %v1169
    %1686 = vmatpush2.bf16.msra.mxu0 %v1168
    %1687 = vmatprep.subr.bf16.mxu0 %v1161
    %1688 = vmatpush2.bf16.msra.mxu0 %v1160
    %1689 = vmatprep.subr.bf16.mxu0 %v1153
    %1690 = vmatpush2.bf16.msra.mxu0 %v1152
    %1691 = vmatprep.subr.bf16.mxu0 %v1145
    %1692 = vmatpush2.bf16.msra.mxu0 %v1144
    %1693 = vmatprep.subr.bf16.mxu0 %v1137
    %1694 = vmatpush2.bf16.msra.mxu0 %v1136
    %1695 = vmatprep.mubr.bf16.mxu0 %v1539
    %1696 = vmatmul.mubr.bf16.gmra.mxu0 %v1538
    %v1697 = vpop.f32.mrf.mxu0
    %v1698 = vadd.f32 0.0, %v1697
    %v1699 = vpop.f32.mrf.mxu0
    %v1700 = vadd.f32 0.0, %v1699
    %v1701 = vpop.f32.mrf.mxu0
    %v1702 = vpop.f32.mrf.mxu0
    %1703 = vdwg.mxu0
    %v1704 = vadd.f32 %v1530, %v1575
    %v1705 = vadd.f32 %v1531, %v1577
    %v1706 = vadd.f32 %v1532, %v1616
    %v1707 = vadd.f32 %v1533, %v1618
    %v1708 = vadd.f32 %v1534, %v1657
    %v1709 = vadd.f32 %v1535, %v1659
    %v1710 = vadd.f32 %v1536, %v1698
    %v1711 = vadd.f32 %v1537, %v1700
    %v1712 = vmul.f32 %v1704, 0.5
    %v1713 = vmul.f32 %v1705, 0.5
    %v1714 = vtanh.pop %v1712
    %v1715 = vtanh.pop %v1713
    %v1716 = vmul.f32 %v1714, 0.5
    %v1717 = vmul.f32 %v1715, 0.5
    %v1718 = vadd.f32 %v1716, 0.5
    %v1719 = vadd.f32 %v1717, 0.5
    %v1720 = vmul.f32 %v1706, 0.5
    %v1721 = vmul.f32 %v1707, 0.5
    %v1722 = vtanh.pop %v1720
    %v1723 = vtanh.pop %v1721
    %v1724 = vmul.f32 %v1722, 0.5
    %v1725 = vmul.f32 %v1723, 0.5
    %v1726 = vadd.f32 %v1724, 0.5
    %v1727 = vadd.f32 %v1725, 0.5
    %v1728 = vtanh.pop %v1708
    %v1729 = vtanh.pop %v1709
    %v1730 = vmul.f32 %v1710, 0.5
    %v1731 = vmul.f32 %v1711, 0.5
    %v1732 = vtanh.pop %v1730
    %v1733 = vtanh.pop %v1731
    %v1734 = vmul.f32 %v1732, 0.5
    %v1735 = vmul.f32 %v1733, 0.5
    %v1736 = vadd.f32 %v1734, 0.5
    %v1737 = vadd.f32 %v1735, 0.5
    %v1738 = vmul.f32 %v1726, %v1524
    %v1739 = vmul.f32 %v1727, %v1525
    %v1740 = vmul.f32 %v1718, %v1728
    %v1741 = vmul.f32 %v1719, %v1729
    %v1742 = vadd.f32 %v1738, %v1740
    %v1743 = vadd.f32 %v1739, %v1741
    %v1744 = vtanh.pop %v1742
    %v1745 = vtanh.pop %v1743
    %v1746 = vmul.f32 %v1736, %v1744
    %v1747 = vmul.f32 %v1737, %v1745
    %v1748 = vld [vmem:[#allocation3 + $0x80] sm:$0xff]
    %v1749 = vld [vmem:[#allocation3 + $0x88] sm:$0xff]
    %v1750 = vld [vmem:[#allocation3 + $0x90] sm:$0xff]
    %v1751 = vld [vmem:[#allocation3 + $0x98] sm:$0xff]
    %v1752 = vld [vmem:[#allocation3 + $0xa0] sm:$0xff]
    %v1753 = vld [vmem:[#allocation3 + $0xa8] sm:$0xff]
    %v1754 = vld [vmem:[#allocation3 + $0xb0] sm:$0xff]
    %v1755 = vld [vmem:[#allocation3 + $0xb8] sm:$0xff]
    %v1756 = vpack.c.bf16 %v1746, %v1746
    %v1757 = vpack.c.bf16 %v1747, %v1747
    %1758 = vmatprep.subr.bf16.mxu0 %v1123
    %1759 = vmatpush1.bf16.msra.mxu0 %v1122
    %1760 = vmatprep.subr.bf16.mxu0 %v1115
    %1761 = vmatpush1.bf16.msra.mxu0 %v1114
    %1762 = vmatprep.subr.bf16.mxu0 %v1107
    %1763 = vmatpush1.bf16.msra.mxu0 %v1106
    %1764 = vmatprep.subr.bf16.mxu0 %v1099
    %1765 = vmatpush1.bf16.msra.mxu0 %v1098
    %1766 = vmatprep.subr.bf16.mxu0 %v1091
    %1767 = vmatpush1.bf16.msra.mxu0 %v1090
    %1768 = vmatprep.subr.bf16.mxu0 %v1083
    %1769 = vmatpush1.bf16.msra.mxu0 %v1082
    %1770 = vmatprep.subr.bf16.mxu0 %v1075
    %1771 = vmatpush1.bf16.msra.mxu0 %v1074
    %1772 = vmatprep.subr.bf16.mxu0 %v1067
    %1773 = vmatpush1.bf16.msra.mxu0 %v1066
    %1774 = vmatprep.subr.bf16.mxu0 %v1187
    %1775 = vmatpush2.bf16.msra.mxu0 %v1186
    %1776 = vmatprep.subr.bf16.mxu0 %v1179
    %1777 = vmatpush2.bf16.msra.mxu0 %v1178
    %1778 = vmatprep.subr.bf16.mxu0 %v1171
    %1779 = vmatpush2.bf16.msra.mxu0 %v1170
    %1780 = vmatprep.subr.bf16.mxu0 %v1163
    %1781 = vmatpush2.bf16.msra.mxu0 %v1162
    %1782 = vmatprep.subr.bf16.mxu0 %v1155
    %1783 = vmatpush2.bf16.msra.mxu0 %v1154
    %1784 = vmatprep.subr.bf16.mxu0 %v1147
    %1785 = vmatpush2.bf16.msra.mxu0 %v1146
    %1786 = vmatprep.subr.bf16.mxu0 %v1139
    %1787 = vmatpush2.bf16.msra.mxu0 %v1138
    %1788 = vmatprep.subr.bf16.mxu0 %v1131
    %1789 = vmatpush2.bf16.msra.mxu0 %v1130
    %1790 = vmatprep.mubr.bf16.mxu0 %v1757
    %1791 = vmatmul.mubr.bf16.gmra.mxu0 %v1756
    %v1792 = vpop.f32.mrf.mxu0
    %v1793 = vadd.f32 0.0, %v1792
    %v1794 = vpop.f32.mrf.mxu0
    %v1795 = vadd.f32 0.0, %v1794
    %v1796 = vpop.f32.mrf.mxu0
    %v1797 = vpop.f32.mrf.mxu0
    %1798 = vdwg.mxu0
    %1799 = vmatprep.subr.bf16.mxu0 %v1125
    %1800 = vmatpush1.bf16.msra.mxu0 %v1124
    %1801 = vmatprep.subr.bf16.mxu0 %v1117
    %1802 = vmatpush1.bf16.msra.mxu0 %v1116
    %1803 = vmatprep.subr.bf16.mxu0 %v1109
    %1804 = vmatpush1.bf16.msra.mxu0 %v1108
    %1805 = vmatprep.subr.bf16.mxu0 %v1101
    %1806 = vmatpush1.bf16.msra.mxu0 %v1100
    %1807 = vmatprep.subr.bf16.mxu0 %v1093
    %1808 = vmatpush1.bf16.msra.mxu0 %v1092
    %1809 = vmatprep.subr.bf16.mxu0 %v1085
    %1810 = vmatpush1.bf16.msra.mxu0 %v1084
    %1811 = vmatprep.subr.bf16.mxu0 %v1077
    %1812 = vmatpush1.bf16.msra.mxu0 %v1076
    %1813 = vmatprep.subr.bf16.mxu0 %v1069
    %1814 = vmatpush1.bf16.msra.mxu0 %v1068
    %1815 = vmatprep.subr.bf16.mxu0 %v1189
    %1816 = vmatpush2.bf16.msra.mxu0 %v1188
    %1817 = vmatprep.subr.bf16.mxu0 %v1181
    %1818 = vmatpush2.bf16.msra.mxu0 %v1180
    %1819 = vmatprep.subr.bf16.mxu0 %v1173
    %1820 = vmatpush2.bf16.msra.mxu0 %v1172
    %1821 = vmatprep.subr.bf16.mxu0 %v1165
    %1822 = vmatpush2.bf16.msra.mxu0 %v1164
    %1823 = vmatprep.subr.bf16.mxu0 %v1157
    %1824 = vmatpush2.bf16.msra.mxu0 %v1156
    %1825 = vmatprep.subr.bf16.mxu0 %v1149
    %1826 = vmatpush2.bf16.msra.mxu0 %v1148
    %1827 = vmatprep.subr.bf16.mxu0 %v1141
    %1828 = vmatpush2.bf16.msra.mxu0 %v1140
    %1829 = vmatprep.subr.bf16.mxu0 %v1133
    %1830 = vmatpush2.bf16.msra.mxu0 %v1132
    %1831 = vmatprep.mubr.bf16.mxu0 %v1757
    %1832 = vmatmul.mubr.bf16.gmra.mxu0 %v1756
    %v1833 = vpop.f32.mrf.mxu0
    %v1834 = vadd.f32 0.0, %v1833
    %v1835 = vpop.f32.mrf.mxu0
    %v1836 = vadd.f32 0.0, %v1835
    %v1837 = vpop.f32.mrf.mxu0
    %v1838 = vpop.f32.mrf.mxu0
    %1839 = vdwg.mxu0
    %1840 = vmatprep.subr.bf16.mxu0 %v1127
    %1841 = vmatpush1.bf16.msra.mxu0 %v1126
    %1842 = vmatprep.subr.bf16.mxu0 %v1119
    %1843 = vmatpush1.bf16.msra.mxu0 %v1118
    %1844 = vmatprep.subr.bf16.mxu0 %v1111
    %1845 = vmatpush1.bf16.msra.mxu0 %v1110
    %1846 = vmatprep.subr.bf16.mxu0 %v1103
    %1847 = vmatpush1.bf16.msra.mxu0 %v1102
    %1848 = vmatprep.subr.bf16.mxu0 %v1095
    %1849 = vmatpush1.bf16.msra.mxu0 %v1094
    %1850 = vmatprep.subr.bf16.mxu0 %v1087
    %1851 = vmatpush1.bf16.msra.mxu0 %v1086
    %1852 = vmatprep.subr.bf16.mxu0 %v1079
    %1853 = vmatpush1.bf16.msra.mxu0 %v1078
    %1854 = vmatprep.subr.bf16.mxu0 %v1071
    %1855 = vmatpush1.bf16.msra.mxu0 %v1070
    %1856 = vmatprep.subr.bf16.mxu0 %v1191
    %1857 = vmatpush2.bf16.msra.mxu0 %v1190
    %1858 = vmatprep.subr.bf16.mxu0 %v1183
    %1859 = vmatpush2.bf16.msra.mxu0 %v1182
    %1860 = vmatprep.subr.bf16.mxu0 %v1175
    %1861 = vmatpush2.bf16.msra.mxu0 %v1174
    %1862 = vmatprep.subr.bf16.mxu0 %v1167
    %1863 = vmatpush2.bf16.msra.mxu0 %v1166
    %1864 = vmatprep.subr.bf16.mxu0 %v1159
    %1865 = vmatpush2.bf16.msra.mxu0 %v1158
    %1866 = vmatprep.subr.bf16.mxu0 %v1151
    %1867 = vmatpush2.bf16.msra.mxu0 %v1150
    %1868 = vmatprep.subr.bf16.mxu0 %v1143
    %1869 = vmatpush2.bf16.msra.mxu0 %v1142
    %1870 = vmatprep.subr.bf16.mxu0 %v1135
    %1871 = vmatpush2.bf16.msra.mxu0 %v1134
    %1872 = vmatprep.mubr.bf16.mxu0 %v1757
    %1873 = vmatmul.mubr.bf16.gmra.mxu0 %v1756
    %v1874 = vpop.f32.mrf.mxu0
    %v1875 = vadd.f32 0.0, %v1874
    %v1876 = vpop.f32.mrf.mxu0
    %v1877 = vadd.f32 0.0, %v1876
    %v1878 = vpop.f32.mrf.mxu0
    %v1879 = vpop.f32.mrf.mxu0
    %1880 = vdwg.mxu0
    %1881 = vmatprep.subr.bf16.mxu0 %v1129
    %1882 = vmatpush1.bf16.msra.mxu0 %v1128
    %1883 = vmatprep.subr.bf16.mxu0 %v1121
    %1884 = vmatpush1.bf16.msra.mxu0 %v1120
    %1885 = vmatprep.subr.bf16.mxu0 %v1113
    %1886 = vmatpush1.bf16.msra.mxu0 %v1112
    %1887 = vmatprep.subr.bf16.mxu0 %v1105
    %1888 = vmatpush1.bf16.msra.mxu0 %v1104
    %1889 = vmatprep.subr.bf16.mxu0 %v1097
    %1890 = vmatpush1.bf16.msra.mxu0 %v1096
    %1891 = vmatprep.subr.bf16.mxu0 %v1089
    %1892 = vmatpush1.bf16.msra.mxu0 %v1088
    %1893 = vmatprep.subr.bf16.mxu0 %v1081
    %1894 = vmatpush1.bf16.msra.mxu0 %v1080
    %1895 = vmatprep.subr.bf16.mxu0 %v1073
    %1896 = vmatpush1.bf16.msra.mxu0 %v1072
    %1897 = vmatprep.subr.bf16.mxu0 %v1193
    %1898 = vmatpush2.bf16.msra.mxu0 %v1192
    %1899 = vmatprep.subr.bf16.mxu0 %v1185
    %1900 = vmatpush2.bf16.msra.mxu0 %v1184
    %1901 = vmatprep.subr.bf16.mxu0 %v1177
    %1902 = vmatpush2.bf16.msra.mxu0 %v1176
    %1903 = vmatprep.subr.bf16.mxu0 %v1169
    %1904 = vmatpush2.bf16.msra.mxu0 %v1168
    %1905 = vmatprep.subr.bf16.mxu0 %v1161
    %1906 = vmatpush2.bf16.msra.mxu0 %v1160
    %1907 = vmatprep.subr.bf16.mxu0 %v1153
    %1908 = vmatpush2.bf16.msra.mxu0 %v1152
    %1909 = vmatprep.subr.bf16.mxu0 %v1145
    %1910 = vmatpush2.bf16.msra.mxu0 %v1144
    %1911 = vmatprep.subr.bf16.mxu0 %v1137
    %1912 = vmatpush2.bf16.msra.mxu0 %v1136
    %1913 = vmatprep.mubr.bf16.mxu0 %v1757
    %1914 = vmatmul.mubr.bf16.gmra.mxu0 %v1756
    %v1915 = vpop.f32.mrf.mxu0
    %v1916 = vadd.f32 0.0, %v1915
    %v1917 = vpop.f32.mrf.mxu0
    %v1918 = vadd.f32 0.0, %v1917
    %v1919 = vpop.f32.mrf.mxu0
    %v1920 = vpop.f32.mrf.mxu0
    %1921 = vdwg.mxu0
    %v1922 = vadd.f32 %v1748, %v1793
    %v1923 = vadd.f32 %v1749, %v1795
    %v1924 = vadd.f32 %v1750, %v1834
    %v1925 = vadd.f32 %v1751, %v1836
    %v1926 = vadd.f32 %v1752, %v1875
    %v1927 = vadd.f32 %v1753, %v1877
    %v1928 = vadd.f32 %v1754, %v1916
    %v1929 = vadd.f32 %v1755, %v1918
    %v1930 = vmul.f32 %v1922, 0.5
    %v1931 = vmul.f32 %v1923, 0.5
    %v1932 = vtanh.pop %v1930
    %v1933 = vtanh.pop %v1931
    %v1934 = vmul.f32 %v1932, 0.5
    %v1935 = vmul.f32 %v1933, 0.5
    %v1936 = vadd.f32 %v1934, 0.5
    %v1937 = vadd.f32 %v1935, 0.5
    %v1938 = vmul.f32 %v1924, 0.5
    %v1939 = vmul.f32 %v1925, 0.5
    %v1940 = vtanh.pop %v1938
    %v1941 = vtanh.pop %v1939
    %v1942 = vmul.f32 %v1940, 0.5
    %v1943 = vmul.f32 %v1941, 0.5
    %v1944 = vadd.f32 %v1942, 0.5
    %v1945 = vadd.f32 %v1943, 0.5
    %v1946 = vtanh.pop %v1926
    %v1947 = vtanh.pop %v1927
    %v1948 = vmul.f32 %v1928, 0.5
    %v1949 = vmul.f32 %v1929, 0.5
    %v1950 = vtanh.pop %v1948
    %v1951 = vtanh.pop %v1949
    %v1952 = vmul.f32 %v1950, 0.5
    %v1953 = vmul.f32 %v1951, 0.5
    %v1954 = vadd.f32 %v1952, 0.5
    %v1955 = vadd.f32 %v1953, 0.5
    %v1956 = vmul.f32 %v1944, %v1742
    %v1957 = vmul.f32 %v1945, %v1743
    %v1958 = vmul.f32 %v1936, %v1946
    %v1959 = vmul.f32 %v1937, %v1947
    %v1960 = vadd.f32 %v1956, %v1958
    %v1961 = vadd.f32 %v1957, %v1959
    %v1962 = vtanh.pop %v1960
    %v1963 = vtanh.pop %v1961
    %v1964 = vmul.f32 %v1954, %v1962
    %v1965 = vmul.f32 %v1955, %v1963
    %v1966 = vld [vmem:[#allocation3 + $0xc0] sm:$0xff]
    %v1967 = vld [vmem:[#allocation3 + $0xc8] sm:$0xff]
    %v1968 = vld [vmem:[#allocation3 + $0xd0] sm:$0xff]
    %v1969 = vld [vmem:[#allocation3 + $0xd8] sm:$0xff]
    %v1970 = vld [vmem:[#allocation3 + $0xe0] sm:$0xff]
    %v1971 = vld [vmem:[#allocation3 + $0xe8] sm:$0xff]
    %v1972 = vld [vmem:[#allocation3 + $0xf0] sm:$0xff]
    %v1973 = vld [vmem:[#allocation3 + $0xf8] sm:$0xff]
    %v1974 = vpack.c.bf16 %v1964, %v1964
    %v1975 = vpack.c.bf16 %v1965, %v1965
    %1976 = vmatprep.subr.bf16.mxu0 %v1123
    %1977 = vmatpush1.bf16.msra.mxu0 %v1122
    %1978 = vmatprep.subr.bf16.mxu0 %v1115
    %1979 = vmatpush1.bf16.msra.mxu0 %v1114
    %1980 = vmatprep.subr.bf16.mxu0 %v1107
    %1981 = vmatpush1.bf16.msra.mxu0 %v1106
    %1982 = vmatprep.subr.bf16.mxu0 %v1099
    %1983 = vmatpush1.bf16.msra.mxu0 %v1098
    %1984 = vmatprep.subr.bf16.mxu0 %v1091
    %1985 = vmatpush1.bf16.msra.mxu0 %v1090
    %1986 = vmatprep.subr.bf16.mxu0 %v1083
    %1987 = vmatpush1.bf16.msra.mxu0 %v1082
    %1988 = vmatprep.subr.bf16.mxu0 %v1075
    %1989 = vmatpush1.bf16.msra.mxu0 %v1074
    %1990 = vmatprep.subr.bf16.mxu0 %v1067
    %1991 = vmatpush1.bf16.msra.mxu0 %v1066
    %1992 = vmatprep.subr.bf16.mxu0 %v1187
    %1993 = vmatpush2.bf16.msra.mxu0 %v1186
    %1994 = vmatprep.subr.bf16.mxu0 %v1179
    %1995 = vmatpush2.bf16.msra.mxu0 %v1178
    %1996 = vmatprep.subr.bf16.mxu0 %v1171
    %1997 = vmatpush2.bf16.msra.mxu0 %v1170
    %1998 = vmatprep.subr.bf16.mxu0 %v1163
    %1999 = vmatpush2.bf16.msra.mxu0 %v1162
    %2000 = vmatprep.subr.bf16.mxu0 %v1155
    %2001 = vmatpush2.bf16.msra.mxu0 %v1154
    %2002 = vmatprep.subr.bf16.mxu0 %v1147
    %2003 = vmatpush2.bf16.msra.mxu0 %v1146
    %2004 = vmatprep.subr.bf16.mxu0 %v1139
    %2005 = vmatpush2.bf16.msra.mxu0 %v1138
    %2006 = vmatprep.subr.bf16.mxu0 %v1131
    %2007 = vmatpush2.bf16.msra.mxu0 %v1130
    %2008 = vmatprep.mubr.bf16.mxu0 %v1975
    %2009 = vmatmul.mubr.bf16.gmra.mxu0 %v1974
    %v2010 = vpop.f32.mrf.mxu0
    %v2011 = vadd.f32 0.0, %v2010
    %v2012 = vpop.f32.mrf.mxu0
    %v2013 = vadd.f32 0.0, %v2012
    %v2014 = vpop.f32.mrf.mxu0
    %v2015 = vpop.f32.mrf.mxu0
    %2016 = vdwg.mxu0
    %2017 = vmatprep.subr.bf16.mxu0 %v1125
    %2018 = vmatpush1.bf16.msra.mxu0 %v1124
    %2019 = vmatprep.subr.bf16.mxu0 %v1117
    %2020 = vmatpush1.bf16.msra.mxu0 %v1116
    %2021 = vmatprep.subr.bf16.mxu0 %v1109
    %2022 = vmatpush1.bf16.msra.mxu0 %v1108
    %2023 = vmatprep.subr.bf16.mxu0 %v1101
    %2024 = vmatpush1.bf16.msra.mxu0 %v1100
    %2025 = vmatprep.subr.bf16.mxu0 %v1093
    %2026 = vmatpush1.bf16.msra.mxu0 %v1092
    %2027 = vmatprep.subr.bf16.mxu0 %v1085
    %2028 = vmatpush1.bf16.msra.mxu0 %v1084
    %2029 = vmatprep.subr.bf16.mxu0 %v1077
    %2030 = vmatpush1.bf16.msra.mxu0 %v1076
    %2031 = vmatprep.subr.bf16.mxu0 %v1069
    %2032 = vmatpush1.bf16.msra.mxu0 %v1068
    %2033 = vmatprep.subr.bf16.mxu0 %v1189
    %2034 = vmatpush2.bf16.msra.mxu0 %v1188
    %2035 = vmatprep.subr.bf16.mxu0 %v1181
    %2036 = vmatpush2.bf16.msra.mxu0 %v1180
    %2037 = vmatprep.subr.bf16.mxu0 %v1173
    %2038 = vmatpush2.bf16.msra.mxu0 %v1172
    %2039 = vmatprep.subr.bf16.mxu0 %v1165
    %2040 = vmatpush2.bf16.msra.mxu0 %v1164
    %2041 = vmatprep.subr.bf16.mxu0 %v1157
    %2042 = vmatpush2.bf16.msra.mxu0 %v1156
    %2043 = vmatprep.subr.bf16.mxu0 %v1149
    %2044 = vmatpush2.bf16.msra.mxu0 %v1148
    %2045 = vmatprep.subr.bf16.mxu0 %v1141
    %2046 = vmatpush2.bf16.msra.mxu0 %v1140
    %2047 = vmatprep.subr.bf16.mxu0 %v1133
    %2048 = vmatpush2.bf16.msra.mxu0 %v1132
    %2049 = vmatprep.mubr.bf16.mxu0 %v1975
    %2050 = vmatmul.mubr.bf16.gmra.mxu0 %v1974
    %v2051 = vpop.f32.mrf.mxu0
    %v2052 = vadd.f32 0.0, %v2051
    %v2053 = vpop.f32.mrf.mxu0
    %v2054 = vadd.f32 0.0, %v2053
    %v2055 = vpop.f32.mrf.mxu0
    %v2056 = vpop.f32.mrf.mxu0
    %2057 = vdwg.mxu0
    %2058 = vmatprep.subr.bf16.mxu0 %v1127
    %2059 = vmatpush1.bf16.msra.mxu0 %v1126
    %2060 = vmatprep.subr.bf16.mxu0 %v1119
    %2061 = vmatpush1.bf16.msra.mxu0 %v1118
    %2062 = vmatprep.subr.bf16.mxu0 %v1111
    %2063 = vmatpush1.bf16.msra.mxu0 %v1110
    %2064 = vmatprep.subr.bf16.mxu0 %v1103
    %2065 = vmatpush1.bf16.msra.mxu0 %v1102
    %2066 = vmatprep.subr.bf16.mxu0 %v1095
    %2067 = vmatpush1.bf16.msra.mxu0 %v1094
    %2068 = vmatprep.subr.bf16.mxu0 %v1087
    %2069 = vmatpush1.bf16.msra.mxu0 %v1086
    %2070 = vmatprep.subr.bf16.mxu0 %v1079
    %2071 = vmatpush1.bf16.msra.mxu0 %v1078
    %2072 = vmatprep.subr.bf16.mxu0 %v1071
    %2073 = vmatpush1.bf16.msra.mxu0 %v1070
    %2074 = vmatprep.subr.bf16.mxu0 %v1191
    %2075 = vmatpush2.bf16.msra.mxu0 %v1190
    %2076 = vmatprep.subr.bf16.mxu0 %v1183
    %2077 = vmatpush2.bf16.msra.mxu0 %v1182
    %2078 = vmatprep.subr.bf16.mxu0 %v1175
    %2079 = vmatpush2.bf16.msra.mxu0 %v1174
    %2080 = vmatprep.subr.bf16.mxu0 %v1167
    %2081 = vmatpush2.bf16.msra.mxu0 %v1166
    %2082 = vmatprep.subr.bf16.mxu0 %v1159
    %2083 = vmatpush2.bf16.msra.mxu0 %v1158
    %2084 = vmatprep.subr.bf16.mxu0 %v1151
    %2085 = vmatpush2.bf16.msra.mxu0 %v1150
    %2086 = vmatprep.subr.bf16.mxu0 %v1143
    %2087 = vmatpush2.bf16.msra.mxu0 %v1142
    %2088 = vmatprep.subr.bf16.mxu0 %v1135
    %2089 = vmatpush2.bf16.msra.mxu0 %v1134
    %2090 = vmatprep.mubr.bf16.mxu0 %v1975
    %2091 = vmatmul.mubr.bf16.gmra.mxu0 %v1974
    %v2092 = vpop.f32.mrf.mxu0
    %v2093 = vadd.f32 0.0, %v2092
    %v2094 = vpop.f32.mrf.mxu0
    %v2095 = vadd.f32 0.0, %v2094
    %v2096 = vpop.f32.mrf.mxu0
    %v2097 = vpop.f32.mrf.mxu0
    %2098 = vdwg.mxu0
    %2099 = vmatprep.subr.bf16.mxu0 %v1129
    %2100 = vmatpush1.bf16.msra.mxu0 %v1128
    %2101 = vmatprep.subr.bf16.mxu0 %v1121
    %2102 = vmatpush1.bf16.msra.mxu0 %v1120
    %2103 = vmatprep.subr.bf16.mxu0 %v1113
    %2104 = vmatpush1.bf16.msra.mxu0 %v1112
    %2105 = vmatprep.subr.bf16.mxu0 %v1105
    %2106 = vmatpush1.bf16.msra.mxu0 %v1104
    %2107 = vmatprep.subr.bf16.mxu0 %v1097
    %2108 = vmatpush1.bf16.msra.mxu0 %v1096
    %2109 = vmatprep.subr.bf16.mxu0 %v1089
    %2110 = vmatpush1.bf16.msra.mxu0 %v1088
    %2111 = vmatprep.subr.bf16.mxu0 %v1081
    %2112 = vmatpush1.bf16.msra.mxu0 %v1080
    %2113 = vmatprep.subr.bf16.mxu0 %v1073
    %2114 = vmatpush1.bf16.msra.mxu0 %v1072
    %2115 = vmatprep.subr.bf16.mxu0 %v1193
    %2116 = vmatpush2.bf16.msra.mxu0 %v1192
    %2117 = vmatprep.subr.bf16.mxu0 %v1185
    %2118 = vmatpush2.bf16.msra.mxu0 %v1184
    %2119 = vmatprep.subr.bf16.mxu0 %v1177
    %2120 = vmatpush2.bf16.msra.mxu0 %v1176
    %2121 = vmatprep.subr.bf16.mxu0 %v1169
    %2122 = vmatpush2.bf16.msra.mxu0 %v1168
    %2123 = vmatprep.subr.bf16.mxu0 %v1161
    %2124 = vmatpush2.bf16.msra.mxu0 %v1160
    %2125 = vmatprep.subr.bf16.mxu0 %v1153
    %2126 = vmatpush2.bf16.msra.mxu0 %v1152
    %2127 = vmatprep.subr.bf16.mxu0 %v1145
    %2128 = vmatpush2.bf16.msra.mxu0 %v1144
    %2129 = vmatprep.subr.bf16.mxu0 %v1137
    %2130 = vmatpush2.bf16.msra.mxu0 %v1136
    %2131 = vmatprep.mubr.bf16.mxu0 %v1975
    %2132 = vmatmul.mubr.bf16.gmra.mxu0 %v1974
    %v2133 = vpop.f32.mrf.mxu0
    %v2134 = vadd.f32 0.0, %v2133
    %v2135 = vpop.f32.mrf.mxu0
    %v2136 = vadd.f32 0.0, %v2135
    %v2137 = vpop.f32.mrf.mxu0
    %v2138 = vpop.f32.mrf.mxu0
    %2139 = vdwg.mxu0
    %v2140 = vadd.f32 %v1966, %v2011
    %v2141 = vadd.f32 %v1967, %v2013
    %v2142 = vadd.f32 %v1968, %v2052
    %v2143 = vadd.f32 %v1969, %v2054
    %v2144 = vadd.f32 %v1970, %v2093
    %v2145 = vadd.f32 %v1971, %v2095
    %v2146 = vadd.f32 %v1972, %v2134
    %v2147 = vadd.f32 %v1973, %v2136
    %v2148 = vmul.f32 %v2140, 0.5
    %v2149 = vmul.f32 %v2141, 0.5
    %v2150 = vtanh.pop %v2148
    %v2151 = vtanh.pop %v2149
    %v2152 = vmul.f32 %v2150, 0.5
    %v2153 = vmul.f32 %v2151, 0.5
    %v2154 = vadd.f32 %v2152, 0.5
    %v2155 = vadd.f32 %v2153, 0.5
    %v2156 = vmul.f32 %v2142, 0.5
    %v2157 = vmul.f32 %v2143, 0.5
    %v2158 = vtanh.pop %v2156
    %v2159 = vtanh.pop %v2157
    %v2160 = vmul.f32 %v2158, 0.5
    %v2161 = vmul.f32 %v2159, 0.5
    %v2162 = vadd.f32 %v2160, 0.5
    %v2163 = vadd.f32 %v2161, 0.5
    %v2164 = vtanh.pop %v2144
    %v2165 = vtanh.pop %v2145
    %v2166 = vmul.f32 %v2146, 0.5
    %v2167 = vmul.f32 %v2147, 0.5
    %v2168 = vtanh.pop %v2166
    %v2169 = vtanh.pop %v2167
    %v2170 = vmul.f32 %v2168, 0.5
    %v2171 = vmul.f32 %v2169, 0.5
    %v2172 = vadd.f32 %v2170, 0.5
    %v2173 = vadd.f32 %v2171, 0.5
    %v2174 = vmul.f32 %v2162, %v1960
    %v2175 = vmul.f32 %v2163, %v1961
    %v2176 = vmul.f32 %v2154, %v2164
    %v2177 = vmul.f32 %v2155, %v2165
    %v2178 = vadd.f32 %v2174, %v2176
    %v2179 = vadd.f32 %v2175, %v2177
    %v2180 = vtanh.pop %v2178
    %v2181 = vtanh.pop %v2179
    %v2182 = vmul.f32 %v2172, %v2180
    %v2183 = vmul.f32 %v2173, %v2181
    %v2184 = vld [vmem:[#allocation3 + $0x100] sm:$0xff]
    %v2185 = vld [vmem:[#allocation3 + $0x108] sm:$0xff]
    %v2186 = vld [vmem:[#allocation3 + $0x110] sm:$0xff]
    %v2187 = vld [vmem:[#allocation3 + $0x118] sm:$0xff]
    %v2188 = vld [vmem:[#allocation3 + $0x120] sm:$0xff]
    %v2189 = vld [vmem:[#allocation3 + $0x128] sm:$0xff]
    %v2190 = vld [vmem:[#allocation3 + $0x130] sm:$0xff]
    %v2191 = vld [vmem:[#allocation3 + $0x138] sm:$0xff]
    %v2192 = vpack.c.bf16 %v2182, %v2182
    %v2193 = vpack.c.bf16 %v2183, %v2183
    %2194 = vmatprep.subr.bf16.mxu0 %v1123
    %2195 = vmatpush1.bf16.msra.mxu0 %v1122
    %2196 = vmatprep.subr.bf16.mxu0 %v1115
    %2197 = vmatpush1.bf16.msra.mxu0 %v1114
    %2198 = vmatprep.subr.bf16.mxu0 %v1107
    %2199 = vmatpush1.bf16.msra.mxu0 %v1106
    %2200 = vmatprep.subr.bf16.mxu0 %v1099
    %2201 = vmatpush1.bf16.msra.mxu0 %v1098
    %2202 = vmatprep.subr.bf16.mxu0 %v1091
    %2203 = vmatpush1.bf16.msra.mxu0 %v1090
    %2204 = vmatprep.subr.bf16.mxu0 %v1083
    %2205 = vmatpush1.bf16.msra.mxu0 %v1082
    %2206 = vmatprep.subr.bf16.mxu0 %v1075
    %2207 = vmatpush1.bf16.msra.mxu0 %v1074
    %2208 = vmatprep.subr.bf16.mxu0 %v1067
    %2209 = vmatpush1.bf16.msra.mxu0 %v1066
    %2210 = vmatprep.subr.bf16.mxu0 %v1187
    %2211 = vmatpush2.bf16.msra.mxu0 %v1186
    %2212 = vmatprep.subr.bf16.mxu0 %v1179
    %2213 = vmatpush2.bf16.msra.mxu0 %v1178
    %2214 = vmatprep.subr.bf16.mxu0 %v1171
    %2215 = vmatpush2.bf16.msra.mxu0 %v1170
    %2216 = vmatprep.subr.bf16.mxu0 %v1163
    %2217 = vmatpush2.bf16.msra.mxu0 %v1162
    %2218 = vmatprep.subr.bf16.mxu0 %v1155
    %2219 = vmatpush2.bf16.msra.mxu0 %v1154
    %2220 = vmatprep.subr.bf16.mxu0 %v1147
    %2221 = vmatpush2.bf16.msra.mxu0 %v1146
    %2222 = vmatprep.subr.bf16.mxu0 %v1139
    %2223 = vmatpush2.bf16.msra.mxu0 %v1138
    %2224 = vmatprep.subr.bf16.mxu0 %v1131
    %2225 = vmatpush2.bf16.msra.mxu0 %v1130
    %2226 = vmatprep.mubr.bf16.mxu0 %v2193
    %2227 = vmatmul.mubr.bf16.gmra.mxu0 %v2192
    %v2228 = vpop.f32.mrf.mxu0
    %v2229 = vadd.f32 0.0, %v2228
    %v2230 = vpop.f32.mrf.mxu0
    %v2231 = vadd.f32 0.0, %v2230
    %v2232 = vpop.f32.mrf.mxu0
    %v2233 = vpop.f32.mrf.mxu0
    %2234 = vdwg.mxu0
    %2235 = vmatprep.subr.bf16.mxu0 %v1125
    %2236 = vmatpush1.bf16.msra.mxu0 %v1124
    %2237 = vmatprep.subr.bf16.mxu0 %v1117
    %2238 = vmatpush1.bf16.msra.mxu0 %v1116
    %2239 = vmatprep.subr.bf16.mxu0 %v1109
    %2240 = vmatpush1.bf16.msra.mxu0 %v1108
    %2241 = vmatprep.subr.bf16.mxu0 %v1101
    %2242 = vmatpush1.bf16.msra.mxu0 %v1100
    %2243 = vmatprep.subr.bf16.mxu0 %v1093
    %2244 = vmatpush1.bf16.msra.mxu0 %v1092
    %2245 = vmatprep.subr.bf16.mxu0 %v1085
    %2246 = vmatpush1.bf16.msra.mxu0 %v1084
    %2247 = vmatprep.subr.bf16.mxu0 %v1077
    %2248 = vmatpush1.bf16.msra.mxu0 %v1076
    %2249 = vmatprep.subr.bf16.mxu0 %v1069
    %2250 = vmatpush1.bf16.msra.mxu0 %v1068
    %2251 = vmatprep.subr.bf16.mxu0 %v1189
    %2252 = vmatpush2.bf16.msra.mxu0 %v1188
    %2253 = vmatprep.subr.bf16.mxu0 %v1181
    %2254 = vmatpush2.bf16.msra.mxu0 %v1180
    %2255 = vmatprep.subr.bf16.mxu0 %v1173
    %2256 = vmatpush2.bf16.msra.mxu0 %v1172
    %2257 = vmatprep.subr.bf16.mxu0 %v1165
    %2258 = vmatpush2.bf16.msra.mxu0 %v1164
    %2259 = vmatprep.subr.bf16.mxu0 %v1157
    %2260 = vmatpush2.bf16.msra.mxu0 %v1156
    %2261 = vmatprep.subr.bf16.mxu0 %v1149
    %2262 = vmatpush2.bf16.msra.mxu0 %v1148
    %2263 = vmatprep.subr.bf16.mxu0 %v1141
    %2264 = vmatpush2.bf16.msra.mxu0 %v1140
    %2265 = vmatprep.subr.bf16.mxu0 %v1133
    %2266 = vmatpush2.bf16.msra.mxu0 %v1132
    %2267 = vmatprep.mubr.bf16.mxu0 %v2193
    %2268 = vmatmul.mubr.bf16.gmra.mxu0 %v2192
    %v2269 = vpop.f32.mrf.mxu0
    %v2270 = vadd.f32 0.0, %v2269
    %v2271 = vpop.f32.mrf.mxu0
    %v2272 = vadd.f32 0.0, %v2271
    %v2273 = vpop.f32.mrf.mxu0
    %v2274 = vpop.f32.mrf.mxu0
    %2275 = vdwg.mxu0
    %2276 = vmatprep.subr.bf16.mxu0 %v1127
    %2277 = vmatpush1.bf16.msra.mxu0 %v1126
    %2278 = vmatprep.subr.bf16.mxu0 %v1119
    %2279 = vmatpush1.bf16.msra.mxu0 %v1118
    %2280 = vmatprep.subr.bf16.mxu0 %v1111
    %2281 = vmatpush1.bf16.msra.mxu0 %v1110
    %2282 = vmatprep.subr.bf16.mxu0 %v1103
    %2283 = vmatpush1.bf16.msra.mxu0 %v1102
    %2284 = vmatprep.subr.bf16.mxu0 %v1095
    %2285 = vmatpush1.bf16.msra.mxu0 %v1094
    %2286 = vmatprep.subr.bf16.mxu0 %v1087
    %2287 = vmatpush1.bf16.msra.mxu0 %v1086
    %2288 = vmatprep.subr.bf16.mxu0 %v1079
    %2289 = vmatpush1.bf16.msra.mxu0 %v1078
    %2290 = vmatprep.subr.bf16.mxu0 %v1071
    %2291 = vmatpush1.bf16.msra.mxu0 %v1070
    %2292 = vmatprep.subr.bf16.mxu0 %v1191
    %2293 = vmatpush2.bf16.msra.mxu0 %v1190
    %2294 = vmatprep.subr.bf16.mxu0 %v1183
    %2295 = vmatpush2.bf16.msra.mxu0 %v1182
    %2296 = vmatprep.subr.bf16.mxu0 %v1175
    %2297 = vmatpush2.bf16.msra.mxu0 %v1174
    %2298 = vmatprep.subr.bf16.mxu0 %v1167
    %2299 = vmatpush2.bf16.msra.mxu0 %v1166
    %2300 = vmatprep.subr.bf16.mxu0 %v1159
    %2301 = vmatpush2.bf16.msra.mxu0 %v1158
    %2302 = vmatprep.subr.bf16.mxu0 %v1151
    %2303 = vmatpush2.bf16.msra.mxu0 %v1150
    %2304 = vmatprep.subr.bf16.mxu0 %v1143
    %2305 = vmatpush2.bf16.msra.mxu0 %v1142
    %2306 = vmatprep.subr.bf16.mxu0 %v1135
    %2307 = vmatpush2.bf16.msra.mxu0 %v1134
    %2308 = vmatprep.mubr.bf16.mxu0 %v2193
    %2309 = vmatmul.mubr.bf16.gmra.mxu0 %v2192
    %v2310 = vpop.f32.mrf.mxu0
    %v2311 = vadd.f32 0.0, %v2310
    %v2312 = vpop.f32.mrf.mxu0
    %v2313 = vadd.f32 0.0, %v2312
    %v2314 = vpop.f32.mrf.mxu0
    %v2315 = vpop.f32.mrf.mxu0
    %2316 = vdwg.mxu0
    %2317 = vmatprep.subr.bf16.mxu0 %v1129
    %2318 = vmatpush1.bf16.msra.mxu0 %v1128
    %2319 = vmatprep.subr.bf16.mxu0 %v1121
    %2320 = vmatpush1.bf16.msra.mxu0 %v1120
    %2321 = vmatprep.subr.bf16.mxu0 %v1113
    %2322 = vmatpush1.bf16.msra.mxu0 %v1112
    %2323 = vmatprep.subr.bf16.mxu0 %v1105
    %2324 = vmatpush1.bf16.msra.mxu0 %v1104
    %2325 = vmatprep.subr.bf16.mxu0 %v1097
    %2326 = vmatpush1.bf16.msra.mxu0 %v1096
    %2327 = vmatprep.subr.bf16.mxu0 %v1089
    %2328 = vmatpush1.bf16.msra.mxu0 %v1088
    %2329 = vmatprep.subr.bf16.mxu0 %v1081
    %2330 = vmatpush1.bf16.msra.mxu0 %v1080
    %2331 = vmatprep.subr.bf16.mxu0 %v1073
    %2332 = vmatpush1.bf16.msra.mxu0 %v1072
    %2333 = vmatprep.subr.bf16.mxu0 %v1193
    %2334 = vmatpush2.bf16.msra.mxu0 %v1192
    %2335 = vmatprep.subr.bf16.mxu0 %v1185
    %2336 = vmatpush2.bf16.msra.mxu0 %v1184
    %2337 = vmatprep.subr.bf16.mxu0 %v1177
    %2338 = vmatpush2.bf16.msra.mxu0 %v1176
    %2339 = vmatprep.subr.bf16.mxu0 %v1169
    %2340 = vmatpush2.bf16.msra.mxu0 %v1168
    %2341 = vmatprep.subr.bf16.mxu0 %v1161
    %2342 = vmatpush2.bf16.msra.mxu0 %v1160
    %2343 = vmatprep.subr.bf16.mxu0 %v1153
    %2344 = vmatpush2.bf16.msra.mxu0 %v1152
    %2345 = vmatprep.subr.bf16.mxu0 %v1145
    %2346 = vmatpush2.bf16.msra.mxu0 %v1144
    %2347 = vmatprep.subr.bf16.mxu0 %v1137
    %2348 = vmatpush2.bf16.msra.mxu0 %v1136
    %2349 = vmatprep.mubr.bf16.mxu0 %v2193
    %2350 = vmatmul.mubr.bf16.gmra.mxu0 %v2192
    %v2351 = vpop.f32.mrf.mxu0
    %v2352 = vadd.f32 0.0, %v2351
    %v2353 = vpop.f32.mrf.mxu0
    %v2354 = vadd.f32 0.0, %v2353
    %v2355 = vpop.f32.mrf.mxu0
    %v2356 = vpop.f32.mrf.mxu0
    %2357 = vdwg.mxu0
    %v2358 = vadd.f32 %v2184, %v2229
    %v2359 = vadd.f32 %v2185, %v2231
    %v2360 = vadd.f32 %v2186, %v2270
    %v2361 = vadd.f32 %v2187, %v2272
    %v2362 = vadd.f32 %v2188, %v2311
    %v2363 = vadd.f32 %v2189, %v2313
    %v2364 = vadd.f32 %v2190, %v2352
    %v2365 = vadd.f32 %v2191, %v2354
    %v2366 = vmul.f32 %v2358, 0.5
    %v2367 = vmul.f32 %v2359, 0.5
    %v2368 = vtanh.pop %v2366
    %v2369 = vtanh.pop %v2367
    %v2370 = vmul.f32 %v2368, 0.5
    %v2371 = vmul.f32 %v2369, 0.5
    %v2372 = vadd.f32 %v2370, 0.5
    %v2373 = vadd.f32 %v2371, 0.5
    %v2374 = vmul.f32 %v2360, 0.5
    %v2375 = vmul.f32 %v2361, 0.5
    %v2376 = vtanh.pop %v2374
    %v2377 = vtanh.pop %v2375
    %v2378 = vmul.f32 %v2376, 0.5
    %v2379 = vmul.f32 %v2377, 0.5
    %v2380 = vadd.f32 %v2378, 0.5
    %v2381 = vadd.f32 %v2379, 0.5
    %v2382 = vtanh.pop %v2362
    %v2383 = vtanh.pop %v2363
    %v2384 = vmul.f32 %v2364, 0.5
    %v2385 = vmul.f32 %v2365, 0.5
    %v2386 = vtanh.pop %v2384
    %v2387 = vtanh.pop %v2385
    %v2388 = vmul.f32 %v2386, 0.5
    %v2389 = vmul.f32 %v2387, 0.5
    %v2390 = vadd.f32 %v2388, 0.5
    %v2391 = vadd.f32 %v2389, 0.5
    %v2392 = vmul.f32 %v2380, %v2178
    %v2393 = vmul.f32 %v2381, %v2179
    %v2394 = vmul.f32 %v2372, %v2382
    %v2395 = vmul.f32 %v2373, %v2383
    %v2396 = vadd.f32 %v2392, %v2394
    %v2397 = vadd.f32 %v2393, %v2395
    %v2398 = vtanh.pop %v2396
    %v2399 = vtanh.pop %v2397
    %v2400 = vmul.f32 %v2390, %v2398
    %v2401 = vmul.f32 %v2391, %v2399
    %v2402 = vld [vmem:[#allocation3 + $0x140] sm:$0xff]
    %v2403 = vld [vmem:[#allocation3 + $0x148] sm:$0xff]
    %v2404 = vld [vmem:[#allocation3 + $0x150] sm:$0xff]
    %v2405 = vld [vmem:[#allocation3 + $0x158] sm:$0xff]
    %v2406 = vld [vmem:[#allocation3 + $0x160] sm:$0xff]
    %v2407 = vld [vmem:[#allocation3 + $0x168] sm:$0xff]
    %v2408 = vld [vmem:[#allocation3 + $0x170] sm:$0xff]
    %v2409 = vld [vmem:[#allocation3 + $0x178] sm:$0xff]
    %v2410 = vpack.c.bf16 %v2400, %v2400
    %v2411 = vpack.c.bf16 %v2401, %v2401
    %2412 = vmatprep.subr.bf16.mxu0 %v1123
    %2413 = vmatpush1.bf16.msra.mxu0 %v1122
    %2414 = vmatprep.subr.bf16.mxu0 %v1115
    %2415 = vmatpush1.bf16.msra.mxu0 %v1114
    %2416 = vmatprep.subr.bf16.mxu0 %v1107
    %2417 = vmatpush1.bf16.msra.mxu0 %v1106
    %2418 = vmatprep.subr.bf16.mxu0 %v1099
    %2419 = vmatpush1.bf16.msra.mxu0 %v1098
    %2420 = vmatprep.subr.bf16.mxu0 %v1091
    %2421 = vmatpush1.bf16.msra.mxu0 %v1090
    %2422 = vmatprep.subr.bf16.mxu0 %v1083
    %2423 = vmatpush1.bf16.msra.mxu0 %v1082
    %2424 = vmatprep.subr.bf16.mxu0 %v1075
    %2425 = vmatpush1.bf16.msra.mxu0 %v1074
    %2426 = vmatprep.subr.bf16.mxu0 %v1067
    %2427 = vmatpush1.bf16.msra.mxu0 %v1066
    %2428 = vmatprep.subr.bf16.mxu0 %v1187
    %2429 = vmatpush2.bf16.msra.mxu0 %v1186
    %2430 = vmatprep.subr.bf16.mxu0 %v1179
    %2431 = vmatpush2.bf16.msra.mxu0 %v1178
    %2432 = vmatprep.subr.bf16.mxu0 %v1171
    %2433 = vmatpush2.bf16.msra.mxu0 %v1170
    %2434 = vmatprep.subr.bf16.mxu0 %v1163
    %2435 = vmatpush2.bf16.msra.mxu0 %v1162
    %2436 = vmatprep.subr.bf16.mxu0 %v1155
    %2437 = vmatpush2.bf16.msra.mxu0 %v1154
    %2438 = vmatprep.subr.bf16.mxu0 %v1147
    %2439 = vmatpush2.bf16.msra.mxu0 %v1146
    %2440 = vmatprep.subr.bf16.mxu0 %v1139
    %2441 = vmatpush2.bf16.msra.mxu0 %v1138
    %2442 = vmatprep.subr.bf16.mxu0 %v1131
    %2443 = vmatpush2.bf16.msra.mxu0 %v1130
    %2444 = vmatprep.mubr.bf16.mxu0 %v2411
    %2445 = vmatmul.mubr.bf16.gmra.mxu0 %v2410
    %v2446 = vpop.f32.mrf.mxu0
    %v2447 = vadd.f32 0.0, %v2446
    %v2448 = vpop.f32.mrf.mxu0
    %v2449 = vadd.f32 0.0, %v2448
    %v2450 = vpop.f32.mrf.mxu0
    %v2451 = vpop.f32.mrf.mxu0
    %2452 = vdwg.mxu0
    %2453 = vmatprep.subr.bf16.mxu0 %v1125
    %2454 = vmatpush1.bf16.msra.mxu0 %v1124
    %2455 = vmatprep.subr.bf16.mxu0 %v1117
    %2456 = vmatpush1.bf16.msra.mxu0 %v1116
    %2457 = vmatprep.subr.bf16.mxu0 %v1109
    %2458 = vmatpush1.bf16.msra.mxu0 %v1108
    %2459 = vmatprep.subr.bf16.mxu0 %v1101
    %2460 = vmatpush1.bf16.msra.mxu0 %v1100
    %2461 = vmatprep.subr.bf16.mxu0 %v1093
    %2462 = vmatpush1.bf16.msra.mxu0 %v1092
    %2463 = vmatprep.subr.bf16.mxu0 %v1085
    %2464 = vmatpush1.bf16.msra.mxu0 %v1084
    %2465 = vmatprep.subr.bf16.mxu0 %v1077
    %2466 = vmatpush1.bf16.msra.mxu0 %v1076
    %2467 = vmatprep.subr.bf16.mxu0 %v1069
    %2468 = vmatpush1.bf16.msra.mxu0 %v1068
    %2469 = vmatprep.subr.bf16.mxu0 %v1189
    %2470 = vmatpush2.bf16.msra.mxu0 %v1188
    %2471 = vmatprep.subr.bf16.mxu0 %v1181
    %2472 = vmatpush2.bf16.msra.mxu0 %v1180
    %2473 = vmatprep.subr.bf16.mxu0 %v1173
    %2474 = vmatpush2.bf16.msra.mxu0 %v1172
    %2475 = vmatprep.subr.bf16.mxu0 %v1165
    %2476 = vmatpush2.bf16.msra.mxu0 %v1164
    %2477 = vmatprep.subr.bf16.mxu0 %v1157
    %2478 = vmatpush2.bf16.msra.mxu0 %v1156
    %2479 = vmatprep.subr.bf16.mxu0 %v1149
    %2480 = vmatpush2.bf16.msra.mxu0 %v1148
    %2481 = vmatprep.subr.bf16.mxu0 %v1141
    %2482 = vmatpush2.bf16.msra.mxu0 %v1140
    %2483 = vmatprep.subr.bf16.mxu0 %v1133
    %2484 = vmatpush2.bf16.msra.mxu0 %v1132
    %2485 = vmatprep.mubr.bf16.mxu0 %v2411
    %2486 = vmatmul.mubr.bf16.gmra.mxu0 %v2410
    %v2487 = vpop.f32.mrf.mxu0
    %v2488 = vadd.f32 0.0, %v2487
    %v2489 = vpop.f32.mrf.mxu0
    %v2490 = vadd.f32 0.0, %v2489
    %v2491 = vpop.f32.mrf.mxu0
    %v2492 = vpop.f32.mrf.mxu0
    %2493 = vdwg.mxu0
    %2494 = vmatprep.subr.bf16.mxu0 %v1127
    %2495 = vmatpush1.bf16.msra.mxu0 %v1126
    %2496 = vmatprep.subr.bf16.mxu0 %v1119
    %2497 = vmatpush1.bf16.msra.mxu0 %v1118
    %2498 = vmatprep.subr.bf16.mxu0 %v1111
    %2499 = vmatpush1.bf16.msra.mxu0 %v1110
    %2500 = vmatprep.subr.bf16.mxu0 %v1103
    %2501 = vmatpush1.bf16.msra.mxu0 %v1102
    %2502 = vmatprep.subr.bf16.mxu0 %v1095
    %2503 = vmatpush1.bf16.msra.mxu0 %v1094
    %2504 = vmatprep.subr.bf16.mxu0 %v1087
    %2505 = vmatpush1.bf16.msra.mxu0 %v1086
    %2506 = vmatprep.subr.bf16.mxu0 %v1079
    %2507 = vmatpush1.bf16.msra.mxu0 %v1078
    %2508 = vmatprep.subr.bf16.mxu0 %v1071
    %2509 = vmatpush1.bf16.msra.mxu0 %v1070
    %2510 = vmatprep.subr.bf16.mxu0 %v1191
    %2511 = vmatpush2.bf16.msra.mxu0 %v1190
    %2512 = vmatprep.subr.bf16.mxu0 %v1183
    %2513 = vmatpush2.bf16.msra.mxu0 %v1182
    %2514 = vmatprep.subr.bf16.mxu0 %v1175
    %2515 = vmatpush2.bf16.msra.mxu0 %v1174
    %2516 = vmatprep.subr.bf16.mxu0 %v1167
    %2517 = vmatpush2.bf16.msra.mxu0 %v1166
    %2518 = vmatprep.subr.bf16.mxu0 %v1159
    %2519 = vmatpush2.bf16.msra.mxu0 %v1158
    %2520 = vmatprep.subr.bf16.mxu0 %v1151
    %2521 = vmatpush2.bf16.msra.mxu0 %v1150
    %2522 = vmatprep.subr.bf16.mxu0 %v1143
    %2523 = vmatpush2.bf16.msra.mxu0 %v1142
    %2524 = vmatprep.subr.bf16.mxu0 %v1135
    %2525 = vmatpush2.bf16.msra.mxu0 %v1134
    %2526 = vmatprep.mubr.bf16.mxu0 %v2411
    %2527 = vmatmul.mubr.bf16.gmra.mxu0 %v2410
    %v2528 = vpop.f32.mrf.mxu0
    %v2529 = vadd.f32 0.0, %v2528
    %v2530 = vpop.f32.mrf.mxu0
    %v2531 = vadd.f32 0.0, %v2530
    %v2532 = vpop.f32.mrf.mxu0
    %v2533 = vpop.f32.mrf.mxu0
    %2534 = vdwg.mxu0
    %2535 = vmatprep.subr.bf16.mxu0 %v1129
    %2536 = vmatpush1.bf16.msra.mxu0 %v1128
    %2537 = vmatprep.subr.bf16.mxu0 %v1121
    %2538 = vmatpush1.bf16.msra.mxu0 %v1120
    %2539 = vmatprep.subr.bf16.mxu0 %v1113
    %2540 = vmatpush1.bf16.msra.mxu0 %v1112
    %2541 = vmatprep.subr.bf16.mxu0 %v1105
    %2542 = vmatpush1.bf16.msra.mxu0 %v1104
    %2543 = vmatprep.subr.bf16.mxu0 %v1097
    %2544 = vmatpush1.bf16.msra.mxu0 %v1096
    %2545 = vmatprep.subr.bf16.mxu0 %v1089
    %2546 = vmatpush1.bf16.msra.mxu0 %v1088
    %2547 = vmatprep.subr.bf16.mxu0 %v1081
    %2548 = vmatpush1.bf16.msra.mxu0 %v1080
    %2549 = vmatprep.subr.bf16.mxu0 %v1073
    %2550 = vmatpush1.bf16.msra.mxu0 %v1072
    %2551 = vmatprep.subr.bf16.mxu0 %v1193
    %2552 = vmatpush2.bf16.msra.mxu0 %v1192
    %2553 = vmatprep.subr.bf16.mxu0 %v1185
    %2554 = vmatpush2.bf16.msra.mxu0 %v1184
    %2555 = vmatprep.subr.bf16.mxu0 %v1177
    %2556 = vmatpush2.bf16.msra.mxu0 %v1176
    %2557 = vmatprep.subr.bf16.mxu0 %v1169
    %2558 = vmatpush2.bf16.msra.mxu0 %v1168
    %2559 = vmatprep.subr.bf16.mxu0 %v1161
    %2560 = vmatpush2.bf16.msra.mxu0 %v1160
    %2561 = vmatprep.subr.bf16.mxu0 %v1153
    %2562 = vmatpush2.bf16.msra.mxu0 %v1152
    %2563 = vmatprep.subr.bf16.mxu0 %v1145
    %2564 = vmatpush2.bf16.msra.mxu0 %v1144
    %2565 = vmatprep.subr.bf16.mxu0 %v1137
    %2566 = vmatpush2.bf16.msra.mxu0 %v1136
    %2567 = vmatprep.mubr.bf16.mxu0 %v2411
    %2568 = vmatmul.mubr.bf16.gmra.mxu0 %v2410
    %v2569 = vpop.f32.mrf.mxu0
    %v2570 = vadd.f32 0.0, %v2569
    %v2571 = vpop.f32.mrf.mxu0
    %v2572 = vadd.f32 0.0, %v2571
    %v2573 = vpop.f32.mrf.mxu0
    %v2574 = vpop.f32.mrf.mxu0
    %2575 = vdwg.mxu0
    %v2576 = vadd.f32 %v2402, %v2447
    %v2577 = vadd.f32 %v2403, %v2449
    %v2578 = vadd.f32 %v2404, %v2488
    %v2579 = vadd.f32 %v2405, %v2490
    %v2580 = vadd.f32 %v2406, %v2529
    %v2581 = vadd.f32 %v2407, %v2531
    %v2582 = vadd.f32 %v2408, %v2570
    %v2583 = vadd.f32 %v2409, %v2572
    %v2584 = vmul.f32 %v2576, 0.5
    %v2585 = vmul.f32 %v2577, 0.5
    %v2586 = vtanh.pop %v2584
    %v2587 = vtanh.pop %v2585
    %v2588 = vmul.f32 %v2586, 0.5
    %v2589 = vmul.f32 %v2587, 0.5
    %v2590 = vadd.f32 %v2588, 0.5
    %v2591 = vadd.f32 %v2589, 0.5
    %v2592 = vmul.f32 %v2578, 0.5
    %v2593 = vmul.f32 %v2579, 0.5
    %v2594 = vtanh.pop %v2592
    %v2595 = vtanh.pop %v2593
    %v2596 = vmul.f32 %v2594, 0.5
    %v2597 = vmul.f32 %v2595, 0.5
    %v2598 = vadd.f32 %v2596, 0.5
    %v2599 = vadd.f32 %v2597, 0.5
    %v2600 = vtanh.pop %v2580
    %v2601 = vtanh.pop %v2581
    %v2602 = vmul.f32 %v2582, 0.5
    %v2603 = vmul.f32 %v2583, 0.5
    %v2604 = vtanh.pop %v2602
    %v2605 = vtanh.pop %v2603
    %v2606 = vmul.f32 %v2604, 0.5
    %v2607 = vmul.f32 %v2605, 0.5
    %v2608 = vadd.f32 %v2606, 0.5
    %v2609 = vadd.f32 %v2607, 0.5
    %v2610 = vmul.f32 %v2598, %v2396
    %v2611 = vmul.f32 %v2599, %v2397
    %v2612 = vmul.f32 %v2590, %v2600
    %v2613 = vmul.f32 %v2591, %v2601
    %v2614 = vadd.f32 %v2610, %v2612
    %v2615 = vadd.f32 %v2611, %v2613
    %v2616 = vtanh.pop %v2614
    %v2617 = vtanh.pop %v2615
    %v2618 = vmul.f32 %v2608, %v2616
    %v2619 = vmul.f32 %v2609, %v2617
    %v2620 = vld [vmem:[#allocation3 + $0x180] sm:$0xff]
    %v2621 = vld [vmem:[#allocation3 + $0x188] sm:$0xff]
    %v2622 = vld [vmem:[#allocation3 + $0x190] sm:$0xff]
    %v2623 = vld [vmem:[#allocation3 + $0x198] sm:$0xff]
    %v2624 = vld [vmem:[#allocation3 + $0x1a0] sm:$0xff]
    %v2625 = vld [vmem:[#allocation3 + $0x1a8] sm:$0xff]
    %v2626 = vld [vmem:[#allocation3 + $0x1b0] sm:$0xff]
    %v2627 = vld [vmem:[#allocation3 + $0x1b8] sm:$0xff]
    %v2628 = vpack.c.bf16 %v2618, %v2618
    %v2629 = vpack.c.bf16 %v2619, %v2619
    %2630 = vmatprep.subr.bf16.mxu0 %v1123
    %2631 = vmatpush1.bf16.msra.mxu0 %v1122
    %2632 = vmatprep.subr.bf16.mxu0 %v1115
    %2633 = vmatpush1.bf16.msra.mxu0 %v1114
    %2634 = vmatprep.subr.bf16.mxu0 %v1107
    %2635 = vmatpush1.bf16.msra.mxu0 %v1106
    %2636 = vmatprep.subr.bf16.mxu0 %v1099
    %2637 = vmatpush1.bf16.msra.mxu0 %v1098
    %2638 = vmatprep.subr.bf16.mxu0 %v1091
    %2639 = vmatpush1.bf16.msra.mxu0 %v1090
    %2640 = vmatprep.subr.bf16.mxu0 %v1083
    %2641 = vmatpush1.bf16.msra.mxu0 %v1082
    %2642 = vmatprep.subr.bf16.mxu0 %v1075
    %2643 = vmatpush1.bf16.msra.mxu0 %v1074
    %2644 = vmatprep.subr.bf16.mxu0 %v1067
    %2645 = vmatpush1.bf16.msra.mxu0 %v1066
    %2646 = vmatprep.subr.bf16.mxu0 %v1187
    %2647 = vmatpush2.bf16.msra.mxu0 %v1186
    %2648 = vmatprep.subr.bf16.mxu0 %v1179
    %2649 = vmatpush2.bf16.msra.mxu0 %v1178
    %2650 = vmatprep.subr.bf16.mxu0 %v1171
    %2651 = vmatpush2.bf16.msra.mxu0 %v1170
    %2652 = vmatprep.subr.bf16.mxu0 %v1163
    %2653 = vmatpush2.bf16.msra.mxu0 %v1162
    %2654 = vmatprep.subr.bf16.mxu0 %v1155
    %2655 = vmatpush2.bf16.msra.mxu0 %v1154
    %2656 = vmatprep.subr.bf16.mxu0 %v1147
    %2657 = vmatpush2.bf16.msra.mxu0 %v1146
    %2658 = vmatprep.subr.bf16.mxu0 %v1139
    %2659 = vmatpush2.bf16.msra.mxu0 %v1138
    %2660 = vmatprep.subr.bf16.mxu0 %v1131
    %2661 = vmatpush2.bf16.msra.mxu0 %v1130
    %2662 = vmatprep.mubr.bf16.mxu0 %v2629
    %2663 = vmatmul.mubr.bf16.gmra.mxu0 %v2628
    %v2664 = vpop.f32.mrf.mxu0
    %v2665 = vadd.f32 0.0, %v2664
    %v2666 = vpop.f32.mrf.mxu0
    %v2667 = vadd.f32 0.0, %v2666
    %v2668 = vpop.f32.mrf.mxu0
    %v2669 = vpop.f32.mrf.mxu0
    %2670 = vdwg.mxu0
    %2671 = vmatprep.subr.bf16.mxu0 %v1125
    %2672 = vmatpush1.bf16.msra.mxu0 %v1124
    %2673 = vmatprep.subr.bf16.mxu0 %v1117
    %2674 = vmatpush1.bf16.msra.mxu0 %v1116
    %2675 = vmatprep.subr.bf16.mxu0 %v1109
    %2676 = vmatpush1.bf16.msra.mxu0 %v1108
    %2677 = vmatprep.subr.bf16.mxu0 %v1101
    %2678 = vmatpush1.bf16.msra.mxu0 %v1100
    %2679 = vmatprep.subr.bf16.mxu0 %v1093
    %2680 = vmatpush1.bf16.msra.mxu0 %v1092
    %2681 = vmatprep.subr.bf16.mxu0 %v1085
    %2682 = vmatpush1.bf16.msra.mxu0 %v1084
    %2683 = vmatprep.subr.bf16.mxu0 %v1077
    %2684 = vmatpush1.bf16.msra.mxu0 %v1076
    %2685 = vmatprep.subr.bf16.mxu0 %v1069
    %2686 = vmatpush1.bf16.msra.mxu0 %v1068
    %2687 = vmatprep.subr.bf16.mxu0 %v1189
    %2688 = vmatpush2.bf16.msra.mxu0 %v1188
    %2689 = vmatprep.subr.bf16.mxu0 %v1181
    %2690 = vmatpush2.bf16.msra.mxu0 %v1180
    %2691 = vmatprep.subr.bf16.mxu0 %v1173
    %2692 = vmatpush2.bf16.msra.mxu0 %v1172
    %2693 = vmatprep.subr.bf16.mxu0 %v1165
    %2694 = vmatpush2.bf16.msra.mxu0 %v1164
    %2695 = vmatprep.subr.bf16.mxu0 %v1157
    %2696 = vmatpush2.bf16.msra.mxu0 %v1156
    %2697 = vmatprep.subr.bf16.mxu0 %v1149
    %2698 = vmatpush2.bf16.msra.mxu0 %v1148
    %2699 = vmatprep.subr.bf16.mxu0 %v1141
    %2700 = vmatpush2.bf16.msra.mxu0 %v1140
    %2701 = vmatprep.subr.bf16.mxu0 %v1133
    %2702 = vmatpush2.bf16.msra.mxu0 %v1132
    %2703 = vmatprep.mubr.bf16.mxu0 %v2629
    %2704 = vmatmul.mubr.bf16.gmra.mxu0 %v2628
    %v2705 = vpop.f32.mrf.mxu0
    %v2706 = vadd.f32 0.0, %v2705
    %v2707 = vpop.f32.mrf.mxu0
    %v2708 = vadd.f32 0.0, %v2707
    %v2709 = vpop.f32.mrf.mxu0
    %v2710 = vpop.f32.mrf.mxu0
    %2711 = vdwg.mxu0
    %2712 = vmatprep.subr.bf16.mxu0 %v1127
    %2713 = vmatpush1.bf16.msra.mxu0 %v1126
    %2714 = vmatprep.subr.bf16.mxu0 %v1119
    %2715 = vmatpush1.bf16.msra.mxu0 %v1118
    %2716 = vmatprep.subr.bf16.mxu0 %v1111
    %2717 = vmatpush1.bf16.msra.mxu0 %v1110
    %2718 = vmatprep.subr.bf16.mxu0 %v1103
    %2719 = vmatpush1.bf16.msra.mxu0 %v1102
    %2720 = vmatprep.subr.bf16.mxu0 %v1095
    %2721 = vmatpush1.bf16.msra.mxu0 %v1094
    %2722 = vmatprep.subr.bf16.mxu0 %v1087
    %2723 = vmatpush1.bf16.msra.mxu0 %v1086
    %2724 = vmatprep.subr.bf16.mxu0 %v1079
    %2725 = vmatpush1.bf16.msra.mxu0 %v1078
    %2726 = vmatprep.subr.bf16.mxu0 %v1071
    %2727 = vmatpush1.bf16.msra.mxu0 %v1070
    %2728 = vmatprep.subr.bf16.mxu0 %v1191
    %2729 = vmatpush2.bf16.msra.mxu0 %v1190
    %2730 = vmatprep.subr.bf16.mxu0 %v1183
    %2731 = vmatpush2.bf16.msra.mxu0 %v1182
    %2732 = vmatprep.subr.bf16.mxu0 %v1175
    %2733 = vmatpush2.bf16.msra.mxu0 %v1174
    %2734 = vmatprep.subr.bf16.mxu0 %v1167
    %2735 = vmatpush2.bf16.msra.mxu0 %v1166
    %2736 = vmatprep.subr.bf16.mxu0 %v1159
    %2737 = vmatpush2.bf16.msra.mxu0 %v1158
    %2738 = vmatprep.subr.bf16.mxu0 %v1151
    %2739 = vmatpush2.bf16.msra.mxu0 %v1150
    %2740 = vmatprep.subr.bf16.mxu0 %v1143
    %2741 = vmatpush2.bf16.msra.mxu0 %v1142
    %2742 = vmatprep.subr.bf16.mxu0 %v1135
    %2743 = vmatpush2.bf16.msra.mxu0 %v1134
    %2744 = vmatprep.mubr.bf16.mxu0 %v2629
    %2745 = vmatmul.mubr.bf16.gmra.mxu0 %v2628
    %v2746 = vpop.f32.mrf.mxu0
    %v2747 = vadd.f32 0.0, %v2746
    %v2748 = vpop.f32.mrf.mxu0
    %v2749 = vadd.f32 0.0, %v2748
    %v2750 = vpop.f32.mrf.mxu0
    %v2751 = vpop.f32.mrf.mxu0
    %2752 = vdwg.mxu0
    %2753 = vmatprep.subr.bf16.mxu0 %v1129
    %2754 = vmatpush1.bf16.msra.mxu0 %v1128
    %2755 = vmatprep.subr.bf16.mxu0 %v1121
    %2756 = vmatpush1.bf16.msra.mxu0 %v1120
    %2757 = vmatprep.subr.bf16.mxu0 %v1113
    %2758 = vmatpush1.bf16.msra.mxu0 %v1112
    %2759 = vmatprep.subr.bf16.mxu0 %v1105
    %2760 = vmatpush1.bf16.msra.mxu0 %v1104
    %2761 = vmatprep.subr.bf16.mxu0 %v1097
    %2762 = vmatpush1.bf16.msra.mxu0 %v1096
    %2763 = vmatprep.subr.bf16.mxu0 %v1089
    %2764 = vmatpush1.bf16.msra.mxu0 %v1088
    %2765 = vmatprep.subr.bf16.mxu0 %v1081
    %2766 = vmatpush1.bf16.msra.mxu0 %v1080
    %2767 = vmatprep.subr.bf16.mxu0 %v1073
    %2768 = vmatpush1.bf16.msra.mxu0 %v1072
    %2769 = vmatprep.subr.bf16.mxu0 %v1193
    %2770 = vmatpush2.bf16.msra.mxu0 %v1192
    %2771 = vmatprep.subr.bf16.mxu0 %v1185
    %2772 = vmatpush2.bf16.msra.mxu0 %v1184
    %2773 = vmatprep.subr.bf16.mxu0 %v1177
    %2774 = vmatpush2.bf16.msra.mxu0 %v1176
    %2775 = vmatprep.subr.bf16.mxu0 %v1169
    %2776 = vmatpush2.bf16.msra.mxu0 %v1168
    %2777 = vmatprep.subr.bf16.mxu0 %v1161
    %2778 = vmatpush2.bf16.msra.mxu0 %v1160
    %2779 = vmatprep.subr.bf16.mxu0 %v1153
    %2780 = vmatpush2.bf16.msra.mxu0 %v1152
    %2781 = vmatprep.subr.bf16.mxu0 %v1145
    %2782 = vmatpush2.bf16.msra.mxu0 %v1144
    %2783 = vmatprep.subr.bf16.mxu0 %v1137
    %2784 = vmatpush2.bf16.msra.mxu0 %v1136
    %2785 = vmatprep.mubr.bf16.mxu0 %v2629
    %2786 = vmatmul.mubr.bf16.gmra.mxu0 %v2628
    %v2787 = vpop.f32.mrf.mxu0
    %v2788 = vadd.f32 0.0, %v2787
    %v2789 = vpop.f32.mrf.mxu0
    %v2790 = vadd.f32 0.0, %v2789
    %v2791 = vpop.f32.mrf.mxu0
    %v2792 = vpop.f32.mrf.mxu0
    %2793 = vdwg.mxu0
    %v2794 = vadd.f32 %v2620, %v2665
    %v2795 = vadd.f32 %v2621, %v2667
    %v2796 = vadd.f32 %v2622, %v2706
    %v2797 = vadd.f32 %v2623, %v2708
    %v2798 = vadd.f32 %v2624, %v2747
    %v2799 = vadd.f32 %v2625, %v2749
    %v2800 = vadd.f32 %v2626, %v2788
    %v2801 = vadd.f32 %v2627, %v2790
    %v2802 = vmul.f32 %v2794, 0.5
    %v2803 = vmul.f32 %v2795, 0.5
    %v2804 = vtanh.pop %v2802
    %v2805 = vtanh.pop %v2803
    %v2806 = vmul.f32 %v2804, 0.5
    %v2807 = vmul.f32 %v2805, 0.5
    %v2808 = vadd.f32 %v2806, 0.5
    %v2809 = vadd.f32 %v2807, 0.5
    %v2810 = vmul.f32 %v2796, 0.5
    %v2811 = vmul.f32 %v2797, 0.5
    %v2812 = vtanh.pop %v2810
    %v2813 = vtanh.pop %v2811
    %v2814 = vmul.f32 %v2812, 0.5
    %v2815 = vmul.f32 %v2813, 0.5
    %v2816 = vadd.f32 %v2814, 0.5
    %v2817 = vadd.f32 %v2815, 0.5
    %v2818 = vtanh.pop %v2798
    %v2819 = vtanh.pop %v2799
    %v2820 = vmul.f32 %v2800, 0.5
    %v2821 = vmul.f32 %v2801, 0.5
    %v2822 = vtanh.pop %v2820
    %v2823 = vtanh.pop %v2821
    %v2824 = vmul.f32 %v2822, 0.5
    %v2825 = vmul.f32 %v2823, 0.5
    %v2826 = vadd.f32 %v2824, 0.5
    %v2827 = vadd.f32 %v2825, 0.5
    %v2828 = vmul.f32 %v2816, %v2614
    %v2829 = vmul.f32 %v2817, %v2615
    %v2830 = vmul.f32 %v2808, %v2818
    %v2831 = vmul.f32 %v2809, %v2819
    %v2832 = vadd.f32 %v2828, %v2830
    %v2833 = vadd.f32 %v2829, %v2831
    %v2834 = vtanh.pop %v2832
    %v2835 = vtanh.pop %v2833
    %v2836 = vmul.f32 %v2826, %v2834
    %v2837 = vmul.f32 %v2827, %v2835
    %v2838 = vld [vmem:[#allocation3 + $0x1c0] sm:$0xff]
    %v2839 = vld [vmem:[#allocation3 + $0x1c8] sm:$0xff]
    %v2840 = vld [vmem:[#allocation3 + $0x1d0] sm:$0xff]
    %v2841 = vld [vmem:[#allocation3 + $0x1d8] sm:$0xff]
    %v2842 = vld [vmem:[#allocation3 + $0x1e0] sm:$0xff]
    %v2843 = vld [vmem:[#allocation3 + $0x1e8] sm:$0xff]
    %v2844 = vld [vmem:[#allocation3 + $0x1f0] sm:$0xff]
    %v2845 = vld [vmem:[#allocation3 + $0x1f8] sm:$0xff]
    %v2846 = vpack.c.bf16 %v2836, %v2836
    %v2847 = vpack.c.bf16 %v2837, %v2837
    %2848 = vmatprep.subr.bf16.mxu0 %v1123
    %2849 = vmatpush1.bf16.msra.mxu0 %v1122
    %2850 = vmatprep.subr.bf16.mxu0 %v1115
    %2851 = vmatpush1.bf16.msra.mxu0 %v1114
    %2852 = vmatprep.subr.bf16.mxu0 %v1107
    %2853 = vmatpush1.bf16.msra.mxu0 %v1106
    %2854 = vmatprep.subr.bf16.mxu0 %v1099
    %2855 = vmatpush1.bf16.msra.mxu0 %v1098
    %2856 = vmatprep.subr.bf16.mxu0 %v1091
    %2857 = vmatpush1.bf16.msra.mxu0 %v1090
    %2858 = vmatprep.subr.bf16.mxu0 %v1083
    %2859 = vmatpush1.bf16.msra.mxu0 %v1082
    %2860 = vmatprep.subr.bf16.mxu0 %v1075
    %2861 = vmatpush1.bf16.msra.mxu0 %v1074
    %2862 = vmatprep.subr.bf16.mxu0 %v1067
    %2863 = vmatpush1.bf16.msra.mxu0 %v1066
    %2864 = vmatprep.subr.bf16.mxu0 %v1187
    %2865 = vmatpush2.bf16.msra.mxu0 %v1186
    %2866 = vmatprep.subr.bf16.mxu0 %v1179
    %2867 = vmatpush2.bf16.msra.mxu0 %v1178
    %2868 = vmatprep.subr.bf16.mxu0 %v1171
    %2869 = vmatpush2.bf16.msra.mxu0 %v1170
    %2870 = vmatprep.subr.bf16.mxu0 %v1163
    %2871 = vmatpush2.bf16.msra.mxu0 %v1162
    %2872 = vmatprep.subr.bf16.mxu0 %v1155
    %2873 = vmatpush2.bf16.msra.mxu0 %v1154
    %2874 = vmatprep.subr.bf16.mxu0 %v1147
    %2875 = vmatpush2.bf16.msra.mxu0 %v1146
    %2876 = vmatprep.subr.bf16.mxu0 %v1139
    %2877 = vmatpush2.bf16.msra.mxu0 %v1138
    %2878 = vmatprep.subr.bf16.mxu0 %v1131
    %2879 = vmatpush2.bf16.msra.mxu0 %v1130
    %2880 = vmatprep.mubr.bf16.mxu0 %v2847
    %2881 = vmatmul.mubr.bf16.gmra.mxu0 %v2846
    %v2882 = vpop.f32.mrf.mxu0
    %v2883 = vadd.f32 0.0, %v2882
    %v2884 = vpop.f32.mrf.mxu0
    %v2885 = vadd.f32 0.0, %v2884
    %v2886 = vpop.f32.mrf.mxu0
    %v2887 = vpop.f32.mrf.mxu0
    %2888 = vdwg.mxu0
    %2889 = vmatprep.subr.bf16.mxu0 %v1125
    %2890 = vmatpush1.bf16.msra.mxu0 %v1124
    %2891 = vmatprep.subr.bf16.mxu0 %v1117
    %2892 = vmatpush1.bf16.msra.mxu0 %v1116
    %2893 = vmatprep.subr.bf16.mxu0 %v1109
    %2894 = vmatpush1.bf16.msra.mxu0 %v1108
    %2895 = vmatprep.subr.bf16.mxu0 %v1101
    %2896 = vmatpush1.bf16.msra.mxu0 %v1100
    %2897 = vmatprep.subr.bf16.mxu0 %v1093
    %2898 = vmatpush1.bf16.msra.mxu0 %v1092
    %2899 = vmatprep.subr.bf16.mxu0 %v1085
    %2900 = vmatpush1.bf16.msra.mxu0 %v1084
    %2901 = vmatprep.subr.bf16.mxu0 %v1077
    %2902 = vmatpush1.bf16.msra.mxu0 %v1076
    %2903 = vmatprep.subr.bf16.mxu0 %v1069
    %2904 = vmatpush1.bf16.msra.mxu0 %v1068
    %2905 = vmatprep.subr.bf16.mxu0 %v1189
    %2906 = vmatpush2.bf16.msra.mxu0 %v1188
    %2907 = vmatprep.subr.bf16.mxu0 %v1181
    %2908 = vmatpush2.bf16.msra.mxu0 %v1180
    %2909 = vmatprep.subr.bf16.mxu0 %v1173
    %2910 = vmatpush2.bf16.msra.mxu0 %v1172
    %2911 = vmatprep.subr.bf16.mxu0 %v1165
    %2912 = vmatpush2.bf16.msra.mxu0 %v1164
    %2913 = vmatprep.subr.bf16.mxu0 %v1157
    %2914 = vmatpush2.bf16.msra.mxu0 %v1156
    %2915 = vmatprep.subr.bf16.mxu0 %v1149
    %2916 = vmatpush2.bf16.msra.mxu0 %v1148
    %2917 = vmatprep.subr.bf16.mxu0 %v1141
    %2918 = vmatpush2.bf16.msra.mxu0 %v1140
    %2919 = vmatprep.subr.bf16.mxu0 %v1133
    %2920 = vmatpush2.bf16.msra.mxu0 %v1132
    %2921 = vmatprep.mubr.bf16.mxu0 %v2847
    %2922 = vmatmul.mubr.bf16.gmra.mxu0 %v2846
    %v2923 = vpop.f32.mrf.mxu0
    %v2924 = vadd.f32 0.0, %v2923
    %v2925 = vpop.f32.mrf.mxu0
    %v2926 = vadd.f32 0.0, %v2925
    %v2927 = vpop.f32.mrf.mxu0
    %v2928 = vpop.f32.mrf.mxu0
    %2929 = vdwg.mxu0
    %2930 = vmatprep.subr.bf16.mxu0 %v1127
    %2931 = vmatpush1.bf16.msra.mxu0 %v1126
    %2932 = vmatprep.subr.bf16.mxu0 %v1119
    %2933 = vmatpush1.bf16.msra.mxu0 %v1118
    %2934 = vmatprep.subr.bf16.mxu0 %v1111
    %2935 = vmatpush1.bf16.msra.mxu0 %v1110
    %2936 = vmatprep.subr.bf16.mxu0 %v1103
    %2937 = vmatpush1.bf16.msra.mxu0 %v1102
    %2938 = vmatprep.subr.bf16.mxu0 %v1095
    %2939 = vmatpush1.bf16.msra.mxu0 %v1094
    %2940 = vmatprep.subr.bf16.mxu0 %v1087
    %2941 = vmatpush1.bf16.msra.mxu0 %v1086
    %2942 = vmatprep.subr.bf16.mxu0 %v1079
    %2943 = vmatpush1.bf16.msra.mxu0 %v1078
    %2944 = vmatprep.subr.bf16.mxu0 %v1071
    %2945 = vmatpush1.bf16.msra.mxu0 %v1070
    %2946 = vmatprep.subr.bf16.mxu0 %v1191
    %2947 = vmatpush2.bf16.msra.mxu0 %v1190
    %2948 = vmatprep.subr.bf16.mxu0 %v1183
    %2949 = vmatpush2.bf16.msra.mxu0 %v1182
    %2950 = vmatprep.subr.bf16.mxu0 %v1175
    %2951 = vmatpush2.bf16.msra.mxu0 %v1174
    %2952 = vmatprep.subr.bf16.mxu0 %v1167
    %2953 = vmatpush2.bf16.msra.mxu0 %v1166
    %2954 = vmatprep.subr.bf16.mxu0 %v1159
    %2955 = vmatpush2.bf16.msra.mxu0 %v1158
    %2956 = vmatprep.subr.bf16.mxu0 %v1151
    %2957 = vmatpush2.bf16.msra.mxu0 %v1150
    %2958 = vmatprep.subr.bf16.mxu0 %v1143
    %2959 = vmatpush2.bf16.msra.mxu0 %v1142
    %2960 = vmatprep.subr.bf16.mxu0 %v1135
    %2961 = vmatpush2.bf16.msra.mxu0 %v1134
    %2962 = vmatprep.mubr.bf16.mxu0 %v2847
    %2963 = vmatmul.mubr.bf16.gmra.mxu0 %v2846
    %v2964 = vpop.f32.mrf.mxu0
    %v2965 = vadd.f32 0.0, %v2964
    %v2966 = vpop.f32.mrf.mxu0
    %v2967 = vadd.f32 0.0, %v2966
    %v2968 = vpop.f32.mrf.mxu0
    %v2969 = vpop.f32.mrf.mxu0
    %2970 = vdwg.mxu0
    %2971 = vmatprep.subr.bf16.mxu0 %v1129
    %2972 = vmatpush1.bf16.msra.mxu0 %v1128
    %2973 = vmatprep.subr.bf16.mxu0 %v1121
    %2974 = vmatpush1.bf16.msra.mxu0 %v1120
    %2975 = vmatprep.subr.bf16.mxu0 %v1113
    %2976 = vmatpush1.bf16.msra.mxu0 %v1112
    %2977 = vmatprep.subr.bf16.mxu0 %v1105
    %2978 = vmatpush1.bf16.msra.mxu0 %v1104
    %2979 = vmatprep.subr.bf16.mxu0 %v1097
    %2980 = vmatpush1.bf16.msra.mxu0 %v1096
    %2981 = vmatprep.subr.bf16.mxu0 %v1089
    %2982 = vmatpush1.bf16.msra.mxu0 %v1088
    %2983 = vmatprep.subr.bf16.mxu0 %v1081
    %2984 = vmatpush1.bf16.msra.mxu0 %v1080
    %2985 = vmatprep.subr.bf16.mxu0 %v1073
    %2986 = vmatpush1.bf16.msra.mxu0 %v1072
    %2987 = vmatprep.subr.bf16.mxu0 %v1193
    %2988 = vmatpush2.bf16.msra.mxu0 %v1192
    %2989 = vmatprep.subr.bf16.mxu0 %v1185
    %2990 = vmatpush2.bf16.msra.mxu0 %v1184
    %2991 = vmatprep.subr.bf16.mxu0 %v1177
    %2992 = vmatpush2.bf16.msra.mxu0 %v1176
    %2993 = vmatprep.subr.bf16.mxu0 %v1169
    %2994 = vmatpush2.bf16.msra.mxu0 %v1168
    %2995 = vmatprep.subr.bf16.mxu0 %v1161
    %2996 = vmatpush2.bf16.msra.mxu0 %v1160
    %2997 = vmatprep.subr.bf16.mxu0 %v1153
    %2998 = vmatpush2.bf16.msra.mxu0 %v1152
    %2999 = vmatprep.subr.bf16.mxu0 %v1145
    %3000 = vmatpush2.bf16.msra.mxu0 %v1144
    %3001 = vmatprep.subr.bf16.mxu0 %v1137
    %3002 = vmatpush2.bf16.msra.mxu0 %v1136
    %3003 = vmatprep.mubr.bf16.mxu0 %v2847
    %3004 = vmatmul.mubr.bf16.gmra.mxu0 %v2846
    %v3005 = vpop.f32.mrf.mxu0
    %v3006 = vadd.f32 0.0, %v3005
    %v3007 = vpop.f32.mrf.mxu0
    %v3008 = vadd.f32 0.0, %v3007
    %v3009 = vpop.f32.mrf.mxu0
    %v3010 = vpop.f32.mrf.mxu0
    %3011 = vdwg.mxu0
    %v3012 = vadd.f32 %v2838, %v2883
    %v3013 = vadd.f32 %v2839, %v2885
    %v3014 = vadd.f32 %v2840, %v2924
    %v3015 = vadd.f32 %v2841, %v2926
    %v3016 = vadd.f32 %v2842, %v2965
    %v3017 = vadd.f32 %v2843, %v2967
    %v3018 = vadd.f32 %v2844, %v3006
    %v3019 = vadd.f32 %v2845, %v3008
    %v3020 = vmul.f32 %v3012, 0.5
    %v3021 = vmul.f32 %v3013, 0.5
    %v3022 = vtanh.pop %v3020
    %v3023 = vtanh.pop %v3021
    %v3024 = vmul.f32 %v3022, 0.5
    %v3025 = vmul.f32 %v3023, 0.5
    %v3026 = vadd.f32 %v3024, 0.5
    %v3027 = vadd.f32 %v3025, 0.5
    %v3028 = vmul.f32 %v3014, 0.5
    %v3029 = vmul.f32 %v3015, 0.5
    %v3030 = vtanh.pop %v3028
    %v3031 = vtanh.pop %v3029
    %v3032 = vmul.f32 %v3030, 0.5
    %v3033 = vmul.f32 %v3031, 0.5
    %v3034 = vadd.f32 %v3032, 0.5
    %v3035 = vadd.f32 %v3033, 0.5
    %v3036 = vtanh.pop %v3016
    %v3037 = vtanh.pop %v3017
    %v3038 = vmul.f32 %v3018, 0.5
    %v3039 = vmul.f32 %v3019, 0.5
    %v3040 = vtanh.pop %v3038
    %v3041 = vtanh.pop %v3039
    %v3042 = vmul.f32 %v3040, 0.5
    %v3043 = vmul.f32 %v3041, 0.5
    %v3044 = vadd.f32 %v3042, 0.5
    %v3045 = vadd.f32 %v3043, 0.5
    %v3046 = vmul.f32 %v3034, %v2832
    %v3047 = vmul.f32 %v3035, %v2833
    %v3048 = vmul.f32 %v3026, %v3036
    %v3049 = vmul.f32 %v3027, %v3037
    %v3050 = vadd.f32 %v3046, %v3048
    %v3051 = vadd.f32 %v3047, %v3049
    %v3052 = vtanh.pop %v3050
    %v3053 = vtanh.pop %v3051
    %v3054 = vmul.f32 %v3044, %v3052
    %v3055 = vmul.f32 %v3045, %v3053
    %s3056 = smul.u32 4, 32
    %s3057 = smul.u32 %s3056, 5
    %s3058 = sshll.u32 %s3057, 4
    %3059 = dma.done [#allocation4], %s3058
    %v3060 = vld [vmem:[#allocation2] sm:$0xff]
    %v3061 = vld [vmem:[#allocation2 + $0x14] sm:$0xff]
    %v3062 = vld [vmem:[#allocation2 + $0x28] sm:$0xff]
    %v3063 = vld [vmem:[#allocation2 + $0x3c] sm:$0xff]
    %v3064 = vld [vmem:[#allocation2 + $0x50] sm:$0xff]
    %v3065 = vld [vmem:[#allocation2 + $0x64] sm:$0xff]
    %v3066 = vld [vmem:[#allocation2 + $0x78] sm:$0xff]
    %v3067 = vld [vmem:[#allocation2 + $0x8c] sm:$0xff]
    %v3068 = vld [vmem:[#allocation2 + $0xa0] sm:$0xff]
    %v3069 = vld [vmem:[#allocation2 + $0xb4] sm:$0xff]
    %v3070 = vld [vmem:[#allocation2 + $0xc8] sm:$0xff]
    %v3071 = vld [vmem:[#allocation2 + $0xdc] sm:$0xff]
    %v3072 = vld [vmem:[#allocation2 + $0xf0] sm:$0xff]
    %v3073 = vld [vmem:[#allocation2 + $0x104] sm:$0xff]
    %v3074 = vld [vmem:[#allocation2 + $0x118] sm:$0xff]
    %v3075 = vld [vmem:[#allocation2 + $0x12c] sm:$0xff]
    %v3076 = vld [vmem:[#allocation2 + $0x140] sm:$0xff]
    %v3077 = vld [vmem:[#allocation2 + $0x154] sm:$0xff]
    %v3078 = vld [vmem:[#allocation2 + $0x168] sm:$0xff]
    %v3079 = vld [vmem:[#allocation2 + $0x17c] sm:$0xff]
    %v3080 = vld [vmem:[#allocation2 + $0x190] sm:$0xff]
    %v3081 = vld [vmem:[#allocation2 + $0x1a4] sm:$0xff]
    %v3082 = vld [vmem:[#allocation2 + $0x1b8] sm:$0xff]
    %v3083 = vld [vmem:[#allocation2 + $0x1cc] sm:$0xff]
    %v3084 = vld [vmem:[#allocation2 + $0x1e0] sm:$0xff]
    %v3085 = vld [vmem:[#allocation2 + $0x1f4] sm:$0xff]
    %v3086 = vld [vmem:[#allocation2 + $0x208] sm:$0xff]
    %v3087 = vld [vmem:[#allocation2 + $0x21c] sm:$0xff]
    %v3088 = vld [vmem:[#allocation2 + $0x230] sm:$0xff]
    %v3089 = vld [vmem:[#allocation2 + $0x244] sm:$0xff]
    %v3090 = vld [vmem:[#allocation2 + $0x258] sm:$0xff]
    %v3091 = vld [vmem:[#allocation2 + $0x26c] sm:$0xff]
    %v3092 = vld [vmem:[#allocation2 + $0x8] sm:$0xff]
    %v3093 = vld [vmem:[#allocation2 + $0x1c] sm:$0xff]
    %v3094 = vld [vmem:[#allocation2 + $0x30] sm:$0xff]
    %v3095 = vld [vmem:[#allocation2 + $0x44] sm:$0xff]
    %v3096 = vld [vmem:[#allocation2 + $0x58] sm:$0xff]
    %v3097 = vld [vmem:[#allocation2 + $0x6c] sm:$0xff]
    %v3098 = vld [vmem:[#allocation2 + $0x80] sm:$0xff]
    %v3099 = vld [vmem:[#allocation2 + $0x94] sm:$0xff]
    %v3100 = vld [vmem:[#allocation2 + $0xa8] sm:$0xff]
    %v3101 = vld [vmem:[#allocation2 + $0xbc] sm:$0xff]
    %v3102 = vld [vmem:[#allocation2 + $0xd0] sm:$0xff]
    %v3103 = vld [vmem:[#allocation2 + $0xe4] sm:$0xff]
    %v3104 = vld [vmem:[#allocation2 + $0xf8] sm:$0xff]
    %v3105 = vld [vmem:[#allocation2 + $0x10c] sm:$0xff]
    %v3106 = vld [vmem:[#allocation2 + $0x120] sm:$0xff]
    %v3107 = vld [vmem:[#allocation2 + $0x134] sm:$0xff]
    %v3108 = vld [vmem:[#allocation2 + $0x148] sm:$0xff]
    %v3109 = vld [vmem:[#allocation2 + $0x15c] sm:$0xff]
    %v3110 = vld [vmem:[#allocation2 + $0x170] sm:$0xff]
    %v3111 = vld [vmem:[#allocation2 + $0x184] sm:$0xff]
    %v3112 = vld [vmem:[#allocation2 + $0x198] sm:$0xff]
    %v3113 = vld [vmem:[#allocation2 + $0x1ac] sm:$0xff]
    %v3114 = vld [vmem:[#allocation2 + $0x1c0] sm:$0xff]
    %v3115 = vld [vmem:[#allocation2 + $0x1d4] sm:$0xff]
    %v3116 = vld [vmem:[#allocation2 + $0x1e8] sm:$0xff]
    %v3117 = vld [vmem:[#allocation2 + $0x1fc] sm:$0xff]
    %v3118 = vld [vmem:[#allocation2 + $0x210] sm:$0xff]
    %v3119 = vld [vmem:[#allocation2 + $0x224] sm:$0xff]
    %v3120 = vld [vmem:[#allocation2 + $0x238] sm:$0xff]
    %v3121 = vld [vmem:[#allocation2 + $0x24c] sm:$0xff]
    %v3122 = vld [vmem:[#allocation2 + $0x260] sm:$0xff]
    %v3123 = vld [vmem:[#allocation2 + $0x274] sm:$0xff]
    %v3124 = vld [vmem:[#allocation2 + $0x10] sm:$0xf]
    %v3125 = vld [vmem:[#allocation2 + $0x24] sm:$0xf]
    %v3126 = vld [vmem:[#allocation2 + $0x38] sm:$0xf]
    %v3127 = vld [vmem:[#allocation2 + $0x4c] sm:$0xf]
    %v3128 = vld [vmem:[#allocation2 + $0x60] sm:$0xf]
    %v3129 = vld [vmem:[#allocation2 + $0x74] sm:$0xf]
    %v3130 = vld [vmem:[#allocation2 + $0x88] sm:$0xf]
    %v3131 = vld [vmem:[#allocation2 + $0x9c] sm:$0xf]
    %v3132 = vld [vmem:[#allocation2 + $0xb0] sm:$0xf]
    %v3133 = vld [vmem:[#allocation2 + $0xc4] sm:$0xf]
    %v3134 = vld [vmem:[#allocation2 + $0xd8] sm:$0xf]
    %v3135 = vld [vmem:[#allocation2 + $0xec] sm:$0xf]
    %v3136 = vld [vmem:[#allocation2 + $0x100] sm:$0xf]
    %v3137 = vld [vmem:[#allocation2 + $0x114] sm:$0xf]
    %v3138 = vld [vmem:[#allocation2 + $0x128] sm:$0xf]
    %v3139 = vld [vmem:[#allocation2 + $0x13c] sm:$0xf]
    %v3140 = vld [vmem:[#allocation2 + $0x150] sm:$0xf]
    %v3141 = vld [vmem:[#allocation2 + $0x164] sm:$0xf]
    %v3142 = vld [vmem:[#allocation2 + $0x178] sm:$0xf]
    %v3143 = vld [vmem:[#allocation2 + $0x18c] sm:$0xf]
    %v3144 = vld [vmem:[#allocation2 + $0x1a0] sm:$0xf]
    %v3145 = vld [vmem:[#allocation2 + $0x1b4] sm:$0xf]
    %v3146 = vld [vmem:[#allocation2 + $0x1c8] sm:$0xf]
    %v3147 = vld [vmem:[#allocation2 + $0x1dc] sm:$0xf]
    %v3148 = vld [vmem:[#allocation2 + $0x1f0] sm:$0xf]
    %v3149 = vld [vmem:[#allocation2 + $0x204] sm:$0xf]
    %v3150 = vld [vmem:[#allocation2 + $0x218] sm:$0xf]
    %v3151 = vld [vmem:[#allocation2 + $0x22c] sm:$0xf]
    %v3152 = vld [vmem:[#allocation2 + $0x240] sm:$0xf]
    %v3153 = vld [vmem:[#allocation2 + $0x254] sm:$0xf]
    %v3154 = vld [vmem:[#allocation2 + $0x268] sm:$0xf]
    %v3155 = vld [vmem:[#allocation2 + $0x27c] sm:$0xf]
    %v3156 = vld [vmem:[%s3 + $0x8] sm:$0x3]
    %v3157 = vld [vmem:[%s3 + $0xa] sm:$0x3]
    %v3158 = vld [vmem:[%s3 + $0xc] sm:$0x1]
    %v3159 = vpack.c.bf16 %v3054, %v3054
    %v3160 = vpack.c.bf16 %v3055, %v3055
    %v3162 = vlaneseq
    %v3163 = vshrl.u32 %v3162, 7
    %v3164 = vsub.s32 0, %v3163
    %v3165 = vrot.slane %v3156, %v3164
    %v3166 = vlaneseq
    %v3167 = vshrl.u32 %v3166, 7
    %v3168 = vsub.s32 1, %v3167
    %v3169 = vrot.slane %v3156, %v3168
    %v3204 = vunpack.c.l.b16 %v3060
    %v3205 = vunpack.c.h.b16 %v3060
    %v3206 = vunpack.c.l.b16 %v3061
    %v3207 = vunpack.c.h.b16 %v3061
    %v3208 = vunpack.c.l.b16 %v3062
    %v3209 = vunpack.c.h.b16 %v3062
    %v3210 = vunpack.c.l.b16 %v3063
    %v3211 = vunpack.c.h.b16 %v3063
    %v3212 = vunpack.c.l.b16 %v3064
    %v3213 = vunpack.c.h.b16 %v3064
    %v3214 = vunpack.c.l.b16 %v3065
    %v3215 = vunpack.c.h.b16 %v3065
    %v3216 = vunpack.c.l.b16 %v3066
    %v3217 = vunpack.c.h.b16 %v3066
    %v3218 = vunpack.c.l.b16 %v3067
    %v3219 = vunpack.c.h.b16 %v3067
    %v3220 = vunpack.c.l.b16 %v3068
    %v3221 = vunpack.c.h.b16 %v3068
    %v3222 = vunpack.c.l.b16 %v3069
    %v3223 = vunpack.c.h.b16 %v3069
    %v3224 = vunpack.c.l.b16 %v3070
    %v3225 = vunpack.c.h.b16 %v3070
    %v3226 = vunpack.c.l.b16 %v3071
    %v3227 = vunpack.c.h.b16 %v3071
    %v3228 = vunpack.c.l.b16 %v3072
    %v3229 = vunpack.c.h.b16 %v3072
    %v3230 = vunpack.c.l.b16 %v3073
    %v3231 = vunpack.c.h.b16 %v3073
    %v3232 = vunpack.c.l.b16 %v3074
    %v3233 = vunpack.c.h.b16 %v3074
    %v3234 = vunpack.c.l.b16 %v3075
    %v3235 = vunpack.c.h.b16 %v3075
    %v3236 = vunpack.c.l.b16 %v3076
    %v3237 = vunpack.c.h.b16 %v3076
    %v3238 = vunpack.c.l.b16 %v3077
    %v3239 = vunpack.c.h.b16 %v3077
    %v3240 = vunpack.c.l.b16 %v3078
    %v3241 = vunpack.c.h.b16 %v3078
    %v3242 = vunpack.c.l.b16 %v3079
    %v3243 = vunpack.c.h.b16 %v3079
    %v3244 = vunpack.c.l.b16 %v3080
    %v3245 = vunpack.c.h.b16 %v3080
    %v3246 = vunpack.c.l.b16 %v3081
    %v3247 = vunpack.c.h.b16 %v3081
    %v3248 = vunpack.c.l.b16 %v3082
    %v3249 = vunpack.c.h.b16 %v3082
    %v3250 = vunpack.c.l.b16 %v3083
    %v3251 = vunpack.c.h.b16 %v3083
    %v3252 = vunpack.c.l.b16 %v3084
    %v3253 = vunpack.c.h.b16 %v3084
    %v3254 = vunpack.c.l.b16 %v3085
    %v3255 = vunpack.c.h.b16 %v3085
    %v3256 = vunpack.c.l.b16 %v3086
    %v3257 = vunpack.c.h.b16 %v3086
    %v3258 = vunpack.c.l.b16 %v3087
    %v3259 = vunpack.c.h.b16 %v3087
    %v3260 = vunpack.c.l.b16 %v3088
    %v3261 = vunpack.c.h.b16 %v3088
    %v3262 = vunpack.c.l.b16 %v3089
    %v3263 = vunpack.c.h.b16 %v3089
    %v3264 = vunpack.c.l.b16 %v3090
    %v3265 = vunpack.c.h.b16 %v3090
    %v3266 = vunpack.c.l.b16 %v3091
    %v3267 = vunpack.c.h.b16 %v3091
    %v3268 = vpack.c.b16 %v3206, %v3204
    %v3269 = vpack.c.b16 %v3207, %v3205
    %v3270 = vpack.c.b16 %v3210, %v3208
    %v3271 = vpack.c.b16 %v3211, %v3209
    %v3272 = vpack.c.b16 %v3214, %v3212
    %v3273 = vpack.c.b16 %v3215, %v3213
    %v3274 = vpack.c.b16 %v3218, %v3216
    %v3275 = vpack.c.b16 %v3219, %v3217
    %v3276 = vpack.c.b16 %v3222, %v3220
    %v3277 = vpack.c.b16 %v3223, %v3221
    %v3278 = vpack.c.b16 %v3226, %v3224
    %v3279 = vpack.c.b16 %v3227, %v3225
    %v3280 = vpack.c.b16 %v3230, %v3228
    %v3281 = vpack.c.b16 %v3231, %v3229
    %v3282 = vpack.c.b16 %v3234, %v3232
    %v3283 = vpack.c.b16 %v3235, %v3233
    %v3284 = vpack.c.b16 %v3238, %v3236
    %v3285 = vpack.c.b16 %v3239, %v3237
    %v3286 = vpack.c.b16 %v3242, %v3240
    %v3287 = vpack.c.b16 %v3243, %v3241
    %v3288 = vpack.c.b16 %v3246, %v3244
    %v3289 = vpack.c.b16 %v3247, %v3245
    %v3290 = vpack.c.b16 %v3250, %v3248
    %v3291 = vpack.c.b16 %v3251, %v3249
    %v3292 = vpack.c.b16 %v3254, %v3252
    %v3293 = vpack.c.b16 %v3255, %v3253
    %v3294 = vpack.c.b16 %v3258, %v3256
    %v3295 = vpack.c.b16 %v3259, %v3257
    %v3296 = vpack.c.b16 %v3262, %v3260
    %v3297 = vpack.c.b16 %v3263, %v3261
    %v3298 = vpack.c.b16 %v3266, %v3264
    %v3299 = vpack.c.b16 %v3267, %v3265
    %3332 = vmatprep.subr.bf16.mxu0 %v3283
    %3333 = vmatpush1.bf16.msra.mxu0 %v3282
    %3334 = vmatprep.subr.bf16.mxu0 %v3281
    %3335 = vmatpush1.bf16.msra.mxu0 %v3280
    %3336 = vmatprep.subr.bf16.mxu0 %v3279
    %3337 = vmatpush1.bf16.msra.mxu0 %v3278
    %3338 = vmatprep.subr.bf16.mxu0 %v3277
    %3339 = vmatpush1.bf16.msra.mxu0 %v3276
    %3340 = vmatprep.subr.bf16.mxu0 %v3275
    %3341 = vmatpush1.bf16.msra.mxu0 %v3274
    %3342 = vmatprep.subr.bf16.mxu0 %v3273
    %3343 = vmatpush1.bf16.msra.mxu0 %v3272
    %3344 = vmatprep.subr.bf16.mxu0 %v3271
    %3345 = vmatpush1.bf16.msra.mxu0 %v3270
    %3346 = vmatprep.subr.bf16.mxu0 %v3269
    %3347 = vmatpush1.bf16.msra.mxu0 %v3268
    %3348 = vmatprep.subr.bf16.mxu0 %v3299
    %3349 = vmatpush2.bf16.msra.mxu0 %v3298
    %3350 = vmatprep.subr.bf16.mxu0 %v3297
    %3351 = vmatpush2.bf16.msra.mxu0 %v3296
    %3352 = vmatprep.subr.bf16.mxu0 %v3295
    %3353 = vmatpush2.bf16.msra.mxu0 %v3294
    %3354 = vmatprep.subr.bf16.mxu0 %v3293
    %3355 = vmatpush2.bf16.msra.mxu0 %v3292
    %3356 = vmatprep.subr.bf16.mxu0 %v3291
    %3357 = vmatpush2.bf16.msra.mxu0 %v3290
    %3358 = vmatprep.subr.bf16.mxu0 %v3289
    %3359 = vmatpush2.bf16.msra.mxu0 %v3288
    %3360 = vmatprep.subr.bf16.mxu0 %v3287
    %3361 = vmatpush2.bf16.msra.mxu0 %v3286
    %3362 = vmatprep.subr.bf16.mxu0 %v3285
    %3363 = vmatpush2.bf16.msra.mxu0 %v3284
    %3364 = vmatprep.mubr.bf16.mxu0 %v3160
    %3365 = vmatmul.mubr.bf16.gmra.mxu0 %v3159
    %v3366 = vpop.f32.mrf.mxu0
    %v3367 = vadd.f32 %v3165, %v3366
    %v3368 = vpop.f32.mrf.mxu0
    %v3369 = vadd.f32 %v3169, %v3368
    %v3370 = vpop.f32.mrf.mxu0
    %v3371 = vpop.f32.mrf.mxu0
    %3372 = vdwg.mxu0
    %v3373 = vmax.f32 %v3367, 0.0
    %v3374 = vmax.f32 %v3369, 0.0
    %v3375 = vpack.c.bf16 %v3373, %v3373
    %v3376 = vpack.c.bf16 %v3374, %v3374
    %v3378 = vlaneseq
    %v3379 = vshrl.u32 %v3378, 7
    %v3380 = vsub.s32 0, %v3379
    %v3381 = vrot.slane %v3157, %v3380
    %v3382 = vlaneseq
    %v3383 = vshrl.u32 %v3382, 7
    %v3384 = vsub.s32 1, %v3383
    %v3385 = vrot.slane %v3157, %v3384
    %v3420 = vunpack.c.l.b16 %v3092
    %v3421 = vunpack.c.h.b16 %v3092
    %v3422 = vunpack.c.l.b16 %v3093
    %v3423 = vunpack.c.h.b16 %v3093
    %v3424 = vunpack.c.l.b16 %v3094
    %v3425 = vunpack.c.h.b16 %v3094
    %v3426 = vunpack.c.l.b16 %v3095
    %v3427 = vunpack.c.h.b16 %v3095
    %v3428 = vunpack.c.l.b16 %v3096
    %v3429 = vunpack.c.h.b16 %v3096
    %v3430 = vunpack.c.l.b16 %v3097
    %v3431 = vunpack.c.h.b16 %v3097
    %v3432 = vunpack.c.l.b16 %v3098
    %v3433 = vunpack.c.h.b16 %v3098
    %v3434 = vunpack.c.l.b16 %v3099
    %v3435 = vunpack.c.h.b16 %v3099
    %v3436 = vunpack.c.l.b16 %v3100
    %v3437 = vunpack.c.h.b16 %v3100
    %v3438 = vunpack.c.l.b16 %v3101
    %v3439 = vunpack.c.h.b16 %v3101
    %v3440 = vunpack.c.l.b16 %v3102
    %v3441 = vunpack.c.h.b16 %v3102
    %v3442 = vunpack.c.l.b16 %v3103
    %v3443 = vunpack.c.h.b16 %v3103
    %v3444 = vunpack.c.l.b16 %v3104
    %v3445 = vunpack.c.h.b16 %v3104
    %v3446 = vunpack.c.l.b16 %v3105
    %v3447 = vunpack.c.h.b16 %v3105
    %v3448 = vunpack.c.l.b16 %v3106
    %v3449 = vunpack.c.h.b16 %v3106
    %v3450 = vunpack.c.l.b16 %v3107
    %v3451 = vunpack.c.h.b16 %v3107
    %v3452 = vunpack.c.l.b16 %v3108
    %v3453 = vunpack.c.h.b16 %v3108
    %v3454 = vunpack.c.l.b16 %v3109
    %v3455 = vunpack.c.h.b16 %v3109
    %v3456 = vunpack.c.l.b16 %v3110
    %v3457 = vunpack.c.h.b16 %v3110
    %v3458 = vunpack.c.l.b16 %v3111
    %v3459 = vunpack.c.h.b16 %v3111
    %v3460 = vunpack.c.l.b16 %v3112
    %v3461 = vunpack.c.h.b16 %v3112
    %v3462 = vunpack.c.l.b16 %v3113
    %v3463 = vunpack.c.h.b16 %v3113
    %v3464 = vunpack.c.l.b16 %v3114
    %v3465 = vunpack.c.h.b16 %v3114
    %v3466 = vunpack.c.l.b16 %v3115
    %v3467 = vunpack.c.h.b16 %v3115
    %v3468 = vunpack.c.l.b16 %v3116
    %v3469 = vunpack.c.h.b16 %v3116
    %v3470 = vunpack.c.l.b16 %v3117
    %v3471 = vunpack.c.h.b16 %v3117
    %v3472 = vunpack.c.l.b16 %v3118
    %v3473 = vunpack.c.h.b16 %v3118
    %v3474 = vunpack.c.l.b16 %v3119
    %v3475 = vunpack.c.h.b16 %v3119
    %v3476 = vunpack.c.l.b16 %v3120
    %v3477 = vunpack.c.h.b16 %v3120
    %v3478 = vunpack.c.l.b16 %v3121
    %v3479 = vunpack.c.h.b16 %v3121
    %v3480 = vunpack.c.l.b16 %v3122
    %v3481 = vunpack.c.h.b16 %v3122
    %v3482 = vunpack.c.l.b16 %v3123
    %v3483 = vunpack.c.h.b16 %v3123
    %v3484 = vpack.c.b16 %v3422, %v3420
    %v3485 = vpack.c.b16 %v3423, %v3421
    %v3486 = vpack.c.b16 %v3426, %v3424
    %v3487 = vpack.c.b16 %v3427, %v3425
    %v3488 = vpack.c.b16 %v3430, %v3428
    %v3489 = vpack.c.b16 %v3431, %v3429
    %v3490 = vpack.c.b16 %v3434, %v3432
    %v3491 = vpack.c.b16 %v3435, %v3433
    %v3492 = vpack.c.b16 %v3438, %v3436
    %v3493 = vpack.c.b16 %v3439, %v3437
    %v3494 = vpack.c.b16 %v3442, %v3440
    %v3495 = vpack.c.b16 %v3443, %v3441
    %v3496 = vpack.c.b16 %v3446, %v3444
    %v3497 = vpack.c.b16 %v3447, %v3445
    %v3498 = vpack.c.b16 %v3450, %v3448
    %v3499 = vpack.c.b16 %v3451, %v3449
    %v3500 = vpack.c.b16 %v3454, %v3452
    %v3501 = vpack.c.b16 %v3455, %v3453
    %v3502 = vpack.c.b16 %v3458, %v3456
    %v3503 = vpack.c.b16 %v3459, %v3457
    %v3504 = vpack.c.b16 %v3462, %v3460
    %v3505 = vpack.c.b16 %v3463, %v3461
    %v3506 = vpack.c.b16 %v3466, %v3464
    %v3507 = vpack.c.b16 %v3467, %v3465
    %v3508 = vpack.c.b16 %v3470, %v3468
    %v3509 = vpack.c.b16 %v3471, %v3469
    %v3510 = vpack.c.b16 %v3474, %v3472
    %v3511 = vpack.c.b16 %v3475, %v3473
    %v3512 = vpack.c.b16 %v3478, %v3476
    %v3513 = vpack.c.b16 %v3479, %v3477
    %v3514 = vpack.c.b16 %v3482, %v3480
    %v3515 = vpack.c.b16 %v3483, %v3481
    %3548 = vmatprep.subr.bf16.mxu0 %v3499
    %3549 = vmatpush1.bf16.msra.mxu0 %v3498
    %3550 = vmatprep.subr.bf16.mxu0 %v3497
    %3551 = vmatpush1.bf16.msra.mxu0 %v3496
    %3552 = vmatprep.subr.bf16.mxu0 %v3495
    %3553 = vmatpush1.bf16.msra.mxu0 %v3494
    %3554 = vmatprep.subr.bf16.mxu0 %v3493
    %3555 = vmatpush1.bf16.msra.mxu0 %v3492
    %3556 = vmatprep.subr.bf16.mxu0 %v3491
    %3557 = vmatpush1.bf16.msra.mxu0 %v3490
    %3558 = vmatprep.subr.bf16.mxu0 %v3489
    %3559 = vmatpush1.bf16.msra.mxu0 %v3488
    %3560 = vmatprep.subr.bf16.mxu0 %v3487
    %3561 = vmatpush1.bf16.msra.mxu0 %v3486
    %3562 = vmatprep.subr.bf16.mxu0 %v3485
    %3563 = vmatpush1.bf16.msra.mxu0 %v3484
    %3564 = vmatprep.subr.bf16.mxu0 %v3515
    %3565 = vmatpush2.bf16.msra.mxu0 %v3514
    %3566 = vmatprep.subr.bf16.mxu0 %v3513
    %3567 = vmatpush2.bf16.msra.mxu0 %v3512
    %3568 = vmatprep.subr.bf16.mxu0 %v3511
    %3569 = vmatpush2.bf16.msra.mxu0 %v3510
    %3570 = vmatprep.subr.bf16.mxu0 %v3509
    %3571 = vmatpush2.bf16.msra.mxu0 %v3508
    %3572 = vmatprep.subr.bf16.mxu0 %v3507
    %3573 = vmatpush2.bf16.msra.mxu0 %v3506
    %3574 = vmatprep.subr.bf16.mxu0 %v3505
    %3575 = vmatpush2.bf16.msra.mxu0 %v3504
    %3576 = vmatprep.subr.bf16.mxu0 %v3503
    %3577 = vmatpush2.bf16.msra.mxu0 %v3502
    %3578 = vmatprep.subr.bf16.mxu0 %v3501
    %3579 = vmatpush2.bf16.msra.mxu0 %v3500
    %3580 = vmatprep.mubr.bf16.mxu0 %v3376
    %3581 = vmatmul.mubr.bf16.gmra.mxu0 %v3375
    %v3582 = vpop.f32.mrf.mxu0
    %v3583 = vadd.f32 %v3381, %v3582
    %v3584 = vpop.f32.mrf.mxu0
    %v3585 = vadd.f32 %v3385, %v3584
    %v3586 = vpop.f32.mrf.mxu0
    %v3587 = vpop.f32.mrf.mxu0
    %3588 = vdwg.mxu0
    %v3589 = vmax.f32 %v3583, 0.0
    %v3590 = vmax.f32 %v3585, 0.0
    %v3591 = vpack.c.bf16 %v3589, %v3589
    %v3592 = vpack.c.bf16 %v3590, %v3590
    %v3594 = vlaneseq
    %v3595 = vshrl.u32 %v3594, 7
    %v3596 = vsub.s32 0, %v3595
    %v3597 = vrot.slane %v3158, %v3596
    %v3631 = vunpack.c.l.b16 %v3124
    %v3632 = vunpack.c.l.b16 %v3125
    %v3633 = vunpack.c.l.b16 %v3126
    %v3634 = vunpack.c.l.b16 %v3127
    %v3635 = vunpack.c.l.b16 %v3128
    %v3636 = vunpack.c.l.b16 %v3129
    %v3637 = vunpack.c.l.b16 %v3130
    %v3638 = vunpack.c.l.b16 %v3131
    %v3639 = vunpack.c.l.b16 %v3132
    %v3640 = vunpack.c.l.b16 %v3133
    %v3641 = vunpack.c.l.b16 %v3134
    %v3642 = vunpack.c.l.b16 %v3135
    %v3643 = vunpack.c.l.b16 %v3136
    %v3644 = vunpack.c.l.b16 %v3137
    %v3645 = vunpack.c.l.b16 %v3138
    %v3646 = vunpack.c.l.b16 %v3139
    %v3647 = vunpack.c.l.b16 %v3140
    %v3648 = vunpack.c.l.b16 %v3141
    %v3649 = vunpack.c.l.b16 %v3142
    %v3650 = vunpack.c.l.b16 %v3143
    %v3651 = vunpack.c.l.b16 %v3144
    %v3652 = vunpack.c.l.b16 %v3145
    %v3653 = vunpack.c.l.b16 %v3146
    %v3654 = vunpack.c.l.b16 %v3147
    %v3655 = vunpack.c.l.b16 %v3148
    %v3656 = vunpack.c.l.b16 %v3149
    %v3657 = vunpack.c.l.b16 %v3150
    %v3658 = vunpack.c.l.b16 %v3151
    %v3659 = vunpack.c.l.b16 %v3152
    %v3660 = vunpack.c.l.b16 %v3153
    %v3661 = vunpack.c.l.b16 %v3154
    %v3662 = vunpack.c.l.b16 %v3155
    %v3663 = vpack.c.b16 %v3632, %v3631
    %v3664 = vpack.c.b16 %v3634, %v3633
    %v3665 = vpack.c.b16 %v3636, %v3635
    %v3666 = vpack.c.b16 %v3638, %v3637
    %v3667 = vpack.c.b16 %v3640, %v3639
    %v3668 = vpack.c.b16 %v3642, %v3641
    %v3669 = vpack.c.b16 %v3644, %v3643
    %v3670 = vpack.c.b16 %v3646, %v3645
    %v3671 = vpack.c.b16 %v3648, %v3647
    %v3672 = vpack.c.b16 %v3650, %v3649
    %v3673 = vpack.c.b16 %v3652, %v3651
    %v3674 = vpack.c.b16 %v3654, %v3653
    %v3675 = vpack.c.b16 %v3656, %v3655
    %v3676 = vpack.c.b16 %v3658, %v3657
    %v3677 = vpack.c.b16 %v3660, %v3659
    %v3678 = vpack.c.b16 %v3662, %v3661
    %3695 = vmatprep.subr.bf16.mxu0 0
    %3696 = vmatpush1.bf16.msra.mxu0 %v3670
    %3697 = vmatprep.subr.bf16.mxu0 0
    %3698 = vmatpush1.bf16.msra.mxu0 %v3669
    %3699 = vmatprep.subr.bf16.mxu0 0
    %3700 = vmatpush1.bf16.msra.mxu0 %v3668
    %3701 = vmatprep.subr.bf16.mxu0 0
    %3702 = vmatpush1.bf16.msra.mxu0 %v3667
    %3703 = vmatprep.subr.bf16.mxu0 0
    %3704 = vmatpush1.bf16.msra.mxu0 %v3666
    %3705 = vmatprep.subr.bf16.mxu0 0
    %3706 = vmatpush1.bf16.msra.mxu0 %v3665
    %3707 = vmatprep.subr.bf16.mxu0 0
    %3708 = vmatpush1.bf16.msra.mxu0 %v3664
    %3709 = vmatprep.subr.bf16.mxu0 0
    %3710 = vmatpush1.bf16.msra.mxu0 %v3663
    %3711 = vmatprep.subr.bf16.mxu0 0
    %3712 = vmatpush2.bf16.msra.mxu0 %v3678
    %3713 = vmatprep.subr.bf16.mxu0 0
    %3714 = vmatpush2.bf16.msra.mxu0 %v3677
    %3715 = vmatprep.subr.bf16.mxu0 0
    %3716 = vmatpush2.bf16.msra.mxu0 %v3676
    %3717 = vmatprep.subr.bf16.mxu0 0
    %3718 = vmatpush2.bf16.msra.mxu0 %v3675
    %3719 = vmatprep.subr.bf16.mxu0 0
    %3720 = vmatpush2.bf16.msra.mxu0 %v3674
    %3721 = vmatprep.subr.bf16.mxu0 0
    %3722 = vmatpush2.bf16.msra.mxu0 %v3673
    %3723 = vmatprep.subr.bf16.mxu0 0
    %3724 = vmatpush2.bf16.msra.mxu0 %v3672
    %3725 = vmatprep.subr.bf16.mxu0 0
    %3726 = vmatpush2.bf16.msra.mxu0 %v3671
    %3727 = vmatprep.mubr.bf16.mxu0 %v3592
    %3728 = vmatmul.mubr.bf16.gmra.mxu0 %v3591
    %v3729 = vpop.f32.mrf.mxu0
    %v3730 = vadd.f32 %v3597, %v3729
    %v3731 = vpop.f32.mrf.mxu0
    %v3732 = vpop.f32.mrf.mxu0
    %v3733 = vpop.f32.mrf.mxu0
    %3734 = vdwg.mxu0
    %3735 = vst [vmem:[#allocation10] sm:$0xff] %v3730
    // Predicated region
    $region30: #{tpu_custom_call.1} parent=1 // pred_check
      _
    $region31: #{tpu_custom_call.1} parent=1 // pred_check_branch
      %3737 = sbr.rel (0) target = $region33
    $region32: #{tpu_custom_call.1} parent=1 // pred_region
      %s3739 = ssub.s32 128, 128
      %3740 = vsyncadd [#allocation7], %s3739
      %s3742 = sshll.u32 [#allocation10], 4
      %s3743 = int_to_ptr.vmem [resolvable:$true] %s3742
      %3745 = dma.vmem_to_hbm [thread:$0]  %s3743, 128, %s5, [#allocation7]
    $region33: #{tpu_custom_call.1} parent=1 // pred_fallthru
      _
    // Predicated region
    $region34: #{tpu_custom_call.1} parent=1 // pred_check
      _
    $region35: #{tpu_custom_call.1} parent=1 // pred_check_branch
      %3747 = sbr.rel (0) target = $region37
    $region36: #{tpu_custom_call.1} parent=1 // pred_region
      %3748 = dma.done [#allocation7], 128
    $region37: #{tpu_custom_call.1} parent=1 // pred_fallthru
      _
    %3749 = vsyncpa [#allocation6], 1
    %3750 = vsyncpa [#allocation9], 1
    %3751 = vsyncpa [#allocation7], 1
  %3752 = vsyncmov [#allocation4]
  %s3753 = vpop.sfrf %3752
  %p3754 = scmp.eq.s32.totalorder %s3753, 0
  %p3755 = pneg %p3754
  %3757 = shalt.err (%p3755)

</llo_original>
